<compile_context>
chip_gen: v5e
topology: v5e:2x2
jax: 0.10.0
libtpu: 0.0.40
codegen_flags: <defaults>
</compile_context>

<pallas_src>
import jax
import jax.numpy as jnp
from jax.experimental import pallas as pl
from jax.experimental.pallas import tpu as pltpu


HID = 1024       # mlp hidden width
HID2 = 1024      # fused trans/quat hidden (512 + 512)
OUT_PAD = 128    # lane-dense padded output (trans -> lanes 0:3, quat -> 3:7)


def predictor_kernel(x_ref, wm_ref, bm_ref, w1_ref, b1_ref, w2_ref, b2_ref,
                     out_ref):
    # x: (tm, F_pad) bf16; weights bf16; biases f32; all matmuls accumulate in f32.
    h = jnp.dot(x_ref[...], wm_ref[...],
                preferred_element_type=jnp.float32) + bm_ref[...]
    h = jnp.maximum(h, 0.0)                                          # (tm, 1024)

    # fused trans/quat hidden: [t1 | q1] = h @ [wt1 | wq1] + [bt1 | bq1]
    h1 = jnp.dot(h.astype(jnp.bfloat16), w1_ref[...],
                 preferred_element_type=jnp.float32) + b1_ref[...]   # (tm, 1024)

    # block-diagonal final projection -> trans in lanes 0:3, quat in lanes 3:7
    z = jnp.dot(h1.astype(jnp.bfloat16), w2_ref[...],
                preferred_element_type=jnp.float32) + b2_ref[...]    # (tm, 128)

    lane = jax.lax.broadcasted_iota(jnp.int32, z.shape, dimension=1)
    # quat bias [1,0,0,0] lands on lane 3; mask to the 4 quat lanes, normalize.
    q = jnp.where((lane >= 3) & (lane < 7),
                  z + jnp.where(lane == 3, 1.0, 0.0), 0.0)
    inv = jax.lax.rsqrt(jnp.sum(q * q, axis=-1, keepdims=True) + 1e-12)
    out_ref[...] = jnp.where(lane < 3, jnp.tanh(z), q * inv)


@jax.jit
def predictor_forward(feat, params):
    B, N, F = feat.shape
    M = B * N
    f_pad = params["wm"].shape[0]

    x = feat.reshape(M, F).astype(jnp.float32)
    if f_pad > F:
        x = jnp.pad(x, ((0, 0), (0, f_pad - F)))

    # Row tile: 256 for good MXU occupancy; for tiny M use the full (8-rounded) extent.
    tm = 256 if M >= 256 else max(8, ((M + 7) // 8) * 8)
    m_pad = ((M + tm - 1) // tm) * tm
    if m_pad > M:
        x = jnp.pad(x, ((0, m_pad - M), (0, 0)))
    x = x.astype(jnp.bfloat16)

    def row_spec(shape):
        return pl.BlockSpec(shape, lambda i: (i, 0))

    def resident_spec(shape):
        return pl.BlockSpec(shape, lambda i: (0, 0))

    out_pad = pl.pallas_call(
        predictor_kernel,
        out_shape=jax.ShapeDtypeStruct((m_pad, OUT_PAD), jnp.float32),
        grid=(m_pad // tm,),
        in_specs=[
            row_spec((tm, f_pad)),
            resident_spec((f_pad, HID)), resident_spec((1, HID)),
            resident_spec((HID, HID2)), resident_spec((1, HID2)),
            resident_spec((HID2, OUT_PAD)), resident_spec((1, OUT_PAD)),
        ],
        out_specs=row_spec((tm, OUT_PAD)),
        compiler_params=pltpu.CompilerParams(
            dimension_semantics=("parallel",),
            vmem_limit_bytes=32 << 20),
    )(x, params["wm"], params["bm"], params["w1"], params["b1"],
      params["w2"], params["b2"])

    return out_pad[:M, 0:7].reshape(B, N, 7)


def init_params(key, feat_dim):
    """Deterministic synthetic init; packs weights into the fused/padded layout."""
    ks = jax.random.split(key, 5)

    def lin(k, fan_in, fan_out):
        bound = 1.0 / float(fan_in) ** 0.5
        w = jax.random.uniform(k, (fan_in, fan_out), jnp.float32, -bound, bound)
        b = jax.random.uniform(jax.random.fold_in(k, 1), (fan_out,),
                               jnp.float32, -bound, bound)
        return w, b

    wm, bm = lin(ks[0], feat_dim, HID)
    wt1, bt1 = lin(ks[1], HID, 512)
    wt2, bt2 = lin(ks[2], 512, 3)
    wq1, bq1 = lin(ks[3], HID, 512)
    wq2, bq2 = lin(ks[4], 512, 4)

    # pad feat_dim contraction to a full 128-lane K tile
    f_pad = ((feat_dim + 127) // 128) * 128
    wm_p = jnp.zeros((f_pad, HID), jnp.float32).at[:feat_dim, :].set(wm)

    # fused head hidden: (1024, 1024) = [wt1 | wq1]
    w1 = jnp.concatenate([wt1, wq1], axis=1)
    b1 = jnp.concatenate([bt1, bq1], axis=0)

    # block-diagonal final projection into one lane-dense 128-wide output
    w2 = jnp.zeros((HID2, OUT_PAD), jnp.float32)
    w2 = w2.at[0:512, 0:3].set(wt2).at[512:1024, 3:7].set(wq2)
    b2 = jnp.zeros((OUT_PAD,), jnp.float32)
    b2 = b2.at[0:3].set(bt2).at[3:7].set(bq2)

    params = dict(
        wm=wm_p.astype(jnp.bfloat16), bm=bm.reshape(1, HID),
        w1=w1.astype(jnp.bfloat16), b1=b1.reshape(1, HID2),
        w2=w2.astype(jnp.bfloat16), b2=b2.reshape(1, OUT_PAD))
    # un-fused f32 copies for the pure-JAX reference
    ref = dict(wm=wm, bm=bm, wt1=wt1, bt1=bt1, wt2=wt2, bt2=bt2,
               wq1=wq1, bq1=bq1, wq2=wq2, bq2=bq2)
    return params, ref


def predictor_reference(feat, ref):
    h = jax.nn.relu(feat @ ref["wm"] + ref["bm"])
    t = jnp.tanh((h @ ref["wt1"] + ref["bt1"]) @ ref["wt2"] + ref["bt2"])
    q = (h @ ref["wq1"] + ref["bq1"]) @ ref["wq2"] + ref["bq2"]
    q = q + jnp.array([1.0, 0.0, 0.0, 0.0], jnp.float32)
    q = q / jnp.sqrt(1e-12 + jnp.sum(q * q, axis=-1, keepdims=True))
    return jnp.concatenate([t, q], axis=-1)


if __name__ == "__main__":
    B, N, FEAT_DIM = 2, 8, 32
    key = jax.random.PRNGKey(0)
    k_feat, k_par = jax.random.split(key)

    feat = jax.random.normal(k_feat, (B, N, FEAT_DIM), dtype=jnp.float32)
    params, ref_params = init_params(k_par, FEAT_DIM)

    out = jax.block_until_ready(predictor_forward(feat, params))
    expected = predictor_reference(feat, ref_params)

    assert out.shape == (B, N, 7), out.shape
    max_err = float(jnp.max(jnp.abs(out - expected)))
    # bf16 weights/activations on the MXU -> relaxed tolerance vs the f32 reference
    assert max_err < 2e-2, max_err

    print("KERNEL_OK")
</pallas_src>

<mosaic_0001>
module attributes {stable_mosaic.version = 11 : i64} {
  func.func @predictor_kernel(%arg0: i32, %arg1: memref<16x128xbf16, #tpu.memory_space<vmem>>, %arg2: memref<128x1024xbf16, #tpu.memory_space<vmem>>, %arg3: memref<1x1024xf32, #tpu.memory_space<vmem>>, %arg4: memref<1024x1024xbf16, #tpu.memory_space<vmem>>, %arg5: memref<1x1024xf32, #tpu.memory_space<vmem>>, %arg6: memref<1024x128xbf16, #tpu.memory_space<vmem>>, %arg7: memref<1x128xf32, #tpu.memory_space<vmem>>, %arg8: memref<16x128xf32, #tpu.memory_space<vmem>>) attributes {dimension_semantics = [#tpu.dimension_semantics<parallel>], iteration_bounds = array<i64: 1>, scalar_prefetch = 0 : i64, scratch_operands = 0 : i64, tpu.core_type = #tpu.core_type<tc>, window_params = [{transform_indices = @transform_0, window_bounds = array<i64: 16, 128>}, {pipeline_mode = #tpu.pipeline_mode<synchronous>, transform_indices = @transform_1, window_bounds = array<i64: 128, 1024>}, {pipeline_mode = #tpu.pipeline_mode<synchronous>, transform_indices = @transform_2, window_bounds = array<i64: 1, 1024>}, {pipeline_mode = #tpu.pipeline_mode<synchronous>, transform_indices = @transform_3, window_bounds = array<i64: 1024, 1024>}, {pipeline_mode = #tpu.pipeline_mode<synchronous>, transform_indices = @transform_4, window_bounds = array<i64: 1, 1024>}, {pipeline_mode = #tpu.pipeline_mode<synchronous>, transform_indices = @transform_5, window_bounds = array<i64: 1024, 128>}, {pipeline_mode = #tpu.pipeline_mode<synchronous>, transform_indices = @transform_6, window_bounds = array<i64: 1, 128>}, {transform_indices = @transform_7, window_bounds = array<i64: 16, 128>}]} {
    %c0 = arith.constant 0 : index
    %c0_0 = arith.constant 0 : index
    %0 = vector.load %arg1[%c0, %c0_0] : memref<16x128xbf16, #tpu.memory_space<vmem>>, vector<16x128xbf16>
    %c0_1 = arith.constant 0 : index
    %c0_2 = arith.constant 0 : index
    %1 = vector.load %arg2[%c0_1, %c0_2] : memref<128x1024xbf16, #tpu.memory_space<vmem>>, vector<128x1024xbf16>
    %cst = arith.constant dense<0.000000e+00> : vector<16x1024xf32>
    %2 = tpu.matmul %0, %1, %cst {dimension_numbers = #tpu.dot_dimension_numbers<[1], [0], [0], [1], [0, 0, 1, 1], [], []>} : vector<16x128xbf16>, vector<128x1024xbf16>, vector<16x1024xf32> -> vector<16x1024xf32>
    %c0_3 = arith.constant 0 : index
    %c0_4 = arith.constant 0 : index
    %3 = vector.load %arg3[%c0_3, %c0_4] : memref<1x1024xf32, #tpu.memory_space<vmem>>, vector<1x1024xf32>
    %4 = vector.broadcast %3 : vector<1x1024xf32> to vector<16x1024xf32>
    %5 = arith.addf %2, %4 : vector<16x1024xf32>
    %cst_5 = arith.constant 0.000000e+00 : f32
    %6 = vector.broadcast %cst_5 : f32 to vector<16x1024xf32>
    %7 = arith.maximumf %5, %6 : vector<16x1024xf32>
    %8 = arith.truncf %7 : vector<16x1024xf32> to vector<16x1024xbf16>
    %c0_6 = arith.constant 0 : index
    %c0_7 = arith.constant 0 : index
    %9 = vector.load %arg4[%c0_6, %c0_7] : memref<1024x1024xbf16, #tpu.memory_space<vmem>>, vector<1024x1024xbf16>
    %cst_8 = arith.constant dense<0.000000e+00> : vector<16x1024xf32>
    %10 = tpu.matmul %8, %9, %cst_8 {dimension_numbers = #tpu.dot_dimension_numbers<[1], [0], [0], [1], [0, 0, 1, 1], [], []>} : vector<16x1024xbf16>, vector<1024x1024xbf16>, vector<16x1024xf32> -> vector<16x1024xf32>
    %c0_9 = arith.constant 0 : index
    %c0_10 = arith.constant 0 : index
    %11 = vector.load %arg5[%c0_9, %c0_10] : memref<1x1024xf32, #tpu.memory_space<vmem>>, vector<1x1024xf32>
    %12 = vector.broadcast %11 : vector<1x1024xf32> to vector<16x1024xf32>
    %13 = arith.addf %10, %12 : vector<16x1024xf32>
    %14 = arith.truncf %13 : vector<16x1024xf32> to vector<16x1024xbf16>
    %c0_11 = arith.constant 0 : index
    %c0_12 = arith.constant 0 : index
    %15 = vector.load %arg6[%c0_11, %c0_12] : memref<1024x128xbf16, #tpu.memory_space<vmem>>, vector<1024x128xbf16>
    %cst_13 = arith.constant dense<0.000000e+00> : vector<16x128xf32>
    %16 = tpu.matmul %14, %15, %cst_13 {dimension_numbers = #tpu.dot_dimension_numbers<[1], [0], [0], [1], [0, 0, 1, 1], [], []>} : vector<16x1024xbf16>, vector<1024x128xbf16>, vector<16x128xf32> -> vector<16x128xf32>
    %c0_14 = arith.constant 0 : index
    %c0_15 = arith.constant 0 : index
    %17 = vector.load %arg7[%c0_14, %c0_15] : memref<1x128xf32, #tpu.memory_space<vmem>>, vector<1x128xf32>
    %18 = vector.broadcast %17 : vector<1x128xf32> to vector<16x128xf32>
    %19 = arith.addf %16, %18 : vector<16x128xf32>
    %20 = tpu.iota {dimensions = array<i32: 1>} : vector<16x128xi32>
    %c3_i32 = arith.constant 3 : i32
    %21 = vector.broadcast %c3_i32 : i32 to vector<16x128xi32>
    %22 = arith.cmpi sge, %20, %21 : vector<16x128xi32>
    %c7_i32 = arith.constant 7 : i32
    %23 = vector.broadcast %c7_i32 : i32 to vector<16x128xi32>
    %24 = arith.cmpi slt, %20, %23 : vector<16x128xi32>
    %25 = arith.andi %22, %24 : vector<16x128xi1>
    %c3_i32_16 = arith.constant 3 : i32
    %26 = vector.broadcast %c3_i32_16 : i32 to vector<16x128xi32>
    %27 = arith.cmpi eq, %20, %26 : vector<16x128xi32>
    %cst_17 = arith.constant 1.000000e+00 : f32
    %cst_18 = arith.constant 0.000000e+00 : f32
    %28 = vector.broadcast %cst_17 : f32 to vector<16x128xf32>
    %29 = vector.broadcast %cst_18 : f32 to vector<16x128xf32>
    %30 = arith.select %27, %28, %29 : vector<16x128xi1>, vector<16x128xf32>
    %31 = arith.addf %19, %30 : vector<16x128xf32>
    %cst_19 = arith.constant 0.000000e+00 : f32
    %32 = vector.broadcast %cst_19 : f32 to vector<16x128xf32>
    %33 = arith.select %25, %31, %32 : vector<16x128xi1>, vector<16x128xf32>
    %34 = arith.mulf %33, %33 : vector<16x128xf32>
    %cst_20 = arith.constant dense<0.000000e+00> : vector<16xf32>
    %35 = vector.multi_reduction <add>, %34, %cst_20 [1] : vector<16x128xf32> to vector<16xf32>
    %36 = vector.shape_cast %35 : vector<16xf32> to vector<16x1xf32>
    %cst_21 = arith.constant 9.99999996E-13 : f32
    %37 = vector.broadcast %cst_21 : f32 to vector<16x1xf32>
    %38 = arith.addf %36, %37 : vector<16x1xf32>
    %39 = math.rsqrt %38 : vector<16x1xf32>
    %c3_i32_22 = arith.constant 3 : i32
    %40 = vector.broadcast %c3_i32_22 : i32 to vector<16x128xi32>
    %41 = arith.cmpi slt, %20, %40 : vector<16x128xi32>
    %42 = math.tanh %19 : vector<16x128xf32>
    %43 = vector.broadcast %39 : vector<16x1xf32> to vector<16x128xf32>
    %44 = arith.mulf %33, %43 : vector<16x128xf32>
    %45 = arith.select %41, %42, %44 : vector<16x128xi1>, vector<16x128xf32>
    %c0_23 = arith.constant 0 : index
    %c0_24 = arith.constant 0 : index
    %46 = vector.load %arg8[%c0_23, %c0_24] : memref<16x128xf32, #tpu.memory_space<vmem>>, vector<16x128xf32>
    tpu.vector_store %arg8[%c0_23, %c0_24], %45 {strides = array<i32>} : memref<16x128xf32, #tpu.memory_space<vmem>>, vector<16x128xf32>,
    return
  }
  func.func @transform_0(%arg0: i32) -> (i32, i32) {
    %c0_i32 = arith.constant 0 : i32
    %c0_i32_0 = arith.constant 0 : i32
    return %arg0, %c0_i32 : i32, i32
  }
  func.func @transform_1(%arg0: i32) -> (i32, i32) {
    %c0_i32 = arith.constant 0 : i32
    %c0_i32_0 = arith.constant 0 : i32
    %c0_i32_1 = arith.constant 0 : i32
    return %c0_i32, %c0_i32_0 : i32, i32
  }
  func.func @transform_2(%arg0: i32) -> (i32, i32) {
    %c0_i32 = arith.constant 0 : i32
    %c0_i32_0 = arith.constant 0 : i32
    %c0_i32_1 = arith.constant 0 : i32
    return %c0_i32, %c0_i32_0 : i32, i32
  }
  func.func @transform_3(%arg0: i32) -> (i32, i32) {
    %c0_i32 = arith.constant 0 : i32
    %c0_i32_0 = arith.constant 0 : i32
    %c0_i32_1 = arith.constant 0 : i32
    return %c0_i32, %c0_i32_0 : i32, i32
  }
  func.func @transform_4(%arg0: i32) -> (i32, i32) {
    %c0_i32 = arith.constant 0 : i32
    %c0_i32_0 = arith.constant 0 : i32
    %c0_i32_1 = arith.constant 0 : i32
    return %c0_i32, %c0_i32_0 : i32, i32
  }
  func.func @transform_5(%arg0: i32) -> (i32, i32) {
    %c0_i32 = arith.constant 0 : i32
    %c0_i32_0 = arith.constant 0 : i32
    %c0_i32_1 = arith.constant 0 : i32
    return %c0_i32, %c0_i32_0 : i32, i32
  }
  func.func @transform_6(%arg0: i32) -> (i32, i32) {
    %c0_i32 = arith.constant 0 : i32
    %c0_i32_0 = arith.constant 0 : i32
    %c0_i32_1 = arith.constant 0 : i32
    return %c0_i32, %c0_i32_0 : i32, i32
  }
  func.func @transform_7(%arg0: i32) -> (i32, i32) {
    %c0_i32 = arith.constant 0 : i32
    %c0_i32_0 = arith.constant 0 : i32
    return %arg0, %c0_i32 : i32, i32
  }
}

</mosaic_0001>

<llo_original>
// kernel: predictor_forward.1
$region0: #{predictor_forward.1}
  #allocation0 [shape = 'u32[]', space=smem, size = 0x4, offset = 0x4, fixed_abs, tag = 'smem constant byte address 0x4 - core index']
  #allocation1 [shape = 'u32[72,128]{1,0:T(1,128)}', space=vmem, size = 0x9000, scoped, tag = 'internal scratch']
  %s0 = inlined_call_operand.vmem [shape: bf16[16,128], index: 0, kind: input, shape index: {}]
  %s1 = inlined_call_operand.hbm [shape: bf16[128,1024], index: 1, kind: input, shape index: {}]
  %s2 = inlined_call_operand.hbm [shape: f32[1,1024], index: 2, kind: input, shape index: {}]
  %s3 = inlined_call_operand.hbm [shape: bf16[1024,1024], index: 3, kind: input, shape index: {}]
  %s4 = inlined_call_operand.hbm [shape: f32[1,1024], index: 4, kind: input, shape index: {}]
  %s5 = inlined_call_operand.hbm [shape: bf16[1024,128], index: 5, kind: input, shape index: {}]
  %s6 = inlined_call_operand.hbm [shape: f32[1,128], index: 6, kind: input, shape index: {}]
  %s7 = inlined_call_operand.vmem [shape: f32[16,128], index: 7, kind: output, shape index: {}]
  %s8 = sld [smem:[#allocation0]]
  $region62: #{predictor_forward.1} parent=0
    _
  %s10 = ssub.s32 1, %s8
  %s11 = scalar_select 0, %s10, %s8
  $region1: #{predictor_forward.1} parent=0
    #allocation2 [shape = 'u8[262144]{0}', space=vmem, size = 0x40000, scoped, tag = 'input window, operand 1, single buffered']
    #allocation3 [shape = 's32[1]{0}', space=sflag, size = 0x4, scoped, tag = 'scoped memory for predictor_forward.1']
    #allocation4 [shape = 'u8[4096]{0}', space=vmem, size = 0x1000, scoped, tag = 'input window, operand 2, single buffered']
    #allocation5 [shape = 's32[1]{0}', space=sflag, size = 0x4, scoped, tag = 'scoped memory for predictor_forward.1']
    #allocation6 [shape = 'u8[2097152]{0}', space=vmem, size = 0x200000, scoped, tag = 'input window, operand 3, single buffered']
    #allocation7 [shape = 'u8[4096]{0}', space=vmem, size = 0x1000, scoped, tag = 'input window, operand 4, single buffered']
    #allocation8 [shape = 's32[1]{0}', space=sflag, size = 0x4, scoped, tag = 'scoped memory for predictor_forward.1']
    #allocation9 [shape = 'u8[262144]{0}', space=vmem, size = 0x40000, scoped, tag = 'input window, operand 5, single buffered']
    #allocation10 [shape = 'u8[512]{0}', space=vmem, size = 0x400, scoped, tag = 'input window, operand 6, single buffered']
    #allocation11 [shape = 's32[1]{0}', space=sflag, size = 0x4, scoped, tag = 'scoped memory for predictor_forward.1']
    %12 = vsyncpa [#allocation3], 0
    %13 = vsyncpa [#allocation5], 0
    %14 = vsyncpa [#allocation8], 0
    %15 = vsyncpa [#allocation11], 0
    // Predicated region
    $region2: #{predictor_forward.1} parent=1 // pred_check
      _
    $region3: #{predictor_forward.1} parent=1 // pred_check_branch
      %17 = sbr.rel (0) target = $region5
    $region4: #{predictor_forward.1} parent=1 // pred_region
      _
    $region5: #{predictor_forward.1} parent=1 // pred_fallthru
      _
    // Predicated region
    $region6: #{predictor_forward.1} parent=1 // pred_check
      _
    $region7: #{predictor_forward.1} parent=1 // pred_check_branch
      %19 = sbr.rel (0) target = $region9
    $region8: #{predictor_forward.1} parent=1 // pred_region
      %21 = vsyncadd [#allocation3], 0
      %s22 = sshll.u32 %s1, 4
      %s23 = int_to_ptr.hbm [resolvable:$true] %s22
      %s24 = sshll.u32 [#allocation2], 4
      %s25 = int_to_ptr.vmem [resolvable:$true] %s24
      %30 = dma.hbm_to_vmem [thread:$0]  %s23, 8192, %s25, [#allocation3], 512, 512, 32
    $region9: #{predictor_forward.1} parent=1 // pred_fallthru
      _
    // Predicated region
    $region10: #{predictor_forward.1} parent=1 // pred_check
      _
    $region11: #{predictor_forward.1} parent=1 // pred_check_branch
      %32 = sbr.rel (0) target = $region13
    $region12: #{predictor_forward.1} parent=1 // pred_region
      %34 = vsyncadd [#allocation5], 0
      %s36 = sshll.u32 %s2, 4
      %s37 = int_to_ptr.hbm [resolvable:$true] %s36
      %s38 = sshll.u32 [#allocation4], 4
      %s39 = int_to_ptr.vmem [resolvable:$true] %s38
      %41 = dma.hbm_to_vmem [thread:$0]  %s37, 128, %s39, [#allocation5]
    $region13: #{predictor_forward.1} parent=1 // pred_fallthru
      _
    // Predicated region
    $region14: #{predictor_forward.1} parent=1 // pred_check
      _
    $region15: #{predictor_forward.1} parent=1 // pred_check_branch
      %43 = sbr.rel (0) target = $region17
    $region16: #{predictor_forward.1} parent=1 // pred_region
      %45 = vsyncadd [#allocation5], 0
      %s46 = sshll.u32 %s3, 4
      %s47 = int_to_ptr.hbm [resolvable:$true] %s46
      %s48 = sshll.u32 [#allocation6], 4
      %s49 = int_to_ptr.vmem [resolvable:$true] %s48
      %54 = dma.hbm_to_vmem [thread:$0]  %s47, 65536, %s49, [#allocation5], 512, 512, 32
    $region17: #{predictor_forward.1} parent=1 // pred_fallthru
      _
    // Predicated region
    $region18: #{predictor_forward.1} parent=1 // pred_check
      _
    $region19: #{predictor_forward.1} parent=1 // pred_check_branch
      %56 = sbr.rel (0) target = $region21
    $region20: #{predictor_forward.1} parent=1 // pred_region
      %58 = vsyncadd [#allocation8], 0
      %s60 = sshll.u32 %s4, 4
      %s61 = int_to_ptr.hbm [resolvable:$true] %s60
      %s62 = sshll.u32 [#allocation7], 4
      %s63 = int_to_ptr.vmem [resolvable:$true] %s62
      %65 = dma.hbm_to_vmem [thread:$0]  %s61, 128, %s63, [#allocation8]
    $region21: #{predictor_forward.1} parent=1 // pred_fallthru
      _
    // Predicated region
    $region22: #{predictor_forward.1} parent=1 // pred_check
      _
    $region23: #{predictor_forward.1} parent=1 // pred_check_branch
      %67 = sbr.rel (0) target = $region25
    $region24: #{predictor_forward.1} parent=1 // pred_region
      %69 = vsyncadd [#allocation8], 0
      %s70 = sshll.u32 %s5, 4
      %s71 = int_to_ptr.hbm [resolvable:$true] %s70
      %s72 = sshll.u32 [#allocation9], 4
      %s73 = int_to_ptr.vmem [resolvable:$true] %s72
      %78 = dma.hbm_to_vmem [thread:$0]  %s71, 8192, %s73, [#allocation8], 64, 64, 4
    $region25: #{predictor_forward.1} parent=1 // pred_fallthru
      _
    // Predicated region
    $region26: #{predictor_forward.1} parent=1 // pred_check
      _
    $region27: #{predictor_forward.1} parent=1 // pred_check_branch
      %80 = sbr.rel (0) target = $region29
    $region28: #{predictor_forward.1} parent=1 // pred_region
      %82 = vsyncadd [#allocation11], 0
      %s84 = sshll.u32 %s6, 4
      %s85 = int_to_ptr.hbm [resolvable:$true] %s84
      %s86 = sshll.u32 [#allocation10], 4
      %s87 = int_to_ptr.vmem [resolvable:$true] %s86
      %89 = dma.hbm_to_vmem [thread:$0]  %s85, 16, %s87, [#allocation11]
    $region29: #{predictor_forward.1} parent=1 // pred_fallthru
      _
    // Predicated region
    $region30: #{predictor_forward.1} parent=1 // pred_check
      _
    $region31: #{predictor_forward.1} parent=1 // pred_check_branch
      %91 = sbr.rel (0) target = $region33
    $region32: #{predictor_forward.1} parent=1 // pred_region
      %93 = dma.done [#allocation3], 8192
    $region33: #{predictor_forward.1} parent=1 // pred_fallthru
      _
    // Predicated region
    $region34: #{predictor_forward.1} parent=1 // pred_check
      _
    $region35: #{predictor_forward.1} parent=1 // pred_check_branch
      %95 = sbr.rel (0) target = $region37
    $region36: #{predictor_forward.1} parent=1 // pred_region
      %97 = dma.done [#allocation5], 128
    $region37: #{predictor_forward.1} parent=1 // pred_fallthru
      _
    // Predicated region
    $region38: #{predictor_forward.1} parent=1 // pred_check
      _
    $region39: #{predictor_forward.1} parent=1 // pred_check_branch
      %99 = sbr.rel (0) target = $region41
    $region40: #{predictor_forward.1} parent=1 // pred_region
      %101 = dma.done [#allocation5], 65536
    $region41: #{predictor_forward.1} parent=1 // pred_fallthru
      _
    // Predicated region
    $region42: #{predictor_forward.1} parent=1 // pred_check
      _
    $region43: #{predictor_forward.1} parent=1 // pred_check_branch
      %103 = sbr.rel (0) target = $region45
    $region44: #{predictor_forward.1} parent=1 // pred_region
      %105 = dma.done [#allocation8], 128
    $region45: #{predictor_forward.1} parent=1 // pred_fallthru
      _
    // Predicated region
    $region46: #{predictor_forward.1} parent=1 // pred_check
      _
    $region47: #{predictor_forward.1} parent=1 // pred_check_branch
      %107 = sbr.rel (0) target = $region49
    $region48: #{predictor_forward.1} parent=1 // pred_region
      %109 = dma.done [#allocation8], 8192
    $region49: #{predictor_forward.1} parent=1 // pred_fallthru
      _
    // Predicated region
    $region50: #{predictor_forward.1} parent=1 // pred_check
      _
    $region51: #{predictor_forward.1} parent=1 // pred_check_branch
      %111 = sbr.rel (0) target = $region53
    $region52: #{predictor_forward.1} parent=1 // pred_region
      %113 = dma.done [#allocation11], 16
    $region53: #{predictor_forward.1} parent=1 // pred_fallthru
      _
    %v114 = vld [vmem:[%s0] sm:$0xf]
    %v115 = vld [vmem:[%s0 + $0x4] sm:$0xf]
    %v116 = vld [vmem:[#allocation2] sm:$0xff]
    %v117 = vld [vmem:[#allocation2 + $0x8] sm:$0xff]
    %v118 = vld [vmem:[#allocation2 + $0x10] sm:$0xff]
    %v119 = vld [vmem:[#allocation2 + $0x18] sm:$0xff]
    %v120 = vld [vmem:[#allocation2 + $0x20] sm:$0xff]
    %v121 = vld [vmem:[#allocation2 + $0x28] sm:$0xff]
    %v122 = vld [vmem:[#allocation2 + $0x30] sm:$0xff]
    %v123 = vld [vmem:[#allocation2 + $0x38] sm:$0xff]
    %v124 = vld [vmem:[#allocation2 + $0x40] sm:$0xff]
    %v125 = vld [vmem:[#allocation2 + $0x48] sm:$0xff]
    %v126 = vld [vmem:[#allocation2 + $0x50] sm:$0xff]
    %v127 = vld [vmem:[#allocation2 + $0x58] sm:$0xff]
    %v128 = vld [vmem:[#allocation2 + $0x60] sm:$0xff]
    %v129 = vld [vmem:[#allocation2 + $0x68] sm:$0xff]
    %v130 = vld [vmem:[#allocation2 + $0x70] sm:$0xff]
    %v131 = vld [vmem:[#allocation2 + $0x78] sm:$0xff]
    %v132 = vld [vmem:[#allocation2 + $0x80] sm:$0xff]
    %v133 = vld [vmem:[#allocation2 + $0x88] sm:$0xff]
    %v134 = vld [vmem:[#allocation2 + $0x90] sm:$0xff]
    %v135 = vld [vmem:[#allocation2 + $0x98] sm:$0xff]
    %v136 = vld [vmem:[#allocation2 + $0xa0] sm:$0xff]
    %v137 = vld [vmem:[#allocation2 + $0xa8] sm:$0xff]
    %v138 = vld [vmem:[#allocation2 + $0xb0] sm:$0xff]
    %v139 = vld [vmem:[#allocation2 + $0xb8] sm:$0xff]
    %v140 = vld [vmem:[#allocation2 + $0xc0] sm:$0xff]
    %v141 = vld [vmem:[#allocation2 + $0xc8] sm:$0xff]
    %v142 = vld [vmem:[#allocation2 + $0xd0] sm:$0xff]
    %v143 = vld [vmem:[#allocation2 + $0xd8] sm:$0xff]
    %v144 = vld [vmem:[#allocation2 + $0xe0] sm:$0xff]
    %v145 = vld [vmem:[#allocation2 + $0xe8] sm:$0xff]
    %v146 = vld [vmem:[#allocation2 + $0xf0] sm:$0xff]
    %v147 = vld [vmem:[#allocation2 + $0xf8] sm:$0xff]
    %v148 = vld [vmem:[#allocation2 + $0x100] sm:$0xff]
    %v149 = vld [vmem:[#allocation2 + $0x108] sm:$0xff]
    %v150 = vld [vmem:[#allocation2 + $0x110] sm:$0xff]
    %v151 = vld [vmem:[#allocation2 + $0x118] sm:$0xff]
    %v152 = vld [vmem:[#allocation2 + $0x120] sm:$0xff]
    %v153 = vld [vmem:[#allocation2 + $0x128] sm:$0xff]
    %v154 = vld [vmem:[#allocation2 + $0x130] sm:$0xff]
    %v155 = vld [vmem:[#allocation2 + $0x138] sm:$0xff]
    %v156 = vld [vmem:[#allocation2 + $0x140] sm:$0xff]
    %v157 = vld [vmem:[#allocation2 + $0x148] sm:$0xff]
    %v158 = vld [vmem:[#allocation2 + $0x150] sm:$0xff]
    %v159 = vld [vmem:[#allocation2 + $0x158] sm:$0xff]
    %v160 = vld [vmem:[#allocation2 + $0x160] sm:$0xff]
    %v161 = vld [vmem:[#allocation2 + $0x168] sm:$0xff]
    %v162 = vld [vmem:[#allocation2 + $0x170] sm:$0xff]
    %v163 = vld [vmem:[#allocation2 + $0x178] sm:$0xff]
    %v164 = vld [vmem:[#allocation2 + $0x180] sm:$0xff]
    %v165 = vld [vmem:[#allocation2 + $0x188] sm:$0xff]
    %v166 = vld [vmem:[#allocation2 + $0x190] sm:$0xff]
    %v167 = vld [vmem:[#allocation2 + $0x198] sm:$0xff]
    %v168 = vld [vmem:[#allocation2 + $0x1a0] sm:$0xff]
    %v169 = vld [vmem:[#allocation2 + $0x1a8] sm:$0xff]
    %v170 = vld [vmem:[#allocation2 + $0x1b0] sm:$0xff]
    %v171 = vld [vmem:[#allocation2 + $0x1b8] sm:$0xff]
    %v172 = vld [vmem:[#allocation2 + $0x1c0] sm:$0xff]
    %v173 = vld [vmem:[#allocation2 + $0x1c8] sm:$0xff]
    %v174 = vld [vmem:[#allocation2 + $0x1d0] sm:$0xff]
    %v175 = vld [vmem:[#allocation2 + $0x1d8] sm:$0xff]
    %v176 = vld [vmem:[#allocation2 + $0x1e0] sm:$0xff]
    %v177 = vld [vmem:[#allocation2 + $0x1e8] sm:$0xff]
    %v178 = vld [vmem:[#allocation2 + $0x1f0] sm:$0xff]
    %v179 = vld [vmem:[#allocation2 + $0x1f8] sm:$0xff]
    %v180 = vld [vmem:[#allocation4] sm:$0xff]
    %v182 = vperm.slane %v180, 0
    %v183 = vperm.slane %v180, 1
    %v184 = vperm.slane %v180, 2
    %v185 = vperm.slane %v180, 3
    %v186 = vperm.slane %v180, 4
    %v187 = vperm.slane %v180, 5
    %v188 = vperm.slane %v180, 6
    %v189 = vperm.slane %v180, 7
    %v200 = vunpack.c.l.b16 %v114
    %v201 = vunpack.c.l.b16 %v115
    %v202 = vpack.c.b16 %v201, %v200
    %v268 = vunpack.c.l.b16 %v116
    %v269 = vunpack.c.h.b16 %v116
    %v270 = vunpack.c.l.b16 %v117
    %v271 = vunpack.c.h.b16 %v117
    %v272 = vunpack.c.l.b16 %v118
    %v273 = vunpack.c.h.b16 %v118
    %v274 = vunpack.c.l.b16 %v119
    %v275 = vunpack.c.h.b16 %v119
    %v276 = vunpack.c.l.b16 %v120
    %v277 = vunpack.c.h.b16 %v120
    %v278 = vunpack.c.l.b16 %v121
    %v279 = vunpack.c.h.b16 %v121
    %v280 = vunpack.c.l.b16 %v122
    %v281 = vunpack.c.h.b16 %v122
    %v282 = vunpack.c.l.b16 %v123
    %v283 = vunpack.c.h.b16 %v123
    %v284 = vunpack.c.l.b16 %v124
    %v285 = vunpack.c.h.b16 %v124
    %v286 = vunpack.c.l.b16 %v125
    %v287 = vunpack.c.h.b16 %v125
    %v288 = vunpack.c.l.b16 %v126
    %v289 = vunpack.c.h.b16 %v126
    %v290 = vunpack.c.l.b16 %v127
    %v291 = vunpack.c.h.b16 %v127
    %v292 = vunpack.c.l.b16 %v128
    %v293 = vunpack.c.h.b16 %v128
    %v294 = vunpack.c.l.b16 %v129
    %v295 = vunpack.c.h.b16 %v129
    %v296 = vunpack.c.l.b16 %v130
    %v297 = vunpack.c.h.b16 %v130
    %v298 = vunpack.c.l.b16 %v131
    %v299 = vunpack.c.h.b16 %v131
    %v300 = vunpack.c.l.b16 %v132
    %v301 = vunpack.c.h.b16 %v132
    %v302 = vunpack.c.l.b16 %v133
    %v303 = vunpack.c.h.b16 %v133
    %v304 = vunpack.c.l.b16 %v134
    %v305 = vunpack.c.h.b16 %v134
    %v306 = vunpack.c.l.b16 %v135
    %v307 = vunpack.c.h.b16 %v135
    %v308 = vunpack.c.l.b16 %v136
    %v309 = vunpack.c.h.b16 %v136
    %v310 = vunpack.c.l.b16 %v137
    %v311 = vunpack.c.h.b16 %v137
    %v312 = vunpack.c.l.b16 %v138
    %v313 = vunpack.c.h.b16 %v138
    %v314 = vunpack.c.l.b16 %v139
    %v315 = vunpack.c.h.b16 %v139
    %v316 = vunpack.c.l.b16 %v140
    %v317 = vunpack.c.h.b16 %v140
    %v318 = vunpack.c.l.b16 %v141
    %v319 = vunpack.c.h.b16 %v141
    %v320 = vunpack.c.l.b16 %v142
    %v321 = vunpack.c.h.b16 %v142
    %v322 = vunpack.c.l.b16 %v143
    %v323 = vunpack.c.h.b16 %v143
    %v324 = vunpack.c.l.b16 %v144
    %v325 = vunpack.c.h.b16 %v144
    %v326 = vunpack.c.l.b16 %v145
    %v327 = vunpack.c.h.b16 %v145
    %v328 = vunpack.c.l.b16 %v146
    %v329 = vunpack.c.h.b16 %v146
    %v330 = vunpack.c.l.b16 %v147
    %v331 = vunpack.c.h.b16 %v147
    %v332 = vunpack.c.l.b16 %v148
    %v333 = vunpack.c.h.b16 %v148
    %v334 = vunpack.c.l.b16 %v149
    %v335 = vunpack.c.h.b16 %v149
    %v336 = vunpack.c.l.b16 %v150
    %v337 = vunpack.c.h.b16 %v150
    %v338 = vunpack.c.l.b16 %v151
    %v339 = vunpack.c.h.b16 %v151
    %v340 = vunpack.c.l.b16 %v152
    %v341 = vunpack.c.h.b16 %v152
    %v342 = vunpack.c.l.b16 %v153
    %v343 = vunpack.c.h.b16 %v153
    %v344 = vunpack.c.l.b16 %v154
    %v345 = vunpack.c.h.b16 %v154
    %v346 = vunpack.c.l.b16 %v155
    %v347 = vunpack.c.h.b16 %v155
    %v348 = vunpack.c.l.b16 %v156
    %v349 = vunpack.c.h.b16 %v156
    %v350 = vunpack.c.l.b16 %v157
    %v351 = vunpack.c.h.b16 %v157
    %v352 = vunpack.c.l.b16 %v158
    %v353 = vunpack.c.h.b16 %v158
    %v354 = vunpack.c.l.b16 %v159
    %v355 = vunpack.c.h.b16 %v159
    %v356 = vunpack.c.l.b16 %v160
    %v357 = vunpack.c.h.b16 %v160
    %v358 = vunpack.c.l.b16 %v161
    %v359 = vunpack.c.h.b16 %v161
    %v360 = vunpack.c.l.b16 %v162
    %v361 = vunpack.c.h.b16 %v162
    %v362 = vunpack.c.l.b16 %v163
    %v363 = vunpack.c.h.b16 %v163
    %v364 = vunpack.c.l.b16 %v164
    %v365 = vunpack.c.h.b16 %v164
    %v366 = vunpack.c.l.b16 %v165
    %v367 = vunpack.c.h.b16 %v165
    %v368 = vunpack.c.l.b16 %v166
    %v369 = vunpack.c.h.b16 %v166
    %v370 = vunpack.c.l.b16 %v167
    %v371 = vunpack.c.h.b16 %v167
    %v372 = vunpack.c.l.b16 %v168
    %v373 = vunpack.c.h.b16 %v168
    %v374 = vunpack.c.l.b16 %v169
    %v375 = vunpack.c.h.b16 %v169
    %v376 = vunpack.c.l.b16 %v170
    %v377 = vunpack.c.h.b16 %v170
    %v378 = vunpack.c.l.b16 %v171
    %v379 = vunpack.c.h.b16 %v171
    %v380 = vunpack.c.l.b16 %v172
    %v381 = vunpack.c.h.b16 %v172
    %v382 = vunpack.c.l.b16 %v173
    %v383 = vunpack.c.h.b16 %v173
    %v384 = vunpack.c.l.b16 %v174
    %v385 = vunpack.c.h.b16 %v174
    %v386 = vunpack.c.l.b16 %v175
    %v387 = vunpack.c.h.b16 %v175
    %v388 = vunpack.c.l.b16 %v176
    %v389 = vunpack.c.h.b16 %v176
    %v390 = vunpack.c.l.b16 %v177
    %v391 = vunpack.c.h.b16 %v177
    %v392 = vunpack.c.l.b16 %v178
    %v393 = vunpack.c.h.b16 %v178
    %v394 = vunpack.c.l.b16 %v179
    %v395 = vunpack.c.h.b16 %v179
    %v396 = vpack.c.b16 %v276, %v268
    %v397 = vpack.c.b16 %v277, %v269
    %v398 = vpack.c.b16 %v278, %v270
    %v399 = vpack.c.b16 %v279, %v271
    %v400 = vpack.c.b16 %v280, %v272
    %v401 = vpack.c.b16 %v281, %v273
    %v402 = vpack.c.b16 %v282, %v274
    %v403 = vpack.c.b16 %v283, %v275
    %v404 = vpack.c.b16 %v292, %v284
    %v405 = vpack.c.b16 %v293, %v285
    %v406 = vpack.c.b16 %v294, %v286
    %v407 = vpack.c.b16 %v295, %v287
    %v408 = vpack.c.b16 %v296, %v288
    %v409 = vpack.c.b16 %v297, %v289
    %v410 = vpack.c.b16 %v298, %v290
    %v411 = vpack.c.b16 %v299, %v291
    %v412 = vpack.c.b16 %v308, %v300
    %v413 = vpack.c.b16 %v309, %v301
    %v414 = vpack.c.b16 %v310, %v302
    %v415 = vpack.c.b16 %v311, %v303
    %v416 = vpack.c.b16 %v312, %v304
    %v417 = vpack.c.b16 %v313, %v305
    %v418 = vpack.c.b16 %v314, %v306
    %v419 = vpack.c.b16 %v315, %v307
    %v420 = vpack.c.b16 %v324, %v316
    %v421 = vpack.c.b16 %v325, %v317
    %v422 = vpack.c.b16 %v326, %v318
    %v423 = vpack.c.b16 %v327, %v319
    %v424 = vpack.c.b16 %v328, %v320
    %v425 = vpack.c.b16 %v329, %v321
    %v426 = vpack.c.b16 %v330, %v322
    %v427 = vpack.c.b16 %v331, %v323
    %v428 = vpack.c.b16 %v340, %v332
    %v429 = vpack.c.b16 %v341, %v333
    %v430 = vpack.c.b16 %v342, %v334
    %v431 = vpack.c.b16 %v343, %v335
    %v432 = vpack.c.b16 %v344, %v336
    %v433 = vpack.c.b16 %v345, %v337
    %v434 = vpack.c.b16 %v346, %v338
    %v435 = vpack.c.b16 %v347, %v339
    %v436 = vpack.c.b16 %v356, %v348
    %v437 = vpack.c.b16 %v357, %v349
    %v438 = vpack.c.b16 %v358, %v350
    %v439 = vpack.c.b16 %v359, %v351
    %v440 = vpack.c.b16 %v360, %v352
    %v441 = vpack.c.b16 %v361, %v353
    %v442 = vpack.c.b16 %v362, %v354
    %v443 = vpack.c.b16 %v363, %v355
    %v444 = vpack.c.b16 %v372, %v364
    %v445 = vpack.c.b16 %v373, %v365
    %v446 = vpack.c.b16 %v374, %v366
    %v447 = vpack.c.b16 %v375, %v367
    %v448 = vpack.c.b16 %v376, %v368
    %v449 = vpack.c.b16 %v377, %v369
    %v450 = vpack.c.b16 %v378, %v370
    %v451 = vpack.c.b16 %v379, %v371
    %v452 = vpack.c.b16 %v388, %v380
    %v453 = vpack.c.b16 %v389, %v381
    %v454 = vpack.c.b16 %v390, %v382
    %v455 = vpack.c.b16 %v391, %v383
    %v456 = vpack.c.b16 %v392, %v384
    %v457 = vpack.c.b16 %v393, %v385
    %v458 = vpack.c.b16 %v394, %v386
    %v459 = vpack.c.b16 %v395, %v387
    %524 = vmatpush.bf16.msra.mxu0 %v452
    %525 = vmatpush.bf16.msra.mxu0 %v444
    %526 = vmatpush.bf16.msra.mxu0 %v436
    %527 = vmatpush.bf16.msra.mxu0 %v428
    %528 = vmatpush.bf16.msra.mxu0 %v420
    %529 = vmatpush.bf16.msra.mxu0 %v412
    %530 = vmatpush.bf16.msra.mxu0 %v404
    %531 = vmatpush.bf16.msra.mxu0 %v396
    %532 = vmatmul.bf16.gmra.mxu0 %v202
    %v533 = vpop.f32.mrf.mxu0
    %v534 = vadd.f32 %v182, %v533
    %v535 = vpop.f32.mrf.mxu0
    %v536 = vadd.f32 %v182, %v535
    %537 = vdwg.mxu0
    %538 = vmatpush.bf16.msra.mxu0 %v453
    %539 = vmatpush.bf16.msra.mxu0 %v445
    %540 = vmatpush.bf16.msra.mxu0 %v437
    %541 = vmatpush.bf16.msra.mxu0 %v429
    %542 = vmatpush.bf16.msra.mxu0 %v421
    %543 = vmatpush.bf16.msra.mxu0 %v413
    %544 = vmatpush.bf16.msra.mxu0 %v405
    %545 = vmatpush.bf16.msra.mxu0 %v397
    %546 = vmatmul.bf16.gmra.mxu0 %v202
    %v547 = vpop.f32.mrf.mxu0
    %v548 = vadd.f32 %v183, %v547
    %v549 = vpop.f32.mrf.mxu0
    %v550 = vadd.f32 %v183, %v549
    %551 = vdwg.mxu0
    %552 = vmatpush.bf16.msra.mxu0 %v454
    %553 = vmatpush.bf16.msra.mxu0 %v446
    %554 = vmatpush.bf16.msra.mxu0 %v438
    %555 = vmatpush.bf16.msra.mxu0 %v430
    %556 = vmatpush.bf16.msra.mxu0 %v422
    %557 = vmatpush.bf16.msra.mxu0 %v414
    %558 = vmatpush.bf16.msra.mxu0 %v406
    %559 = vmatpush.bf16.msra.mxu0 %v398
    %560 = vmatmul.bf16.gmra.mxu0 %v202
    %v561 = vpop.f32.mrf.mxu0
    %v562 = vadd.f32 %v184, %v561
    %v563 = vpop.f32.mrf.mxu0
    %v564 = vadd.f32 %v184, %v563
    %565 = vdwg.mxu0
    %566 = vmatpush.bf16.msra.mxu0 %v455
    %567 = vmatpush.bf16.msra.mxu0 %v447
    %568 = vmatpush.bf16.msra.mxu0 %v439
    %569 = vmatpush.bf16.msra.mxu0 %v431
    %570 = vmatpush.bf16.msra.mxu0 %v423
    %571 = vmatpush.bf16.msra.mxu0 %v415
    %572 = vmatpush.bf16.msra.mxu0 %v407
    %573 = vmatpush.bf16.msra.mxu0 %v399
    %574 = vmatmul.bf16.gmra.mxu0 %v202
    %v575 = vpop.f32.mrf.mxu0
    %v576 = vadd.f32 %v185, %v575
    %v577 = vpop.f32.mrf.mxu0
    %v578 = vadd.f32 %v185, %v577
    %579 = vdwg.mxu0
    %580 = vmatpush.bf16.msra.mxu0 %v456
    %581 = vmatpush.bf16.msra.mxu0 %v448
    %582 = vmatpush.bf16.msra.mxu0 %v440
    %583 = vmatpush.bf16.msra.mxu0 %v432
    %584 = vmatpush.bf16.msra.mxu0 %v424
    %585 = vmatpush.bf16.msra.mxu0 %v416
    %586 = vmatpush.bf16.msra.mxu0 %v408
    %587 = vmatpush.bf16.msra.mxu0 %v400
    %588 = vmatmul.bf16.gmra.mxu0 %v202
    %v589 = vpop.f32.mrf.mxu0
    %v590 = vadd.f32 %v186, %v589
    %v591 = vpop.f32.mrf.mxu0
    %v592 = vadd.f32 %v186, %v591
    %593 = vdwg.mxu0
    %594 = vmatpush.bf16.msra.mxu0 %v457
    %595 = vmatpush.bf16.msra.mxu0 %v449
    %596 = vmatpush.bf16.msra.mxu0 %v441
    %597 = vmatpush.bf16.msra.mxu0 %v433
    %598 = vmatpush.bf16.msra.mxu0 %v425
    %599 = vmatpush.bf16.msra.mxu0 %v417
    %600 = vmatpush.bf16.msra.mxu0 %v409
    %601 = vmatpush.bf16.msra.mxu0 %v401
    %602 = vmatmul.bf16.gmra.mxu0 %v202
    %v603 = vpop.f32.mrf.mxu0
    %v604 = vadd.f32 %v187, %v603
    %v605 = vpop.f32.mrf.mxu0
    %v606 = vadd.f32 %v187, %v605
    %607 = vdwg.mxu0
    %608 = vmatpush.bf16.msra.mxu0 %v458
    %609 = vmatpush.bf16.msra.mxu0 %v450
    %610 = vmatpush.bf16.msra.mxu0 %v442
    %611 = vmatpush.bf16.msra.mxu0 %v434
    %612 = vmatpush.bf16.msra.mxu0 %v426
    %613 = vmatpush.bf16.msra.mxu0 %v418
    %614 = vmatpush.bf16.msra.mxu0 %v410
    %615 = vmatpush.bf16.msra.mxu0 %v402
    %616 = vmatmul.bf16.gmra.mxu0 %v202
    %v617 = vpop.f32.mrf.mxu0
    %v618 = vadd.f32 %v188, %v617
    %v619 = vpop.f32.mrf.mxu0
    %v620 = vadd.f32 %v188, %v619
    %621 = vdwg.mxu0
    %622 = vmatpush.bf16.msra.mxu0 %v459
    %623 = vmatpush.bf16.msra.mxu0 %v451
    %624 = vmatpush.bf16.msra.mxu0 %v443
    %625 = vmatpush.bf16.msra.mxu0 %v435
    %626 = vmatpush.bf16.msra.mxu0 %v427
    %627 = vmatpush.bf16.msra.mxu0 %v419
    %628 = vmatpush.bf16.msra.mxu0 %v411
    %629 = vmatpush.bf16.msra.mxu0 %v403
    %630 = vmatmul.bf16.gmra.mxu0 %v202
    %v631 = vpop.f32.mrf.mxu0
    %v632 = vadd.f32 %v189, %v631
    %v633 = vpop.f32.mrf.mxu0
    %v634 = vadd.f32 %v189, %v633
    %635 = vdwg.mxu0
    %v636 = vmax.f32 %v534, 0.0
    %v637 = vmax.f32 %v548, 0.0
    %v638 = vmax.f32 %v562, 0.0
    %v639 = vmax.f32 %v576, 0.0
    %v640 = vmax.f32 %v590, 0.0
    %v641 = vmax.f32 %v604, 0.0
    %v642 = vmax.f32 %v618, 0.0
    %v643 = vmax.f32 %v632, 0.0
    %v644 = vmax.f32 %v536, 0.0
    %v645 = vmax.f32 %v550, 0.0
    %v646 = vmax.f32 %v564, 0.0
    %v647 = vmax.f32 %v578, 0.0
    %v648 = vmax.f32 %v592, 0.0
    %v649 = vmax.f32 %v606, 0.0
    %v650 = vmax.f32 %v620, 0.0
    %v651 = vmax.f32 %v634, 0.0
    %v652 = vpack.c.bf16 %v644, %v636
    %v653 = vpack.c.bf16 %v645, %v637
    %v654 = vpack.c.bf16 %v646, %v638
    %v655 = vpack.c.bf16 %v647, %v639
    %v656 = vpack.c.bf16 %v648, %v640
    %v657 = vpack.c.bf16 %v649, %v641
    %v658 = vpack.c.bf16 %v650, %v642
    %v659 = vpack.c.bf16 %v651, %v643
    %v660 = vld [vmem:[#allocation6] sm:$0xff]
    %v661 = vld [vmem:[#allocation6 + $0x8] sm:$0xff]
    %v662 = vld [vmem:[#allocation6 + $0x10] sm:$0xff]
    %v663 = vld [vmem:[#allocation6 + $0x18] sm:$0xff]
    %v664 = vld [vmem:[#allocation6 + $0x20] sm:$0xff]
    %v665 = vld [vmem:[#allocation6 + $0x28] sm:$0xff]
    %v666 = vld [vmem:[#allocation6 + $0x30] sm:$0xff]
    %v667 = vld [vmem:[#allocation6 + $0x38] sm:$0xff]
    %v668 = vld [vmem:[#allocation6 + $0x40] sm:$0xff]
    %v669 = vld [vmem:[#allocation6 + $0x48] sm:$0xff]
    %v670 = vld [vmem:[#allocation6 + $0x50] sm:$0xff]
    %v671 = vld [vmem:[#allocation6 + $0x58] sm:$0xff]
    %v672 = vld [vmem:[#allocation6 + $0x60] sm:$0xff]
    %v673 = vld [vmem:[#allocation6 + $0x68] sm:$0xff]
    %v674 = vld [vmem:[#allocation6 + $0x70] sm:$0xff]
    %v675 = vld [vmem:[#allocation6 + $0x78] sm:$0xff]
    %v676 = vld [vmem:[#allocation6 + $0x80] sm:$0xff]
    %v677 = vld [vmem:[#allocation6 + $0x88] sm:$0xff]
    %v678 = vld [vmem:[#allocation6 + $0x90] sm:$0xff]
    %v679 = vld [vmem:[#allocation6 + $0x98] sm:$0xff]
    %v680 = vld [vmem:[#allocation6 + $0xa0] sm:$0xff]
    %v681 = vld [vmem:[#allocation6 + $0xa8] sm:$0xff]
    %v682 = vld [vmem:[#allocation6 + $0xb0] sm:$0xff]
    %v683 = vld [vmem:[#allocation6 + $0xb8] sm:$0xff]
    %v684 = vld [vmem:[#allocation6 + $0xc0] sm:$0xff]
    %v685 = vld [vmem:[#allocation6 + $0xc8] sm:$0xff]
    %v686 = vld [vmem:[#allocation6 + $0xd0] sm:$0xff]
    %v687 = vld [vmem:[#allocation6 + $0xd8] sm:$0xff]
    %v688 = vld [vmem:[#allocation6 + $0xe0] sm:$0xff]
    %v689 = vld [vmem:[#allocation6 + $0xe8] sm:$0xff]
    %v690 = vld [vmem:[#allocation6 + $0xf0] sm:$0xff]
    %v691 = vld [vmem:[#allocation6 + $0xf8] sm:$0xff]
    %v692 = vld [vmem:[#allocation6 + $0x100] sm:$0xff]
    %v693 = vld [vmem:[#allocation6 + $0x108] sm:$0xff]
    %v694 = vld [vmem:[#allocation6 + $0x110] sm:$0xff]
    %v695 = vld [vmem:[#allocation6 + $0x118] sm:$0xff]
    %v696 = vld [vmem:[#allocation6 + $0x120] sm:$0xff]
    %v697 = vld [vmem:[#allocation6 + $0x128] sm:$0xff]
    %v698 = vld [vmem:[#allocation6 + $0x130] sm:$0xff]
    %v699 = vld [vmem:[#allocation6 + $0x138] sm:$0xff]
    %v700 = vld [vmem:[#allocation6 + $0x140] sm:$0xff]
    %v701 = vld [vmem:[#allocation6 + $0x148] sm:$0xff]
    %v702 = vld [vmem:[#allocation6 + $0x150] sm:$0xff]
    %v703 = vld [vmem:[#allocation6 + $0x158] sm:$0xff]
    %v704 = vld [vmem:[#allocation6 + $0x160] sm:$0xff]
    %v705 = vld [vmem:[#allocation6 + $0x168] sm:$0xff]
    %v706 = vld [vmem:[#allocation6 + $0x170] sm:$0xff]
    %v707 = vld [vmem:[#allocation6 + $0x178] sm:$0xff]
    %v708 = vld [vmem:[#allocation6 + $0x180] sm:$0xff]
    %v709 = vld [vmem:[#allocation6 + $0x188] sm:$0xff]
    %v710 = vld [vmem:[#allocation6 + $0x190] sm:$0xff]
    %v711 = vld [vmem:[#allocation6 + $0x198] sm:$0xff]
    %v712 = vld [vmem:[#allocation6 + $0x1a0] sm:$0xff]
    %v713 = vld [vmem:[#allocation6 + $0x1a8] sm:$0xff]
    %v714 = vld [vmem:[#allocation6 + $0x1b0] sm:$0xff]
    %v715 = vld [vmem:[#allocation6 + $0x1b8] sm:$0xff]
    %v716 = vld [vmem:[#allocation6 + $0x1c0] sm:$0xff]
    %v717 = vld [vmem:[#allocation6 + $0x1c8] sm:$0xff]
    %v718 = vld [vmem:[#allocation6 + $0x1d0] sm:$0xff]
    %v719 = vld [vmem:[#allocation6 + $0x1d8] sm:$0xff]
    %v720 = vld [vmem:[#allocation6 + $0x1e0] sm:$0xff]
    %v721 = vld [vmem:[#allocation6 + $0x1e8] sm:$0xff]
    %v722 = vld [vmem:[#allocation6 + $0x1f0] sm:$0xff]
    %v723 = vld [vmem:[#allocation6 + $0x1f8] sm:$0xff]
    %v724 = vld [vmem:[#allocation6 + $0x200] sm:$0xff]
    %v725 = vld [vmem:[#allocation6 + $0x208] sm:$0xff]
    %v726 = vld [vmem:[#allocation6 + $0x210] sm:$0xff]
    %v727 = vld [vmem:[#allocation6 + $0x218] sm:$0xff]
    %v728 = vld [vmem:[#allocation6 + $0x220] sm:$0xff]
    %v729 = vld [vmem:[#allocation6 + $0x228] sm:$0xff]
    %v730 = vld [vmem:[#allocation6 + $0x230] sm:$0xff]
    %v731 = vld [vmem:[#allocation6 + $0x238] sm:$0xff]
    %v732 = vld [vmem:[#allocation6 + $0x240] sm:$0xff]
    %v733 = vld [vmem:[#allocation6 + $0x248] sm:$0xff]
    %v734 = vld [vmem:[#allocation6 + $0x250] sm:$0xff]
    %v735 = vld [vmem:[#allocation6 + $0x258] sm:$0xff]
    %v736 = vld [vmem:[#allocation6 + $0x260] sm:$0xff]
    %v737 = vld [vmem:[#allocation6 + $0x268] sm:$0xff]
    %v738 = vld [vmem:[#allocation6 + $0x270] sm:$0xff]
    %v739 = vld [vmem:[#allocation6 + $0x278] sm:$0xff]
    %v740 = vld [vmem:[#allocation6 + $0x280] sm:$0xff]
    %v741 = vld [vmem:[#allocation6 + $0x288] sm:$0xff]
    %v742 = vld [vmem:[#allocation6 + $0x290] sm:$0xff]
    %v743 = vld [vmem:[#allocation6 + $0x298] sm:$0xff]
    %v744 = vld [vmem:[#allocation6 + $0x2a0] sm:$0xff]
    %v745 = vld [vmem:[#allocation6 + $0x2a8] sm:$0xff]
    %v746 = vld [vmem:[#allocation6 + $0x2b0] sm:$0xff]
    %v747 = vld [vmem:[#allocation6 + $0x2b8] sm:$0xff]
    %v748 = vld [vmem:[#allocation6 + $0x2c0] sm:$0xff]
    %v749 = vld [vmem:[#allocation6 + $0x2c8] sm:$0xff]
    %v750 = vld [vmem:[#allocation6 + $0x2d0] sm:$0xff]
    %v751 = vld [vmem:[#allocation6 + $0x2d8] sm:$0xff]
    %v752 = vld [vmem:[#allocation6 + $0x2e0] sm:$0xff]
    %v753 = vld [vmem:[#allocation6 + $0x2e8] sm:$0xff]
    %v754 = vld [vmem:[#allocation6 + $0x2f0] sm:$0xff]
    %v755 = vld [vmem:[#allocation6 + $0x2f8] sm:$0xff]
    %v756 = vld [vmem:[#allocation6 + $0x300] sm:$0xff]
    %v757 = vld [vmem:[#allocation6 + $0x308] sm:$0xff]
    %v758 = vld [vmem:[#allocation6 + $0x310] sm:$0xff]
    %v759 = vld [vmem:[#allocation6 + $0x318] sm:$0xff]
    %v760 = vld [vmem:[#allocation6 + $0x320] sm:$0xff]
    %v761 = vld [vmem:[#allocation6 + $0x328] sm:$0xff]
    %v762 = vld [vmem:[#allocation6 + $0x330] sm:$0xff]
    %v763 = vld [vmem:[#allocation6 + $0x338] sm:$0xff]
    %v764 = vld [vmem:[#allocation6 + $0x340] sm:$0xff]
    %v765 = vld [vmem:[#allocation6 + $0x348] sm:$0xff]
    %v766 = vld [vmem:[#allocation6 + $0x350] sm:$0xff]
    %v767 = vld [vmem:[#allocation6 + $0x358] sm:$0xff]
    %v768 = vld [vmem:[#allocation6 + $0x360] sm:$0xff]
    %v769 = vld [vmem:[#allocation6 + $0x368] sm:$0xff]
    %v770 = vld [vmem:[#allocation6 + $0x370] sm:$0xff]
    %v771 = vld [vmem:[#allocation6 + $0x378] sm:$0xff]
    %v772 = vld [vmem:[#allocation6 + $0x380] sm:$0xff]
    %v773 = vld [vmem:[#allocation6 + $0x388] sm:$0xff]
    %v774 = vld [vmem:[#allocation6 + $0x390] sm:$0xff]
    %v775 = vld [vmem:[#allocation6 + $0x398] sm:$0xff]
    %v776 = vld [vmem:[#allocation6 + $0x3a0] sm:$0xff]
    %v777 = vld [vmem:[#allocation6 + $0x3a8] sm:$0xff]
    %v778 = vld [vmem:[#allocation6 + $0x3b0] sm:$0xff]
    %v779 = vld [vmem:[#allocation6 + $0x3b8] sm:$0xff]
    %v780 = vld [vmem:[#allocation6 + $0x3c0] sm:$0xff]
    %v781 = vld [vmem:[#allocation6 + $0x3c8] sm:$0xff]
    %v782 = vld [vmem:[#allocation6 + $0x3d0] sm:$0xff]
    %v783 = vld [vmem:[#allocation6 + $0x3d8] sm:$0xff]
    %v784 = vld [vmem:[#allocation6 + $0x3e0] sm:$0xff]
    %v785 = vld [vmem:[#allocation6 + $0x3e8] sm:$0xff]
    %v786 = vld [vmem:[#allocation6 + $0x3f0] sm:$0xff]
    %v787 = vld [vmem:[#allocation6 + $0x3f8] sm:$0xff]
    %v788 = vld [vmem:[#allocation6 + $0x400] sm:$0xff]
    %v789 = vld [vmem:[#allocation6 + $0x408] sm:$0xff]
    %v790 = vld [vmem:[#allocation6 + $0x410] sm:$0xff]
    %v791 = vld [vmem:[#allocation6 + $0x418] sm:$0xff]
    %v792 = vld [vmem:[#allocation6 + $0x420] sm:$0xff]
    %v793 = vld [vmem:[#allocation6 + $0x428] sm:$0xff]
    %v794 = vld [vmem:[#allocation6 + $0x430] sm:$0xff]
    %v795 = vld [vmem:[#allocation6 + $0x438] sm:$0xff]
    %v796 = vld [vmem:[#allocation6 + $0x440] sm:$0xff]
    %v797 = vld [vmem:[#allocation6 + $0x448] sm:$0xff]
    %v798 = vld [vmem:[#allocation6 + $0x450] sm:$0xff]
    %v799 = vld [vmem:[#allocation6 + $0x458] sm:$0xff]
    %v800 = vld [vmem:[#allocation6 + $0x460] sm:$0xff]
    %v801 = vld [vmem:[#allocation6 + $0x468] sm:$0xff]
    %v802 = vld [vmem:[#allocation6 + $0x470] sm:$0xff]
    %v803 = vld [vmem:[#allocation6 + $0x478] sm:$0xff]
    %v804 = vld [vmem:[#allocation6 + $0x480] sm:$0xff]
    %v805 = vld [vmem:[#allocation6 + $0x488] sm:$0xff]
    %v806 = vld [vmem:[#allocation6 + $0x490] sm:$0xff]
    %v807 = vld [vmem:[#allocation6 + $0x498] sm:$0xff]
    %v808 = vld [vmem:[#allocation6 + $0x4a0] sm:$0xff]
    %v809 = vld [vmem:[#allocation6 + $0x4a8] sm:$0xff]
    %v810 = vld [vmem:[#allocation6 + $0x4b0] sm:$0xff]
    %v811 = vld [vmem:[#allocation6 + $0x4b8] sm:$0xff]
    %v812 = vld [vmem:[#allocation6 + $0x4c0] sm:$0xff]
    %v813 = vld [vmem:[#allocation6 + $0x4c8] sm:$0xff]
    %v814 = vld [vmem:[#allocation6 + $0x4d0] sm:$0xff]
    %v815 = vld [vmem:[#allocation6 + $0x4d8] sm:$0xff]
    %v816 = vld [vmem:[#allocation6 + $0x4e0] sm:$0xff]
    %v817 = vld [vmem:[#allocation6 + $0x4e8] sm:$0xff]
    %v818 = vld [vmem:[#allocation6 + $0x4f0] sm:$0xff]
    %v819 = vld [vmem:[#allocation6 + $0x4f8] sm:$0xff]
    %v820 = vld [vmem:[#allocation6 + $0x500] sm:$0xff]
    %v821 = vld [vmem:[#allocation6 + $0x508] sm:$0xff]
    %v822 = vld [vmem:[#allocation6 + $0x510] sm:$0xff]
    %v823 = vld [vmem:[#allocation6 + $0x518] sm:$0xff]
    %v824 = vld [vmem:[#allocation6 + $0x520] sm:$0xff]
    %v825 = vld [vmem:[#allocation6 + $0x528] sm:$0xff]
    %v826 = vld [vmem:[#allocation6 + $0x530] sm:$0xff]
    %v827 = vld [vmem:[#allocation6 + $0x538] sm:$0xff]
    %v828 = vld [vmem:[#allocation6 + $0x540] sm:$0xff]
    %v829 = vld [vmem:[#allocation6 + $0x548] sm:$0xff]
    %v830 = vld [vmem:[#allocation6 + $0x550] sm:$0xff]
    %v831 = vld [vmem:[#allocation6 + $0x558] sm:$0xff]
    %v832 = vld [vmem:[#allocation6 + $0x560] sm:$0xff]
    %v833 = vld [vmem:[#allocation6 + $0x568] sm:$0xff]
    %v834 = vld [vmem:[#allocation6 + $0x570] sm:$0xff]
    %v835 = vld [vmem:[#allocation6 + $0x578] sm:$0xff]
    %v836 = vld [vmem:[#allocation6 + $0x580] sm:$0xff]
    %v837 = vld [vmem:[#allocation6 + $0x588] sm:$0xff]
    %v838 = vld [vmem:[#allocation6 + $0x590] sm:$0xff]
    %v839 = vld [vmem:[#allocation6 + $0x598] sm:$0xff]
    %v840 = vld [vmem:[#allocation6 + $0x5a0] sm:$0xff]
    %v841 = vld [vmem:[#allocation6 + $0x5a8] sm:$0xff]
    %v842 = vld [vmem:[#allocation6 + $0x5b0] sm:$0xff]
    %v843 = vld [vmem:[#allocation6 + $0x5b8] sm:$0xff]
    %v844 = vld [vmem:[#allocation6 + $0x5c0] sm:$0xff]
    %v845 = vld [vmem:[#allocation6 + $0x5c8] sm:$0xff]
    %v846 = vld [vmem:[#allocation6 + $0x5d0] sm:$0xff]
    %v847 = vld [vmem:[#allocation6 + $0x5d8] sm:$0xff]
    %v848 = vld [vmem:[#allocation6 + $0x5e0] sm:$0xff]
    %v849 = vld [vmem:[#allocation6 + $0x5e8] sm:$0xff]
    %v850 = vld [vmem:[#allocation6 + $0x5f0] sm:$0xff]
    %v851 = vld [vmem:[#allocation6 + $0x5f8] sm:$0xff]
    %v852 = vld [vmem:[#allocation6 + $0x600] sm:$0xff]
    %v853 = vld [vmem:[#allocation6 + $0x608] sm:$0xff]
    %v854 = vld [vmem:[#allocation6 + $0x610] sm:$0xff]
    %v855 = vld [vmem:[#allocation6 + $0x618] sm:$0xff]
    %v856 = vld [vmem:[#allocation6 + $0x620] sm:$0xff]
    %v857 = vld [vmem:[#allocation6 + $0x628] sm:$0xff]
    %v858 = vld [vmem:[#allocation6 + $0x630] sm:$0xff]
    %v859 = vld [vmem:[#allocation6 + $0x638] sm:$0xff]
    %v860 = vld [vmem:[#allocation6 + $0x640] sm:$0xff]
    %v861 = vld [vmem:[#allocation6 + $0x648] sm:$0xff]
    %v862 = vld [vmem:[#allocation6 + $0x650] sm:$0xff]
    %v863 = vld [vmem:[#allocation6 + $0x658] sm:$0xff]
    %v864 = vld [vmem:[#allocation6 + $0x660] sm:$0xff]
    %v865 = vld [vmem:[#allocation6 + $0x668] sm:$0xff]
    %v866 = vld [vmem:[#allocation6 + $0x670] sm:$0xff]
    %v867 = vld [vmem:[#allocation6 + $0x678] sm:$0xff]
    %v868 = vld [vmem:[#allocation6 + $0x680] sm:$0xff]
    %v869 = vld [vmem:[#allocation6 + $0x688] sm:$0xff]
    %v870 = vld [vmem:[#allocation6 + $0x690] sm:$0xff]
    %v871 = vld [vmem:[#allocation6 + $0x698] sm:$0xff]
    %v872 = vld [vmem:[#allocation6 + $0x6a0] sm:$0xff]
    %v873 = vld [vmem:[#allocation6 + $0x6a8] sm:$0xff]
    %v874 = vld [vmem:[#allocation6 + $0x6b0] sm:$0xff]
    %v875 = vld [vmem:[#allocation6 + $0x6b8] sm:$0xff]
    %v876 = vld [vmem:[#allocation6 + $0x6c0] sm:$0xff]
    %v877 = vld [vmem:[#allocation6 + $0x6c8] sm:$0xff]
    %v878 = vld [vmem:[#allocation6 + $0x6d0] sm:$0xff]
    %v879 = vld [vmem:[#allocation6 + $0x6d8] sm:$0xff]
    %v880 = vld [vmem:[#allocation6 + $0x6e0] sm:$0xff]
    %v881 = vld [vmem:[#allocation6 + $0x6e8] sm:$0xff]
    %v882 = vld [vmem:[#allocation6 + $0x6f0] sm:$0xff]
    %v883 = vld [vmem:[#allocation6 + $0x6f8] sm:$0xff]
    %v884 = vld [vmem:[#allocation6 + $0x700] sm:$0xff]
    %v885 = vld [vmem:[#allocation6 + $0x708] sm:$0xff]
    %v886 = vld [vmem:[#allocation6 + $0x710] sm:$0xff]
    %v887 = vld [vmem:[#allocation6 + $0x718] sm:$0xff]
    %v888 = vld [vmem:[#allocation6 + $0x720] sm:$0xff]
    %v889 = vld [vmem:[#allocation6 + $0x728] sm:$0xff]
    %v890 = vld [vmem:[#allocation6 + $0x730] sm:$0xff]
    %v891 = vld [vmem:[#allocation6 + $0x738] sm:$0xff]
    %v892 = vld [vmem:[#allocation6 + $0x740] sm:$0xff]
    %v893 = vld [vmem:[#allocation6 + $0x748] sm:$0xff]
    %v894 = vld [vmem:[#allocation6 + $0x750] sm:$0xff]
    %v895 = vld [vmem:[#allocation6 + $0x758] sm:$0xff]
    %v896 = vld [vmem:[#allocation6 + $0x760] sm:$0xff]
    %v897 = vld [vmem:[#allocation6 + $0x768] sm:$0xff]
    %v898 = vld [vmem:[#allocation6 + $0x770] sm:$0xff]
    %v899 = vld [vmem:[#allocation6 + $0x778] sm:$0xff]
    %v900 = vld [vmem:[#allocation6 + $0x780] sm:$0xff]
    %v901 = vld [vmem:[#allocation6 + $0x788] sm:$0xff]
    %v902 = vld [vmem:[#allocation6 + $0x790] sm:$0xff]
    %v903 = vld [vmem:[#allocation6 + $0x798] sm:$0xff]
    %v904 = vld [vmem:[#allocation6 + $0x7a0] sm:$0xff]
    %v905 = vld [vmem:[#allocation6 + $0x7a8] sm:$0xff]
    %v906 = vld [vmem:[#allocation6 + $0x7b0] sm:$0xff]
    %v907 = vld [vmem:[#allocation6 + $0x7b8] sm:$0xff]
    %v908 = vld [vmem:[#allocation6 + $0x7c0] sm:$0xff]
    %v909 = vld [vmem:[#allocation6 + $0x7c8] sm:$0xff]
    %v910 = vld [vmem:[#allocation6 + $0x7d0] sm:$0xff]
    %v911 = vld [vmem:[#allocation6 + $0x7d8] sm:$0xff]
    %v912 = vld [vmem:[#allocation6 + $0x7e0] sm:$0xff]
    %v913 = vld [vmem:[#allocation6 + $0x7e8] sm:$0xff]
    %v914 = vld [vmem:[#allocation6 + $0x7f0] sm:$0xff]
    %v915 = vld [vmem:[#allocation6 + $0x7f8] sm:$0xff]
    %v916 = vld [vmem:[#allocation6 + $0x800] sm:$0xff]
    %v917 = vld [vmem:[#allocation6 + $0x808] sm:$0xff]
    %v918 = vld [vmem:[#allocation6 + $0x810] sm:$0xff]
    %v919 = vld [vmem:[#allocation6 + $0x818] sm:$0xff]
    %v920 = vld [vmem:[#allocation6 + $0x820] sm:$0xff]
    %v921 = vld [vmem:[#allocation6 + $0x828] sm:$0xff]
    %v922 = vld [vmem:[#allocation6 + $0x830] sm:$0xff]
    %v923 = vld [vmem:[#allocation6 + $0x838] sm:$0xff]
    %v924 = vld [vmem:[#allocation6 + $0x840] sm:$0xff]
    %v925 = vld [vmem:[#allocation6 + $0x848] sm:$0xff]
    %v926 = vld [vmem:[#allocation6 + $0x850] sm:$0xff]
    %v927 = vld [vmem:[#allocation6 + $0x858] sm:$0xff]
    %v928 = vld [vmem:[#allocation6 + $0x860] sm:$0xff]
    %v929 = vld [vmem:[#allocation6 + $0x868] sm:$0xff]
    %v930 = vld [vmem:[#allocation6 + $0x870] sm:$0xff]
    %v931 = vld [vmem:[#allocation6 + $0x878] sm:$0xff]
    %v932 = vld [vmem:[#allocation6 + $0x880] sm:$0xff]
    %v933 = vld [vmem:[#allocation6 + $0x888] sm:$0xff]
    %v934 = vld [vmem:[#allocation6 + $0x890] sm:$0xff]
    %v935 = vld [vmem:[#allocation6 + $0x898] sm:$0xff]
    %v936 = vld [vmem:[#allocation6 + $0x8a0] sm:$0xff]
    %v937 = vld [vmem:[#allocation6 + $0x8a8] sm:$0xff]
    %v938 = vld [vmem:[#allocation6 + $0x8b0] sm:$0xff]
    %v939 = vld [vmem:[#allocation6 + $0x8b8] sm:$0xff]
    %v940 = vld [vmem:[#allocation6 + $0x8c0] sm:$0xff]
    %v941 = vld [vmem:[#allocation6 + $0x8c8] sm:$0xff]
    %v942 = vld [vmem:[#allocation6 + $0x8d0] sm:$0xff]
    %v943 = vld [vmem:[#allocation6 + $0x8d8] sm:$0xff]
    %v944 = vld [vmem:[#allocation6 + $0x8e0] sm:$0xff]
    %v945 = vld [vmem:[#allocation6 + $0x8e8] sm:$0xff]
    %v946 = vld [vmem:[#allocation6 + $0x8f0] sm:$0xff]
    %v947 = vld [vmem:[#allocation6 + $0x8f8] sm:$0xff]
    %v948 = vld [vmem:[#allocation6 + $0x900] sm:$0xff]
    %v949 = vld [vmem:[#allocation6 + $0x908] sm:$0xff]
    %v950 = vld [vmem:[#allocation6 + $0x910] sm:$0xff]
    %v951 = vld [vmem:[#allocation6 + $0x918] sm:$0xff]
    %v952 = vld [vmem:[#allocation6 + $0x920] sm:$0xff]
    %v953 = vld [vmem:[#allocation6 + $0x928] sm:$0xff]
    %v954 = vld [vmem:[#allocation6 + $0x930] sm:$0xff]
    %v955 = vld [vmem:[#allocation6 + $0x938] sm:$0xff]
    %v956 = vld [vmem:[#allocation6 + $0x940] sm:$0xff]
    %v957 = vld [vmem:[#allocation6 + $0x948] sm:$0xff]
    %v958 = vld [vmem:[#allocation6 + $0x950] sm:$0xff]
    %v959 = vld [vmem:[#allocation6 + $0x958] sm:$0xff]
    %v960 = vld [vmem:[#allocation6 + $0x960] sm:$0xff]
    %v961 = vld [vmem:[#allocation6 + $0x968] sm:$0xff]
    %v962 = vld [vmem:[#allocation6 + $0x970] sm:$0xff]
    %v963 = vld [vmem:[#allocation6 + $0x978] sm:$0xff]
    %v964 = vld [vmem:[#allocation6 + $0x980] sm:$0xff]
    %v965 = vld [vmem:[#allocation6 + $0x988] sm:$0xff]
    %v966 = vld [vmem:[#allocation6 + $0x990] sm:$0xff]
    %v967 = vld [vmem:[#allocation6 + $0x998] sm:$0xff]
    %v968 = vld [vmem:[#allocation6 + $0x9a0] sm:$0xff]
    %v969 = vld [vmem:[#allocation6 + $0x9a8] sm:$0xff]
    %v970 = vld [vmem:[#allocation6 + $0x9b0] sm:$0xff]
    %v971 = vld [vmem:[#allocation6 + $0x9b8] sm:$0xff]
    %v972 = vld [vmem:[#allocation6 + $0x9c0] sm:$0xff]
    %v973 = vld [vmem:[#allocation6 + $0x9c8] sm:$0xff]
    %v974 = vld [vmem:[#allocation6 + $0x9d0] sm:$0xff]
    %v975 = vld [vmem:[#allocation6 + $0x9d8] sm:$0xff]
    %v976 = vld [vmem:[#allocation6 + $0x9e0] sm:$0xff]
    %v977 = vld [vmem:[#allocation6 + $0x9e8] sm:$0xff]
    %v978 = vld [vmem:[#allocation6 + $0x9f0] sm:$0xff]
    %v979 = vld [vmem:[#allocation6 + $0x9f8] sm:$0xff]
    %v980 = vld [vmem:[#allocation6 + $0xa00] sm:$0xff]
    %v981 = vld [vmem:[#allocation6 + $0xa08] sm:$0xff]
    %v982 = vld [vmem:[#allocation6 + $0xa10] sm:$0xff]
    %v983 = vld [vmem:[#allocation6 + $0xa18] sm:$0xff]
    %v984 = vld [vmem:[#allocation6 + $0xa20] sm:$0xff]
    %v985 = vld [vmem:[#allocation6 + $0xa28] sm:$0xff]
    %v986 = vld [vmem:[#allocation6 + $0xa30] sm:$0xff]
    %v987 = vld [vmem:[#allocation6 + $0xa38] sm:$0xff]
    %v988 = vld [vmem:[#allocation6 + $0xa40] sm:$0xff]
    %v989 = vld [vmem:[#allocation6 + $0xa48] sm:$0xff]
    %v990 = vld [vmem:[#allocation6 + $0xa50] sm:$0xff]
    %v991 = vld [vmem:[#allocation6 + $0xa58] sm:$0xff]
    %v992 = vld [vmem:[#allocation6 + $0xa60] sm:$0xff]
    %v993 = vld [vmem:[#allocation6 + $0xa68] sm:$0xff]
    %v994 = vld [vmem:[#allocation6 + $0xa70] sm:$0xff]
    %v995 = vld [vmem:[#allocation6 + $0xa78] sm:$0xff]
    %v996 = vld [vmem:[#allocation6 + $0xa80] sm:$0xff]
    %v997 = vld [vmem:[#allocation6 + $0xa88] sm:$0xff]
    %v998 = vld [vmem:[#allocation6 + $0xa90] sm:$0xff]
    %v999 = vld [vmem:[#allocation6 + $0xa98] sm:$0xff]
    %v1000 = vld [vmem:[#allocation6 + $0xaa0] sm:$0xff]
    %v1001 = vld [vmem:[#allocation6 + $0xaa8] sm:$0xff]
    %v1002 = vld [vmem:[#allocation6 + $0xab0] sm:$0xff]
    %v1003 = vld [vmem:[#allocation6 + $0xab8] sm:$0xff]
    %v1004 = vld [vmem:[#allocation6 + $0xac0] sm:$0xff]
    %v1005 = vld [vmem:[#allocation6 + $0xac8] sm:$0xff]
    %v1006 = vld [vmem:[#allocation6 + $0xad0] sm:$0xff]
    %v1007 = vld [vmem:[#allocation6 + $0xad8] sm:$0xff]
    %v1008 = vld [vmem:[#allocation6 + $0xae0] sm:$0xff]
    %v1009 = vld [vmem:[#allocation6 + $0xae8] sm:$0xff]
    %v1010 = vld [vmem:[#allocation6 + $0xaf0] sm:$0xff]
    %v1011 = vld [vmem:[#allocation6 + $0xaf8] sm:$0xff]
    %v1012 = vld [vmem:[#allocation6 + $0xb00] sm:$0xff]
    %v1013 = vld [vmem:[#allocation6 + $0xb08] sm:$0xff]
    %v1014 = vld [vmem:[#allocation6 + $0xb10] sm:$0xff]
    %v1015 = vld [vmem:[#allocation6 + $0xb18] sm:$0xff]
    %v1016 = vld [vmem:[#allocation6 + $0xb20] sm:$0xff]
    %v1017 = vld [vmem:[#allocation6 + $0xb28] sm:$0xff]
    %v1018 = vld [vmem:[#allocation6 + $0xb30] sm:$0xff]
    %v1019 = vld [vmem:[#allocation6 + $0xb38] sm:$0xff]
    %v1020 = vld [vmem:[#allocation6 + $0xb40] sm:$0xff]
    %v1021 = vld [vmem:[#allocation6 + $0xb48] sm:$0xff]
    %v1022 = vld [vmem:[#allocation6 + $0xb50] sm:$0xff]
    %v1023 = vld [vmem:[#allocation6 + $0xb58] sm:$0xff]
    %v1024 = vld [vmem:[#allocation6 + $0xb60] sm:$0xff]
    %v1025 = vld [vmem:[#allocation6 + $0xb68] sm:$0xff]
    %v1026 = vld [vmem:[#allocation6 + $0xb70] sm:$0xff]
    %v1027 = vld [vmem:[#allocation6 + $0xb78] sm:$0xff]
    %v1028 = vld [vmem:[#allocation6 + $0xb80] sm:$0xff]
    %v1029 = vld [vmem:[#allocation6 + $0xb88] sm:$0xff]
    %v1030 = vld [vmem:[#allocation6 + $0xb90] sm:$0xff]
    %v1031 = vld [vmem:[#allocation6 + $0xb98] sm:$0xff]
    %v1032 = vld [vmem:[#allocation6 + $0xba0] sm:$0xff]
    %v1033 = vld [vmem:[#allocation6 + $0xba8] sm:$0xff]
    %v1034 = vld [vmem:[#allocation6 + $0xbb0] sm:$0xff]
    %v1035 = vld [vmem:[#allocation6 + $0xbb8] sm:$0xff]
    %v1036 = vld [vmem:[#allocation6 + $0xbc0] sm:$0xff]
    %v1037 = vld [vmem:[#allocation6 + $0xbc8] sm:$0xff]
    %v1038 = vld [vmem:[#allocation6 + $0xbd0] sm:$0xff]
    %v1039 = vld [vmem:[#allocation6 + $0xbd8] sm:$0xff]
    %v1040 = vld [vmem:[#allocation6 + $0xbe0] sm:$0xff]
    %v1041 = vld [vmem:[#allocation6 + $0xbe8] sm:$0xff]
    %v1042 = vld [vmem:[#allocation6 + $0xbf0] sm:$0xff]
    %v1043 = vld [vmem:[#allocation6 + $0xbf8] sm:$0xff]
    %v1044 = vld [vmem:[#allocation6 + $0xc00] sm:$0xff]
    %v1045 = vld [vmem:[#allocation6 + $0xc08] sm:$0xff]
    %v1046 = vld [vmem:[#allocation6 + $0xc10] sm:$0xff]
    %v1047 = vld [vmem:[#allocation6 + $0xc18] sm:$0xff]
    %v1048 = vld [vmem:[#allocation6 + $0xc20] sm:$0xff]
    %v1049 = vld [vmem:[#allocation6 + $0xc28] sm:$0xff]
    %v1050 = vld [vmem:[#allocation6 + $0xc30] sm:$0xff]
    %v1051 = vld [vmem:[#allocation6 + $0xc38] sm:$0xff]
    %v1052 = vld [vmem:[#allocation6 + $0xc40] sm:$0xff]
    %v1053 = vld [vmem:[#allocation6 + $0xc48] sm:$0xff]
    %v1054 = vld [vmem:[#allocation6 + $0xc50] sm:$0xff]
    %v1055 = vld [vmem:[#allocation6 + $0xc58] sm:$0xff]
    %v1056 = vld [vmem:[#allocation6 + $0xc60] sm:$0xff]
    %v1057 = vld [vmem:[#allocation6 + $0xc68] sm:$0xff]
    %v1058 = vld [vmem:[#allocation6 + $0xc70] sm:$0xff]
    %v1059 = vld [vmem:[#allocation6 + $0xc78] sm:$0xff]
    %v1060 = vld [vmem:[#allocation6 + $0xc80] sm:$0xff]
    %v1061 = vld [vmem:[#allocation6 + $0xc88] sm:$0xff]
    %v1062 = vld [vmem:[#allocation6 + $0xc90] sm:$0xff]
    %v1063 = vld [vmem:[#allocation6 + $0xc98] sm:$0xff]
    %v1064 = vld [vmem:[#allocation6 + $0xca0] sm:$0xff]
    %v1065 = vld [vmem:[#allocation6 + $0xca8] sm:$0xff]
    %v1066 = vld [vmem:[#allocation6 + $0xcb0] sm:$0xff]
    %v1067 = vld [vmem:[#allocation6 + $0xcb8] sm:$0xff]
    %v1068 = vld [vmem:[#allocation6 + $0xcc0] sm:$0xff]
    %v1069 = vld [vmem:[#allocation6 + $0xcc8] sm:$0xff]
    %v1070 = vld [vmem:[#allocation6 + $0xcd0] sm:$0xff]
    %v1071 = vld [vmem:[#allocation6 + $0xcd8] sm:$0xff]
    %v1072 = vld [vmem:[#allocation6 + $0xce0] sm:$0xff]
    %v1073 = vld [vmem:[#allocation6 + $0xce8] sm:$0xff]
    %v1074 = vld [vmem:[#allocation6 + $0xcf0] sm:$0xff]
    %v1075 = vld [vmem:[#allocation6 + $0xcf8] sm:$0xff]
    %v1076 = vld [vmem:[#allocation6 + $0xd00] sm:$0xff]
    %v1077 = vld [vmem:[#allocation6 + $0xd08] sm:$0xff]
    %v1078 = vld [vmem:[#allocation6 + $0xd10] sm:$0xff]
    %v1079 = vld [vmem:[#allocation6 + $0xd18] sm:$0xff]
    %v1080 = vld [vmem:[#allocation6 + $0xd20] sm:$0xff]
    %v1081 = vld [vmem:[#allocation6 + $0xd28] sm:$0xff]
    %v1082 = vld [vmem:[#allocation6 + $0xd30] sm:$0xff]
    %v1083 = vld [vmem:[#allocation6 + $0xd38] sm:$0xff]
    %v1084 = vld [vmem:[#allocation6 + $0xd40] sm:$0xff]
    %v1085 = vld [vmem:[#allocation6 + $0xd48] sm:$0xff]
    %v1086 = vld [vmem:[#allocation6 + $0xd50] sm:$0xff]
    %v1087 = vld [vmem:[#allocation6 + $0xd58] sm:$0xff]
    %v1088 = vld [vmem:[#allocation6 + $0xd60] sm:$0xff]
    %v1089 = vld [vmem:[#allocation6 + $0xd68] sm:$0xff]
    %v1090 = vld [vmem:[#allocation6 + $0xd70] sm:$0xff]
    %v1091 = vld [vmem:[#allocation6 + $0xd78] sm:$0xff]
    %v1092 = vld [vmem:[#allocation6 + $0xd80] sm:$0xff]
    %v1093 = vld [vmem:[#allocation6 + $0xd88] sm:$0xff]
    %v1094 = vld [vmem:[#allocation6 + $0xd90] sm:$0xff]
    %v1095 = vld [vmem:[#allocation6 + $0xd98] sm:$0xff]
    %v1096 = vld [vmem:[#allocation6 + $0xda0] sm:$0xff]
    %v1097 = vld [vmem:[#allocation6 + $0xda8] sm:$0xff]
    %v1098 = vld [vmem:[#allocation6 + $0xdb0] sm:$0xff]
    %v1099 = vld [vmem:[#allocation6 + $0xdb8] sm:$0xff]
    %v1100 = vld [vmem:[#allocation6 + $0xdc0] sm:$0xff]
    %v1101 = vld [vmem:[#allocation6 + $0xdc8] sm:$0xff]
    %v1102 = vld [vmem:[#allocation6 + $0xdd0] sm:$0xff]
    %v1103 = vld [vmem:[#allocation6 + $0xdd8] sm:$0xff]
    %v1104 = vld [vmem:[#allocation6 + $0xde0] sm:$0xff]
    %v1105 = vld [vmem:[#allocation6 + $0xde8] sm:$0xff]
    %v1106 = vld [vmem:[#allocation6 + $0xdf0] sm:$0xff]
    %v1107 = vld [vmem:[#allocation6 + $0xdf8] sm:$0xff]
    %v1108 = vld [vmem:[#allocation6 + $0xe00] sm:$0xff]
    %v1109 = vld [vmem:[#allocation6 + $0xe08] sm:$0xff]
    %v1110 = vld [vmem:[#allocation6 + $0xe10] sm:$0xff]
    %v1111 = vld [vmem:[#allocation6 + $0xe18] sm:$0xff]
    %v1112 = vld [vmem:[#allocation6 + $0xe20] sm:$0xff]
    %v1113 = vld [vmem:[#allocation6 + $0xe28] sm:$0xff]
    %v1114 = vld [vmem:[#allocation6 + $0xe30] sm:$0xff]
    %v1115 = vld [vmem:[#allocation6 + $0xe38] sm:$0xff]
    %v1116 = vld [vmem:[#allocation6 + $0xe40] sm:$0xff]
    %v1117 = vld [vmem:[#allocation6 + $0xe48] sm:$0xff]
    %v1118 = vld [vmem:[#allocation6 + $0xe50] sm:$0xff]
    %v1119 = vld [vmem:[#allocation6 + $0xe58] sm:$0xff]
    %v1120 = vld [vmem:[#allocation6 + $0xe60] sm:$0xff]
    %v1121 = vld [vmem:[#allocation6 + $0xe68] sm:$0xff]
    %v1122 = vld [vmem:[#allocation6 + $0xe70] sm:$0xff]
    %v1123 = vld [vmem:[#allocation6 + $0xe78] sm:$0xff]
    %v1124 = vld [vmem:[#allocation6 + $0xe80] sm:$0xff]
    %v1125 = vld [vmem:[#allocation6 + $0xe88] sm:$0xff]
    %v1126 = vld [vmem:[#allocation6 + $0xe90] sm:$0xff]
    %v1127 = vld [vmem:[#allocation6 + $0xe98] sm:$0xff]
    %v1128 = vld [vmem:[#allocation6 + $0xea0] sm:$0xff]
    %v1129 = vld [vmem:[#allocation6 + $0xea8] sm:$0xff]
    %v1130 = vld [vmem:[#allocation6 + $0xeb0] sm:$0xff]
    %v1131 = vld [vmem:[#allocation6 + $0xeb8] sm:$0xff]
    %v1132 = vld [vmem:[#allocation6 + $0xec0] sm:$0xff]
    %v1133 = vld [vmem:[#allocation6 + $0xec8] sm:$0xff]
    %v1134 = vld [vmem:[#allocation6 + $0xed0] sm:$0xff]
    %v1135 = vld [vmem:[#allocation6 + $0xed8] sm:$0xff]
    %v1136 = vld [vmem:[#allocation6 + $0xee0] sm:$0xff]
    %v1137 = vld [vmem:[#allocation6 + $0xee8] sm:$0xff]
    %v1138 = vld [vmem:[#allocation6 + $0xef0] sm:$0xff]
    %v1139 = vld [vmem:[#allocation6 + $0xef8] sm:$0xff]
    %v1140 = vld [vmem:[#allocation6 + $0xf00] sm:$0xff]
    %v1141 = vld [vmem:[#allocation6 + $0xf08] sm:$0xff]
    %v1142 = vld [vmem:[#allocation6 + $0xf10] sm:$0xff]
    %v1143 = vld [vmem:[#allocation6 + $0xf18] sm:$0xff]
    %v1144 = vld [vmem:[#allocation6 + $0xf20] sm:$0xff]
    %v1145 = vld [vmem:[#allocation6 + $0xf28] sm:$0xff]
    %v1146 = vld [vmem:[#allocation6 + $0xf30] sm:$0xff]
    %v1147 = vld [vmem:[#allocation6 + $0xf38] sm:$0xff]
    %v1148 = vld [vmem:[#allocation6 + $0xf40] sm:$0xff]
    %v1149 = vld [vmem:[#allocation6 + $0xf48] sm:$0xff]
    %v1150 = vld [vmem:[#allocation6 + $0xf50] sm:$0xff]
    %v1151 = vld [vmem:[#allocation6 + $0xf58] sm:$0xff]
    %v1152 = vld [vmem:[#allocation6 + $0xf60] sm:$0xff]
    %v1153 = vld [vmem:[#allocation6 + $0xf68] sm:$0xff]
    %v1154 = vld [vmem:[#allocation6 + $0xf70] sm:$0xff]
    %v1155 = vld [vmem:[#allocation6 + $0xf78] sm:$0xff]
    %v1156 = vld [vmem:[#allocation6 + $0xf80] sm:$0xff]
    %v1157 = vld [vmem:[#allocation6 + $0xf88] sm:$0xff]
    %v1158 = vld [vmem:[#allocation6 + $0xf90] sm:$0xff]
    %v1159 = vld [vmem:[#allocation6 + $0xf98] sm:$0xff]
    %v1160 = vld [vmem:[#allocation6 + $0xfa0] sm:$0xff]
    %v1161 = vld [vmem:[#allocation6 + $0xfa8] sm:$0xff]
    %v1162 = vld [vmem:[#allocation6 + $0xfb0] sm:$0xff]
    %v1163 = vld [vmem:[#allocation6 + $0xfb8] sm:$0xff]
    %v1164 = vld [vmem:[#allocation6 + $0xfc0] sm:$0xff]
    %v1165 = vld [vmem:[#allocation6 + $0xfc8] sm:$0xff]
    %v1166 = vld [vmem:[#allocation6 + $0xfd0] sm:$0xff]
    %v1167 = vld [vmem:[#allocation6 + $0xfd8] sm:$0xff]
    %v1168 = vld [vmem:[#allocation6 + $0xfe0] sm:$0xff]
    %v1169 = vld [vmem:[#allocation6 + $0xfe8] sm:$0xff]
    %v1170 = vld [vmem:[#allocation6 + $0xff0] sm:$0xff]
    %v1171 = vld [vmem:[#allocation6 + $0xff8] sm:$0xff]
    %v1172 = vld [vmem:[#allocation7] sm:$0xff]
    %v1174 = vperm.slane %v1172, 0
    %v1175 = vperm.slane %v1172, 1
    %v1176 = vperm.slane %v1172, 2
    %v1177 = vperm.slane %v1172, 3
    %v1178 = vperm.slane %v1172, 4
    %v1179 = vperm.slane %v1172, 5
    %v1180 = vperm.slane %v1172, 6
    %v1181 = vperm.slane %v1172, 7
    %v1702 = vunpack.c.l.b16 %v660
    %v1703 = vunpack.c.h.b16 %v660
    %v1704 = vunpack.c.l.b16 %v661
    %v1705 = vunpack.c.h.b16 %v661
    %v1706 = vunpack.c.l.b16 %v662
    %v1707 = vunpack.c.h.b16 %v662
    %v1708 = vunpack.c.l.b16 %v663
    %v1709 = vunpack.c.h.b16 %v663
    %v1710 = vunpack.c.l.b16 %v664
    %v1711 = vunpack.c.h.b16 %v664
    %v1712 = vunpack.c.l.b16 %v665
    %v1713 = vunpack.c.h.b16 %v665
    %v1714 = vunpack.c.l.b16 %v666
    %v1715 = vunpack.c.h.b16 %v666
    %v1716 = vunpack.c.l.b16 %v667
    %v1717 = vunpack.c.h.b16 %v667
    %v1718 = vunpack.c.l.b16 %v668
    %v1719 = vunpack.c.h.b16 %v668
    %v1720 = vunpack.c.l.b16 %v669
    %v1721 = vunpack.c.h.b16 %v669
    %v1722 = vunpack.c.l.b16 %v670
    %v1723 = vunpack.c.h.b16 %v670
    %v1724 = vunpack.c.l.b16 %v671
    %v1725 = vunpack.c.h.b16 %v671
    %v1726 = vunpack.c.l.b16 %v672
    %v1727 = vunpack.c.h.b16 %v672
    %v1728 = vunpack.c.l.b16 %v673
    %v1729 = vunpack.c.h.b16 %v673
    %v1730 = vunpack.c.l.b16 %v674
    %v1731 = vunpack.c.h.b16 %v674
    %v1732 = vunpack.c.l.b16 %v675
    %v1733 = vunpack.c.h.b16 %v675
    %v1734 = vunpack.c.l.b16 %v676
    %v1735 = vunpack.c.h.b16 %v676
    %v1736 = vunpack.c.l.b16 %v677
    %v1737 = vunpack.c.h.b16 %v677
    %v1738 = vunpack.c.l.b16 %v678
    %v1739 = vunpack.c.h.b16 %v678
    %v1740 = vunpack.c.l.b16 %v679
    %v1741 = vunpack.c.h.b16 %v679
    %v1742 = vunpack.c.l.b16 %v680
    %v1743 = vunpack.c.h.b16 %v680
    %v1744 = vunpack.c.l.b16 %v681
    %v1745 = vunpack.c.h.b16 %v681
    %v1746 = vunpack.c.l.b16 %v682
    %v1747 = vunpack.c.h.b16 %v682
    %v1748 = vunpack.c.l.b16 %v683
    %v1749 = vunpack.c.h.b16 %v683
    %v1750 = vunpack.c.l.b16 %v684
    %v1751 = vunpack.c.h.b16 %v684
    %v1752 = vunpack.c.l.b16 %v685
    %v1753 = vunpack.c.h.b16 %v685
    %v1754 = vunpack.c.l.b16 %v686
    %v1755 = vunpack.c.h.b16 %v686
    %v1756 = vunpack.c.l.b16 %v687
    %v1757 = vunpack.c.h.b16 %v687
    %v1758 = vunpack.c.l.b16 %v688
    %v1759 = vunpack.c.h.b16 %v688
    %v1760 = vunpack.c.l.b16 %v689
    %v1761 = vunpack.c.h.b16 %v689
    %v1762 = vunpack.c.l.b16 %v690
    %v1763 = vunpack.c.h.b16 %v690
    %v1764 = vunpack.c.l.b16 %v691
    %v1765 = vunpack.c.h.b16 %v691
    %v1766 = vunpack.c.l.b16 %v692
    %v1767 = vunpack.c.h.b16 %v692
    %v1768 = vunpack.c.l.b16 %v693
    %v1769 = vunpack.c.h.b16 %v693
    %v1770 = vunpack.c.l.b16 %v694
    %v1771 = vunpack.c.h.b16 %v694
    %v1772 = vunpack.c.l.b16 %v695
    %v1773 = vunpack.c.h.b16 %v695
    %v1774 = vunpack.c.l.b16 %v696
    %v1775 = vunpack.c.h.b16 %v696
    %v1776 = vunpack.c.l.b16 %v697
    %v1777 = vunpack.c.h.b16 %v697
    %v1778 = vunpack.c.l.b16 %v698
    %v1779 = vunpack.c.h.b16 %v698
    %v1780 = vunpack.c.l.b16 %v699
    %v1781 = vunpack.c.h.b16 %v699
    %v1782 = vunpack.c.l.b16 %v700
    %v1783 = vunpack.c.h.b16 %v700
    %v1784 = vunpack.c.l.b16 %v701
    %v1785 = vunpack.c.h.b16 %v701
    %v1786 = vunpack.c.l.b16 %v702
    %v1787 = vunpack.c.h.b16 %v702
    %v1788 = vunpack.c.l.b16 %v703
    %v1789 = vunpack.c.h.b16 %v703
    %v1790 = vunpack.c.l.b16 %v704
    %v1791 = vunpack.c.h.b16 %v704
    %v1792 = vunpack.c.l.b16 %v705
    %v1793 = vunpack.c.h.b16 %v705
    %v1794 = vunpack.c.l.b16 %v706
    %v1795 = vunpack.c.h.b16 %v706
    %v1796 = vunpack.c.l.b16 %v707
    %v1797 = vunpack.c.h.b16 %v707
    %v1798 = vunpack.c.l.b16 %v708
    %v1799 = vunpack.c.h.b16 %v708
    %v1800 = vunpack.c.l.b16 %v709
    %v1801 = vunpack.c.h.b16 %v709
    %v1802 = vunpack.c.l.b16 %v710
    %v1803 = vunpack.c.h.b16 %v710
    %v1804 = vunpack.c.l.b16 %v711
    %v1805 = vunpack.c.h.b16 %v711
    %v1806 = vunpack.c.l.b16 %v712
    %v1807 = vunpack.c.h.b16 %v712
    %v1808 = vunpack.c.l.b16 %v713
    %v1809 = vunpack.c.h.b16 %v713
    %v1810 = vunpack.c.l.b16 %v714
    %v1811 = vunpack.c.h.b16 %v714
    %v1812 = vunpack.c.l.b16 %v715
    %v1813 = vunpack.c.h.b16 %v715
    %v1814 = vunpack.c.l.b16 %v716
    %v1815 = vunpack.c.h.b16 %v716
    %v1816 = vunpack.c.l.b16 %v717
    %v1817 = vunpack.c.h.b16 %v717
    %v1818 = vunpack.c.l.b16 %v718
    %v1819 = vunpack.c.h.b16 %v718
    %v1820 = vunpack.c.l.b16 %v719
    %v1821 = vunpack.c.h.b16 %v719
    %v1822 = vunpack.c.l.b16 %v720
    %v1823 = vunpack.c.h.b16 %v720
    %v1824 = vunpack.c.l.b16 %v721
    %v1825 = vunpack.c.h.b16 %v721
    %v1826 = vunpack.c.l.b16 %v722
    %v1827 = vunpack.c.h.b16 %v722
    %v1828 = vunpack.c.l.b16 %v723
    %v1829 = vunpack.c.h.b16 %v723
    %v1830 = vunpack.c.l.b16 %v724
    %v1831 = vunpack.c.h.b16 %v724
    %v1832 = vunpack.c.l.b16 %v725
    %v1833 = vunpack.c.h.b16 %v725
    %v1834 = vunpack.c.l.b16 %v726
    %v1835 = vunpack.c.h.b16 %v726
    %v1836 = vunpack.c.l.b16 %v727
    %v1837 = vunpack.c.h.b16 %v727
    %v1838 = vunpack.c.l.b16 %v728
    %v1839 = vunpack.c.h.b16 %v728
    %v1840 = vunpack.c.l.b16 %v729
    %v1841 = vunpack.c.h.b16 %v729
    %v1842 = vunpack.c.l.b16 %v730
    %v1843 = vunpack.c.h.b16 %v730
    %v1844 = vunpack.c.l.b16 %v731
    %v1845 = vunpack.c.h.b16 %v731
    %v1846 = vunpack.c.l.b16 %v732
    %v1847 = vunpack.c.h.b16 %v732
    %v1848 = vunpack.c.l.b16 %v733
    %v1849 = vunpack.c.h.b16 %v733
    %v1850 = vunpack.c.l.b16 %v734
    %v1851 = vunpack.c.h.b16 %v734
    %v1852 = vunpack.c.l.b16 %v735
    %v1853 = vunpack.c.h.b16 %v735
    %v1854 = vunpack.c.l.b16 %v736
    %v1855 = vunpack.c.h.b16 %v736
    %v1856 = vunpack.c.l.b16 %v737
    %v1857 = vunpack.c.h.b16 %v737
    %v1858 = vunpack.c.l.b16 %v738
    %v1859 = vunpack.c.h.b16 %v738
    %v1860 = vunpack.c.l.b16 %v739
    %v1861 = vunpack.c.h.b16 %v739
    %v1862 = vunpack.c.l.b16 %v740
    %v1863 = vunpack.c.h.b16 %v740
    %v1864 = vunpack.c.l.b16 %v741
    %v1865 = vunpack.c.h.b16 %v741
    %v1866 = vunpack.c.l.b16 %v742
    %v1867 = vunpack.c.h.b16 %v742
    %v1868 = vunpack.c.l.b16 %v743
    %v1869 = vunpack.c.h.b16 %v743
    %v1870 = vunpack.c.l.b16 %v744
    %v1871 = vunpack.c.h.b16 %v744
    %v1872 = vunpack.c.l.b16 %v745
    %v1873 = vunpack.c.h.b16 %v745
    %v1874 = vunpack.c.l.b16 %v746
    %v1875 = vunpack.c.h.b16 %v746
    %v1876 = vunpack.c.l.b16 %v747
    %v1877 = vunpack.c.h.b16 %v747
    %v1878 = vunpack.c.l.b16 %v748
    %v1879 = vunpack.c.h.b16 %v748
    %v1880 = vunpack.c.l.b16 %v749
    %v1881 = vunpack.c.h.b16 %v749
    %v1882 = vunpack.c.l.b16 %v750
    %v1883 = vunpack.c.h.b16 %v750
    %v1884 = vunpack.c.l.b16 %v751
    %v1885 = vunpack.c.h.b16 %v751
    %v1886 = vunpack.c.l.b16 %v752
    %v1887 = vunpack.c.h.b16 %v752
    %v1888 = vunpack.c.l.b16 %v753
    %v1889 = vunpack.c.h.b16 %v753
    %v1890 = vunpack.c.l.b16 %v754
    %v1891 = vunpack.c.h.b16 %v754
    %v1892 = vunpack.c.l.b16 %v755
    %v1893 = vunpack.c.h.b16 %v755
    %v1894 = vunpack.c.l.b16 %v756
    %v1895 = vunpack.c.h.b16 %v756
    %v1896 = vunpack.c.l.b16 %v757
    %v1897 = vunpack.c.h.b16 %v757
    %v1898 = vunpack.c.l.b16 %v758
    %v1899 = vunpack.c.h.b16 %v758
    %v1900 = vunpack.c.l.b16 %v759
    %v1901 = vunpack.c.h.b16 %v759
    %v1902 = vunpack.c.l.b16 %v760
    %v1903 = vunpack.c.h.b16 %v760
    %v1904 = vunpack.c.l.b16 %v761
    %v1905 = vunpack.c.h.b16 %v761
    %v1906 = vunpack.c.l.b16 %v762
    %v1907 = vunpack.c.h.b16 %v762
    %v1908 = vunpack.c.l.b16 %v763
    %v1909 = vunpack.c.h.b16 %v763
    %v1910 = vunpack.c.l.b16 %v764
    %v1911 = vunpack.c.h.b16 %v764
    %v1912 = vunpack.c.l.b16 %v765
    %v1913 = vunpack.c.h.b16 %v765
    %v1914 = vunpack.c.l.b16 %v766
    %v1915 = vunpack.c.h.b16 %v766
    %v1916 = vunpack.c.l.b16 %v767
    %v1917 = vunpack.c.h.b16 %v767
    %v1918 = vunpack.c.l.b16 %v768
    %v1919 = vunpack.c.h.b16 %v768
    %v1920 = vunpack.c.l.b16 %v769
    %v1921 = vunpack.c.h.b16 %v769
    %v1922 = vunpack.c.l.b16 %v770
    %v1923 = vunpack.c.h.b16 %v770
    %v1924 = vunpack.c.l.b16 %v771
    %v1925 = vunpack.c.h.b16 %v771
    %v1926 = vunpack.c.l.b16 %v772
    %v1927 = vunpack.c.h.b16 %v772
    %v1928 = vunpack.c.l.b16 %v773
    %v1929 = vunpack.c.h.b16 %v773
    %v1930 = vunpack.c.l.b16 %v774
    %v1931 = vunpack.c.h.b16 %v774
    %v1932 = vunpack.c.l.b16 %v775
    %v1933 = vunpack.c.h.b16 %v775
    %v1934 = vunpack.c.l.b16 %v776
    %v1935 = vunpack.c.h.b16 %v776
    %v1936 = vunpack.c.l.b16 %v777
    %v1937 = vunpack.c.h.b16 %v777
    %v1938 = vunpack.c.l.b16 %v778
    %v1939 = vunpack.c.h.b16 %v778
    %v1940 = vunpack.c.l.b16 %v779
    %v1941 = vunpack.c.h.b16 %v779
    %v1942 = vunpack.c.l.b16 %v780
    %v1943 = vunpack.c.h.b16 %v780
    %v1944 = vunpack.c.l.b16 %v781
    %v1945 = vunpack.c.h.b16 %v781
    %v1946 = vunpack.c.l.b16 %v782
    %v1947 = vunpack.c.h.b16 %v782
    %v1948 = vunpack.c.l.b16 %v783
    %v1949 = vunpack.c.h.b16 %v783
    %v1950 = vunpack.c.l.b16 %v784
    %v1951 = vunpack.c.h.b16 %v784
    %v1952 = vunpack.c.l.b16 %v785
    %v1953 = vunpack.c.h.b16 %v785
    %v1954 = vunpack.c.l.b16 %v786
    %v1955 = vunpack.c.h.b16 %v786
    %v1956 = vunpack.c.l.b16 %v787
    %v1957 = vunpack.c.h.b16 %v787
    %v1958 = vunpack.c.l.b16 %v788
    %v1959 = vunpack.c.h.b16 %v788
    %v1960 = vunpack.c.l.b16 %v789
    %v1961 = vunpack.c.h.b16 %v789
    %v1962 = vunpack.c.l.b16 %v790
    %v1963 = vunpack.c.h.b16 %v790
    %v1964 = vunpack.c.l.b16 %v791
    %v1965 = vunpack.c.h.b16 %v791
    %v1966 = vunpack.c.l.b16 %v792
    %v1967 = vunpack.c.h.b16 %v792
    %v1968 = vunpack.c.l.b16 %v793
    %v1969 = vunpack.c.h.b16 %v793
    %v1970 = vunpack.c.l.b16 %v794
    %v1971 = vunpack.c.h.b16 %v794
    %v1972 = vunpack.c.l.b16 %v795
    %v1973 = vunpack.c.h.b16 %v795
    %v1974 = vunpack.c.l.b16 %v796
    %v1975 = vunpack.c.h.b16 %v796
    %v1976 = vunpack.c.l.b16 %v797
    %v1977 = vunpack.c.h.b16 %v797
    %v1978 = vunpack.c.l.b16 %v798
    %v1979 = vunpack.c.h.b16 %v798
    %v1980 = vunpack.c.l.b16 %v799
    %v1981 = vunpack.c.h.b16 %v799
    %v1982 = vunpack.c.l.b16 %v800
    %v1983 = vunpack.c.h.b16 %v800
    %v1984 = vunpack.c.l.b16 %v801
    %v1985 = vunpack.c.h.b16 %v801
    %v1986 = vunpack.c.l.b16 %v802
    %v1987 = vunpack.c.h.b16 %v802
    %v1988 = vunpack.c.l.b16 %v803
    %v1989 = vunpack.c.h.b16 %v803
    %v1990 = vunpack.c.l.b16 %v804
    %v1991 = vunpack.c.h.b16 %v804
    %v1992 = vunpack.c.l.b16 %v805
    %v1993 = vunpack.c.h.b16 %v805
    %v1994 = vunpack.c.l.b16 %v806
    %v1995 = vunpack.c.h.b16 %v806
    %v1996 = vunpack.c.l.b16 %v807
    %v1997 = vunpack.c.h.b16 %v807
    %v1998 = vunpack.c.l.b16 %v808
    %v1999 = vunpack.c.h.b16 %v808
    %v2000 = vunpack.c.l.b16 %v809
    %v2001 = vunpack.c.h.b16 %v809
    %v2002 = vunpack.c.l.b16 %v810
    %v2003 = vunpack.c.h.b16 %v810
    %v2004 = vunpack.c.l.b16 %v811
    %v2005 = vunpack.c.h.b16 %v811
    %v2006 = vunpack.c.l.b16 %v812
    %v2007 = vunpack.c.h.b16 %v812
    %v2008 = vunpack.c.l.b16 %v813
    %v2009 = vunpack.c.h.b16 %v813
    %v2010 = vunpack.c.l.b16 %v814
    %v2011 = vunpack.c.h.b16 %v814
    %v2012 = vunpack.c.l.b16 %v815
    %v2013 = vunpack.c.h.b16 %v815
    %v2014 = vunpack.c.l.b16 %v816
    %v2015 = vunpack.c.h.b16 %v816
    %v2016 = vunpack.c.l.b16 %v817
    %v2017 = vunpack.c.h.b16 %v817
    %v2018 = vunpack.c.l.b16 %v818
    %v2019 = vunpack.c.h.b16 %v818
    %v2020 = vunpack.c.l.b16 %v819
    %v2021 = vunpack.c.h.b16 %v819
    %v2022 = vunpack.c.l.b16 %v820
    %v2023 = vunpack.c.h.b16 %v820
    %v2024 = vunpack.c.l.b16 %v821
    %v2025 = vunpack.c.h.b16 %v821
    %v2026 = vunpack.c.l.b16 %v822
    %v2027 = vunpack.c.h.b16 %v822
    %v2028 = vunpack.c.l.b16 %v823
    %v2029 = vunpack.c.h.b16 %v823
    %v2030 = vunpack.c.l.b16 %v824
    %v2031 = vunpack.c.h.b16 %v824
    %v2032 = vunpack.c.l.b16 %v825
    %v2033 = vunpack.c.h.b16 %v825
    %v2034 = vunpack.c.l.b16 %v826
    %v2035 = vunpack.c.h.b16 %v826
    %v2036 = vunpack.c.l.b16 %v827
    %v2037 = vunpack.c.h.b16 %v827
    %v2038 = vunpack.c.l.b16 %v828
    %v2039 = vunpack.c.h.b16 %v828
    %v2040 = vunpack.c.l.b16 %v829
    %v2041 = vunpack.c.h.b16 %v829
    %v2042 = vunpack.c.l.b16 %v830
    %v2043 = vunpack.c.h.b16 %v830
    %v2044 = vunpack.c.l.b16 %v831
    %v2045 = vunpack.c.h.b16 %v831
    %v2046 = vunpack.c.l.b16 %v832
    %v2047 = vunpack.c.h.b16 %v832
    %v2048 = vunpack.c.l.b16 %v833
    %v2049 = vunpack.c.h.b16 %v833
    %v2050 = vunpack.c.l.b16 %v834
    %v2051 = vunpack.c.h.b16 %v834
    %v2052 = vunpack.c.l.b16 %v835
    %v2053 = vunpack.c.h.b16 %v835
    %v2054 = vunpack.c.l.b16 %v836
    %v2055 = vunpack.c.h.b16 %v836
    %v2056 = vunpack.c.l.b16 %v837
    %v2057 = vunpack.c.h.b16 %v837
    %v2058 = vunpack.c.l.b16 %v838
    %v2059 = vunpack.c.h.b16 %v838
    %v2060 = vunpack.c.l.b16 %v839
    %v2061 = vunpack.c.h.b16 %v839
    %v2062 = vunpack.c.l.b16 %v840
    %v2063 = vunpack.c.h.b16 %v840
    %v2064 = vunpack.c.l.b16 %v841
    %v2065 = vunpack.c.h.b16 %v841
    %v2066 = vunpack.c.l.b16 %v842
    %v2067 = vunpack.c.h.b16 %v842
    %v2068 = vunpack.c.l.b16 %v843
    %v2069 = vunpack.c.h.b16 %v843
    %v2070 = vunpack.c.l.b16 %v844
    %v2071 = vunpack.c.h.b16 %v844
    %v2072 = vunpack.c.l.b16 %v845
    %v2073 = vunpack.c.h.b16 %v845
    %v2074 = vunpack.c.l.b16 %v846
    %v2075 = vunpack.c.h.b16 %v846
    %v2076 = vunpack.c.l.b16 %v847
    %v2077 = vunpack.c.h.b16 %v847
    %v2078 = vunpack.c.l.b16 %v848
    %v2079 = vunpack.c.h.b16 %v848
    %v2080 = vunpack.c.l.b16 %v849
    %v2081 = vunpack.c.h.b16 %v849
    %v2082 = vunpack.c.l.b16 %v850
    %v2083 = vunpack.c.h.b16 %v850
    %v2084 = vunpack.c.l.b16 %v851
    %v2085 = vunpack.c.h.b16 %v851
    %v2086 = vunpack.c.l.b16 %v852
    %v2087 = vunpack.c.h.b16 %v852
    %v2088 = vunpack.c.l.b16 %v853
    %v2089 = vunpack.c.h.b16 %v853
    %v2090 = vunpack.c.l.b16 %v854
    %v2091 = vunpack.c.h.b16 %v854
    %v2092 = vunpack.c.l.b16 %v855
    %v2093 = vunpack.c.h.b16 %v855
    %v2094 = vunpack.c.l.b16 %v856
    %v2095 = vunpack.c.h.b16 %v856
    %v2096 = vunpack.c.l.b16 %v857
    %v2097 = vunpack.c.h.b16 %v857
    %v2098 = vunpack.c.l.b16 %v858
    %v2099 = vunpack.c.h.b16 %v858
    %v2100 = vunpack.c.l.b16 %v859
    %v2101 = vunpack.c.h.b16 %v859
    %v2102 = vunpack.c.l.b16 %v860
    %v2103 = vunpack.c.h.b16 %v860
    %v2104 = vunpack.c.l.b16 %v861
    %v2105 = vunpack.c.h.b16 %v861
    %v2106 = vunpack.c.l.b16 %v862
    %v2107 = vunpack.c.h.b16 %v862
    %v2108 = vunpack.c.l.b16 %v863
    %v2109 = vunpack.c.h.b16 %v863
    %v2110 = vunpack.c.l.b16 %v864
    %v2111 = vunpack.c.h.b16 %v864
    %v2112 = vunpack.c.l.b16 %v865
    %v2113 = vunpack.c.h.b16 %v865
    %v2114 = vunpack.c.l.b16 %v866
    %v2115 = vunpack.c.h.b16 %v866
    %v2116 = vunpack.c.l.b16 %v867
    %v2117 = vunpack.c.h.b16 %v867
    %v2118 = vunpack.c.l.b16 %v868
    %v2119 = vunpack.c.h.b16 %v868
    %v2120 = vunpack.c.l.b16 %v869
    %v2121 = vunpack.c.h.b16 %v869
    %v2122 = vunpack.c.l.b16 %v870
    %v2123 = vunpack.c.h.b16 %v870
    %v2124 = vunpack.c.l.b16 %v871
    %v2125 = vunpack.c.h.b16 %v871
    %v2126 = vunpack.c.l.b16 %v872
    %v2127 = vunpack.c.h.b16 %v872
    %v2128 = vunpack.c.l.b16 %v873
    %v2129 = vunpack.c.h.b16 %v873
    %v2130 = vunpack.c.l.b16 %v874
    %v2131 = vunpack.c.h.b16 %v874
    %v2132 = vunpack.c.l.b16 %v875
    %v2133 = vunpack.c.h.b16 %v875
    %v2134 = vunpack.c.l.b16 %v876
    %v2135 = vunpack.c.h.b16 %v876
    %v2136 = vunpack.c.l.b16 %v877
    %v2137 = vunpack.c.h.b16 %v877
    %v2138 = vunpack.c.l.b16 %v878
    %v2139 = vunpack.c.h.b16 %v878
    %v2140 = vunpack.c.l.b16 %v879
    %v2141 = vunpack.c.h.b16 %v879
    %v2142 = vunpack.c.l.b16 %v880
    %v2143 = vunpack.c.h.b16 %v880
    %v2144 = vunpack.c.l.b16 %v881
    %v2145 = vunpack.c.h.b16 %v881
    %v2146 = vunpack.c.l.b16 %v882
    %v2147 = vunpack.c.h.b16 %v882
    %v2148 = vunpack.c.l.b16 %v883
    %v2149 = vunpack.c.h.b16 %v883
    %v2150 = vunpack.c.l.b16 %v884
    %v2151 = vunpack.c.h.b16 %v884
    %v2152 = vunpack.c.l.b16 %v885
    %v2153 = vunpack.c.h.b16 %v885
    %v2154 = vunpack.c.l.b16 %v886
    %v2155 = vunpack.c.h.b16 %v886
    %v2156 = vunpack.c.l.b16 %v887
    %v2157 = vunpack.c.h.b16 %v887
    %v2158 = vunpack.c.l.b16 %v888
    %v2159 = vunpack.c.h.b16 %v888
    %v2160 = vunpack.c.l.b16 %v889
    %v2161 = vunpack.c.h.b16 %v889
    %v2162 = vunpack.c.l.b16 %v890
    %v2163 = vunpack.c.h.b16 %v890
    %v2164 = vunpack.c.l.b16 %v891
    %v2165 = vunpack.c.h.b16 %v891
    %v2166 = vunpack.c.l.b16 %v892
    %v2167 = vunpack.c.h.b16 %v892
    %v2168 = vunpack.c.l.b16 %v893
    %v2169 = vunpack.c.h.b16 %v893
    %v2170 = vunpack.c.l.b16 %v894
    %v2171 = vunpack.c.h.b16 %v894
    %v2172 = vunpack.c.l.b16 %v895
    %v2173 = vunpack.c.h.b16 %v895
    %v2174 = vunpack.c.l.b16 %v896
    %v2175 = vunpack.c.h.b16 %v896
    %v2176 = vunpack.c.l.b16 %v897
    %v2177 = vunpack.c.h.b16 %v897
    %v2178 = vunpack.c.l.b16 %v898
    %v2179 = vunpack.c.h.b16 %v898
    %v2180 = vunpack.c.l.b16 %v899
    %v2181 = vunpack.c.h.b16 %v899
    %v2182 = vunpack.c.l.b16 %v900
    %v2183 = vunpack.c.h.b16 %v900
    %v2184 = vunpack.c.l.b16 %v901
    %v2185 = vunpack.c.h.b16 %v901
    %v2186 = vunpack.c.l.b16 %v902
    %v2187 = vunpack.c.h.b16 %v902
    %v2188 = vunpack.c.l.b16 %v903
    %v2189 = vunpack.c.h.b16 %v903
    %v2190 = vunpack.c.l.b16 %v904
    %v2191 = vunpack.c.h.b16 %v904
    %v2192 = vunpack.c.l.b16 %v905
    %v2193 = vunpack.c.h.b16 %v905
    %v2194 = vunpack.c.l.b16 %v906
    %v2195 = vunpack.c.h.b16 %v906
    %v2196 = vunpack.c.l.b16 %v907
    %v2197 = vunpack.c.h.b16 %v907
    %v2198 = vunpack.c.l.b16 %v908
    %v2199 = vunpack.c.h.b16 %v908
    %v2200 = vunpack.c.l.b16 %v909
    %v2201 = vunpack.c.h.b16 %v909
    %v2202 = vunpack.c.l.b16 %v910
    %v2203 = vunpack.c.h.b16 %v910
    %v2204 = vunpack.c.l.b16 %v911
    %v2205 = vunpack.c.h.b16 %v911
    %v2206 = vunpack.c.l.b16 %v912
    %v2207 = vunpack.c.h.b16 %v912
    %v2208 = vunpack.c.l.b16 %v913
    %v2209 = vunpack.c.h.b16 %v913
    %v2210 = vunpack.c.l.b16 %v914
    %v2211 = vunpack.c.h.b16 %v914
    %v2212 = vunpack.c.l.b16 %v915
    %v2213 = vunpack.c.h.b16 %v915
    %v2214 = vunpack.c.l.b16 %v916
    %v2215 = vunpack.c.h.b16 %v916
    %v2216 = vunpack.c.l.b16 %v917
    %v2217 = vunpack.c.h.b16 %v917
    %v2218 = vunpack.c.l.b16 %v918
    %v2219 = vunpack.c.h.b16 %v918
    %v2220 = vunpack.c.l.b16 %v919
    %v2221 = vunpack.c.h.b16 %v919
    %v2222 = vunpack.c.l.b16 %v920
    %v2223 = vunpack.c.h.b16 %v920
    %v2224 = vunpack.c.l.b16 %v921
    %v2225 = vunpack.c.h.b16 %v921
    %v2226 = vunpack.c.l.b16 %v922
    %v2227 = vunpack.c.h.b16 %v922
    %v2228 = vunpack.c.l.b16 %v923
    %v2229 = vunpack.c.h.b16 %v923
    %v2230 = vunpack.c.l.b16 %v924
    %v2231 = vunpack.c.h.b16 %v924
    %v2232 = vunpack.c.l.b16 %v925
    %v2233 = vunpack.c.h.b16 %v925
    %v2234 = vunpack.c.l.b16 %v926
    %v2235 = vunpack.c.h.b16 %v926
    %v2236 = vunpack.c.l.b16 %v927
    %v2237 = vunpack.c.h.b16 %v927
    %v2238 = vunpack.c.l.b16 %v928
    %v2239 = vunpack.c.h.b16 %v928
    %v2240 = vunpack.c.l.b16 %v929
    %v2241 = vunpack.c.h.b16 %v929
    %v2242 = vunpack.c.l.b16 %v930
    %v2243 = vunpack.c.h.b16 %v930
    %v2244 = vunpack.c.l.b16 %v931
    %v2245 = vunpack.c.h.b16 %v931
    %v2246 = vunpack.c.l.b16 %v932
    %v2247 = vunpack.c.h.b16 %v932
    %v2248 = vunpack.c.l.b16 %v933
    %v2249 = vunpack.c.h.b16 %v933
    %v2250 = vunpack.c.l.b16 %v934
    %v2251 = vunpack.c.h.b16 %v934
    %v2252 = vunpack.c.l.b16 %v935
    %v2253 = vunpack.c.h.b16 %v935
    %v2254 = vunpack.c.l.b16 %v936
    %v2255 = vunpack.c.h.b16 %v936
    %v2256 = vunpack.c.l.b16 %v937
    %v2257 = vunpack.c.h.b16 %v937
    %v2258 = vunpack.c.l.b16 %v938
    %v2259 = vunpack.c.h.b16 %v938
    %v2260 = vunpack.c.l.b16 %v939
    %v2261 = vunpack.c.h.b16 %v939
    %v2262 = vunpack.c.l.b16 %v940
    %v2263 = vunpack.c.h.b16 %v940
    %v2264 = vunpack.c.l.b16 %v941
    %v2265 = vunpack.c.h.b16 %v941
    %v2266 = vunpack.c.l.b16 %v942
    %v2267 = vunpack.c.h.b16 %v942
    %v2268 = vunpack.c.l.b16 %v943
    %v2269 = vunpack.c.h.b16 %v943
    %v2270 = vunpack.c.l.b16 %v944
    %v2271 = vunpack.c.h.b16 %v944
    %v2272 = vunpack.c.l.b16 %v945
    %v2273 = vunpack.c.h.b16 %v945
    %v2274 = vunpack.c.l.b16 %v946
    %v2275 = vunpack.c.h.b16 %v946
    %v2276 = vunpack.c.l.b16 %v947
    %v2277 = vunpack.c.h.b16 %v947
    %v2278 = vunpack.c.l.b16 %v948
    %v2279 = vunpack.c.h.b16 %v948
    %v2280 = vunpack.c.l.b16 %v949
    %v2281 = vunpack.c.h.b16 %v949
    %v2282 = vunpack.c.l.b16 %v950
    %v2283 = vunpack.c.h.b16 %v950
    %v2284 = vunpack.c.l.b16 %v951
    %v2285 = vunpack.c.h.b16 %v951
    %v2286 = vunpack.c.l.b16 %v952
    %v2287 = vunpack.c.h.b16 %v952
    %v2288 = vunpack.c.l.b16 %v953
    %v2289 = vunpack.c.h.b16 %v953
    %v2290 = vunpack.c.l.b16 %v954
    %v2291 = vunpack.c.h.b16 %v954
    %v2292 = vunpack.c.l.b16 %v955
    %v2293 = vunpack.c.h.b16 %v955
    %v2294 = vunpack.c.l.b16 %v956
    %v2295 = vunpack.c.h.b16 %v956
    %v2296 = vunpack.c.l.b16 %v957
    %v2297 = vunpack.c.h.b16 %v957
    %v2298 = vunpack.c.l.b16 %v958
    %v2299 = vunpack.c.h.b16 %v958
    %v2300 = vunpack.c.l.b16 %v959
    %v2301 = vunpack.c.h.b16 %v959
    %v2302 = vunpack.c.l.b16 %v960
    %v2303 = vunpack.c.h.b16 %v960
    %v2304 = vunpack.c.l.b16 %v961
    %v2305 = vunpack.c.h.b16 %v961
    %v2306 = vunpack.c.l.b16 %v962
    %v2307 = vunpack.c.h.b16 %v962
    %v2308 = vunpack.c.l.b16 %v963
    %v2309 = vunpack.c.h.b16 %v963
    %v2310 = vunpack.c.l.b16 %v964
    %v2311 = vunpack.c.h.b16 %v964
    %v2312 = vunpack.c.l.b16 %v965
    %v2313 = vunpack.c.h.b16 %v965
    %v2314 = vunpack.c.l.b16 %v966
    %v2315 = vunpack.c.h.b16 %v966
    %v2316 = vunpack.c.l.b16 %v967
    %v2317 = vunpack.c.h.b16 %v967
    %v2318 = vunpack.c.l.b16 %v968
    %v2319 = vunpack.c.h.b16 %v968
    %v2320 = vunpack.c.l.b16 %v969
    %v2321 = vunpack.c.h.b16 %v969
    %v2322 = vunpack.c.l.b16 %v970
    %v2323 = vunpack.c.h.b16 %v970
    %v2324 = vunpack.c.l.b16 %v971
    %v2325 = vunpack.c.h.b16 %v971
    %v2326 = vunpack.c.l.b16 %v972
    %v2327 = vunpack.c.h.b16 %v972
    %v2328 = vunpack.c.l.b16 %v973
    %v2329 = vunpack.c.h.b16 %v973
    %v2330 = vunpack.c.l.b16 %v974
    %v2331 = vunpack.c.h.b16 %v974
    %v2332 = vunpack.c.l.b16 %v975
    %v2333 = vunpack.c.h.b16 %v975
    %v2334 = vunpack.c.l.b16 %v976
    %v2335 = vunpack.c.h.b16 %v976
    %v2336 = vunpack.c.l.b16 %v977
    %v2337 = vunpack.c.h.b16 %v977
    %v2338 = vunpack.c.l.b16 %v978
    %v2339 = vunpack.c.h.b16 %v978
    %v2340 = vunpack.c.l.b16 %v979
    %v2341 = vunpack.c.h.b16 %v979
    %v2342 = vunpack.c.l.b16 %v980
    %v2343 = vunpack.c.h.b16 %v980
    %v2344 = vunpack.c.l.b16 %v981
    %v2345 = vunpack.c.h.b16 %v981
    %v2346 = vunpack.c.l.b16 %v982
    %v2347 = vunpack.c.h.b16 %v982
    %v2348 = vunpack.c.l.b16 %v983
    %v2349 = vunpack.c.h.b16 %v983
    %v2350 = vunpack.c.l.b16 %v984
    %v2351 = vunpack.c.h.b16 %v984
    %v2352 = vunpack.c.l.b16 %v985
    %v2353 = vunpack.c.h.b16 %v985
    %v2354 = vunpack.c.l.b16 %v986
    %v2355 = vunpack.c.h.b16 %v986
    %v2356 = vunpack.c.l.b16 %v987
    %v2357 = vunpack.c.h.b16 %v987
    %v2358 = vunpack.c.l.b16 %v988
    %v2359 = vunpack.c.h.b16 %v988
    %v2360 = vunpack.c.l.b16 %v989
    %v2361 = vunpack.c.h.b16 %v989
    %v2362 = vunpack.c.l.b16 %v990
    %v2363 = vunpack.c.h.b16 %v990
    %v2364 = vunpack.c.l.b16 %v991
    %v2365 = vunpack.c.h.b16 %v991
    %v2366 = vunpack.c.l.b16 %v992
    %v2367 = vunpack.c.h.b16 %v992
    %v2368 = vunpack.c.l.b16 %v993
    %v2369 = vunpack.c.h.b16 %v993
    %v2370 = vunpack.c.l.b16 %v994
    %v2371 = vunpack.c.h.b16 %v994
    %v2372 = vunpack.c.l.b16 %v995
    %v2373 = vunpack.c.h.b16 %v995
    %v2374 = vunpack.c.l.b16 %v996
    %v2375 = vunpack.c.h.b16 %v996
    %v2376 = vunpack.c.l.b16 %v997
    %v2377 = vunpack.c.h.b16 %v997
    %v2378 = vunpack.c.l.b16 %v998
    %v2379 = vunpack.c.h.b16 %v998
    %v2380 = vunpack.c.l.b16 %v999
    %v2381 = vunpack.c.h.b16 %v999
    %v2382 = vunpack.c.l.b16 %v1000
    %v2383 = vunpack.c.h.b16 %v1000
    %v2384 = vunpack.c.l.b16 %v1001
    %v2385 = vunpack.c.h.b16 %v1001
    %v2386 = vunpack.c.l.b16 %v1002
    %v2387 = vunpack.c.h.b16 %v1002
    %v2388 = vunpack.c.l.b16 %v1003
    %v2389 = vunpack.c.h.b16 %v1003
    %v2390 = vunpack.c.l.b16 %v1004
    %v2391 = vunpack.c.h.b16 %v1004
    %v2392 = vunpack.c.l.b16 %v1005
    %v2393 = vunpack.c.h.b16 %v1005
    %v2394 = vunpack.c.l.b16 %v1006
    %v2395 = vunpack.c.h.b16 %v1006
    %v2396 = vunpack.c.l.b16 %v1007
    %v2397 = vunpack.c.h.b16 %v1007
    %v2398 = vunpack.c.l.b16 %v1008
    %v2399 = vunpack.c.h.b16 %v1008
    %v2400 = vunpack.c.l.b16 %v1009
    %v2401 = vunpack.c.h.b16 %v1009
    %v2402 = vunpack.c.l.b16 %v1010
    %v2403 = vunpack.c.h.b16 %v1010
    %v2404 = vunpack.c.l.b16 %v1011
    %v2405 = vunpack.c.h.b16 %v1011
    %v2406 = vunpack.c.l.b16 %v1012
    %v2407 = vunpack.c.h.b16 %v1012
    %v2408 = vunpack.c.l.b16 %v1013
    %v2409 = vunpack.c.h.b16 %v1013
    %v2410 = vunpack.c.l.b16 %v1014
    %v2411 = vunpack.c.h.b16 %v1014
    %v2412 = vunpack.c.l.b16 %v1015
    %v2413 = vunpack.c.h.b16 %v1015
    %v2414 = vunpack.c.l.b16 %v1016
    %v2415 = vunpack.c.h.b16 %v1016
    %v2416 = vunpack.c.l.b16 %v1017
    %v2417 = vunpack.c.h.b16 %v1017
    %v2418 = vunpack.c.l.b16 %v1018
    %v2419 = vunpack.c.h.b16 %v1018
    %v2420 = vunpack.c.l.b16 %v1019
    %v2421 = vunpack.c.h.b16 %v1019
    %v2422 = vunpack.c.l.b16 %v1020
    %v2423 = vunpack.c.h.b16 %v1020
    %v2424 = vunpack.c.l.b16 %v1021
    %v2425 = vunpack.c.h.b16 %v1021
    %v2426 = vunpack.c.l.b16 %v1022
    %v2427 = vunpack.c.h.b16 %v1022
    %v2428 = vunpack.c.l.b16 %v1023
    %v2429 = vunpack.c.h.b16 %v1023
    %v2430 = vunpack.c.l.b16 %v1024
    %v2431 = vunpack.c.h.b16 %v1024
    %v2432 = vunpack.c.l.b16 %v1025
    %v2433 = vunpack.c.h.b16 %v1025
    %v2434 = vunpack.c.l.b16 %v1026
    %v2435 = vunpack.c.h.b16 %v1026
    %v2436 = vunpack.c.l.b16 %v1027
    %v2437 = vunpack.c.h.b16 %v1027
    %v2438 = vunpack.c.l.b16 %v1028
    %v2439 = vunpack.c.h.b16 %v1028
    %v2440 = vunpack.c.l.b16 %v1029
    %v2441 = vunpack.c.h.b16 %v1029
    %v2442 = vunpack.c.l.b16 %v1030
    %v2443 = vunpack.c.h.b16 %v1030
    %v2444 = vunpack.c.l.b16 %v1031
    %v2445 = vunpack.c.h.b16 %v1031
    %v2446 = vunpack.c.l.b16 %v1032
    %v2447 = vunpack.c.h.b16 %v1032
    %v2448 = vunpack.c.l.b16 %v1033
    %v2449 = vunpack.c.h.b16 %v1033
    %v2450 = vunpack.c.l.b16 %v1034
    %v2451 = vunpack.c.h.b16 %v1034
    %v2452 = vunpack.c.l.b16 %v1035
    %v2453 = vunpack.c.h.b16 %v1035
    %v2454 = vunpack.c.l.b16 %v1036
    %v2455 = vunpack.c.h.b16 %v1036
    %v2456 = vunpack.c.l.b16 %v1037
    %v2457 = vunpack.c.h.b16 %v1037
    %v2458 = vunpack.c.l.b16 %v1038
    %v2459 = vunpack.c.h.b16 %v1038
    %v2460 = vunpack.c.l.b16 %v1039
    %v2461 = vunpack.c.h.b16 %v1039
    %v2462 = vunpack.c.l.b16 %v1040
    %v2463 = vunpack.c.h.b16 %v1040
    %v2464 = vunpack.c.l.b16 %v1041
    %v2465 = vunpack.c.h.b16 %v1041
    %v2466 = vunpack.c.l.b16 %v1042
    %v2467 = vunpack.c.h.b16 %v1042
    %v2468 = vunpack.c.l.b16 %v1043
    %v2469 = vunpack.c.h.b16 %v1043
    %v2470 = vunpack.c.l.b16 %v1044
    %v2471 = vunpack.c.h.b16 %v1044
    %v2472 = vunpack.c.l.b16 %v1045
    %v2473 = vunpack.c.h.b16 %v1045
    %v2474 = vunpack.c.l.b16 %v1046
    %v2475 = vunpack.c.h.b16 %v1046
    %v2476 = vunpack.c.l.b16 %v1047
    %v2477 = vunpack.c.h.b16 %v1047
    %v2478 = vunpack.c.l.b16 %v1048
    %v2479 = vunpack.c.h.b16 %v1048
    %v2480 = vunpack.c.l.b16 %v1049
    %v2481 = vunpack.c.h.b16 %v1049
    %v2482 = vunpack.c.l.b16 %v1050
    %v2483 = vunpack.c.h.b16 %v1050
    %v2484 = vunpack.c.l.b16 %v1051
    %v2485 = vunpack.c.h.b16 %v1051
    %v2486 = vunpack.c.l.b16 %v1052
    %v2487 = vunpack.c.h.b16 %v1052
    %v2488 = vunpack.c.l.b16 %v1053
    %v2489 = vunpack.c.h.b16 %v1053
    %v2490 = vunpack.c.l.b16 %v1054
    %v2491 = vunpack.c.h.b16 %v1054
    %v2492 = vunpack.c.l.b16 %v1055
    %v2493 = vunpack.c.h.b16 %v1055
    %v2494 = vunpack.c.l.b16 %v1056
    %v2495 = vunpack.c.h.b16 %v1056
    %v2496 = vunpack.c.l.b16 %v1057
    %v2497 = vunpack.c.h.b16 %v1057
    %v2498 = vunpack.c.l.b16 %v1058
    %v2499 = vunpack.c.h.b16 %v1058
    %v2500 = vunpack.c.l.b16 %v1059
    %v2501 = vunpack.c.h.b16 %v1059
    %v2502 = vunpack.c.l.b16 %v1060
    %v2503 = vunpack.c.h.b16 %v1060
    %v2504 = vunpack.c.l.b16 %v1061
    %v2505 = vunpack.c.h.b16 %v1061
    %v2506 = vunpack.c.l.b16 %v1062
    %v2507 = vunpack.c.h.b16 %v1062
    %v2508 = vunpack.c.l.b16 %v1063
    %v2509 = vunpack.c.h.b16 %v1063
    %v2510 = vunpack.c.l.b16 %v1064
    %v2511 = vunpack.c.h.b16 %v1064
    %v2512 = vunpack.c.l.b16 %v1065
    %v2513 = vunpack.c.h.b16 %v1065
    %v2514 = vunpack.c.l.b16 %v1066
    %v2515 = vunpack.c.h.b16 %v1066
    %v2516 = vunpack.c.l.b16 %v1067
    %v2517 = vunpack.c.h.b16 %v1067
    %v2518 = vunpack.c.l.b16 %v1068
    %v2519 = vunpack.c.h.b16 %v1068
    %v2520 = vunpack.c.l.b16 %v1069
    %v2521 = vunpack.c.h.b16 %v1069
    %v2522 = vunpack.c.l.b16 %v1070
    %v2523 = vunpack.c.h.b16 %v1070
    %v2524 = vunpack.c.l.b16 %v1071
    %v2525 = vunpack.c.h.b16 %v1071
    %v2526 = vunpack.c.l.b16 %v1072
    %v2527 = vunpack.c.h.b16 %v1072
    %v2528 = vunpack.c.l.b16 %v1073
    %v2529 = vunpack.c.h.b16 %v1073
    %v2530 = vunpack.c.l.b16 %v1074
    %v2531 = vunpack.c.h.b16 %v1074
    %v2532 = vunpack.c.l.b16 %v1075
    %v2533 = vunpack.c.h.b16 %v1075
    %v2534 = vunpack.c.l.b16 %v1076
    %v2535 = vunpack.c.h.b16 %v1076
    %v2536 = vunpack.c.l.b16 %v1077
    %v2537 = vunpack.c.h.b16 %v1077
    %v2538 = vunpack.c.l.b16 %v1078
    %v2539 = vunpack.c.h.b16 %v1078
    %v2540 = vunpack.c.l.b16 %v1079
    %v2541 = vunpack.c.h.b16 %v1079
    %v2542 = vunpack.c.l.b16 %v1080
    %v2543 = vunpack.c.h.b16 %v1080
    %v2544 = vunpack.c.l.b16 %v1081
    %v2545 = vunpack.c.h.b16 %v1081
    %v2546 = vunpack.c.l.b16 %v1082
    %v2547 = vunpack.c.h.b16 %v1082
    %v2548 = vunpack.c.l.b16 %v1083
    %v2549 = vunpack.c.h.b16 %v1083
    %v2550 = vunpack.c.l.b16 %v1084
    %v2551 = vunpack.c.h.b16 %v1084
    %v2552 = vunpack.c.l.b16 %v1085
    %v2553 = vunpack.c.h.b16 %v1085
    %v2554 = vunpack.c.l.b16 %v1086
    %v2555 = vunpack.c.h.b16 %v1086
    %v2556 = vunpack.c.l.b16 %v1087
    %v2557 = vunpack.c.h.b16 %v1087
    %v2558 = vunpack.c.l.b16 %v1088
    %v2559 = vunpack.c.h.b16 %v1088
    %v2560 = vunpack.c.l.b16 %v1089
    %v2561 = vunpack.c.h.b16 %v1089
    %v2562 = vunpack.c.l.b16 %v1090
    %v2563 = vunpack.c.h.b16 %v1090
    %v2564 = vunpack.c.l.b16 %v1091
    %v2565 = vunpack.c.h.b16 %v1091
    %v2566 = vunpack.c.l.b16 %v1092
    %v2567 = vunpack.c.h.b16 %v1092
    %v2568 = vunpack.c.l.b16 %v1093
    %v2569 = vunpack.c.h.b16 %v1093
    %v2570 = vunpack.c.l.b16 %v1094
    %v2571 = vunpack.c.h.b16 %v1094
    %v2572 = vunpack.c.l.b16 %v1095
    %v2573 = vunpack.c.h.b16 %v1095
    %v2574 = vunpack.c.l.b16 %v1096
    %v2575 = vunpack.c.h.b16 %v1096
    %v2576 = vunpack.c.l.b16 %v1097
    %v2577 = vunpack.c.h.b16 %v1097
    %v2578 = vunpack.c.l.b16 %v1098
    %v2579 = vunpack.c.h.b16 %v1098
    %v2580 = vunpack.c.l.b16 %v1099
    %v2581 = vunpack.c.h.b16 %v1099
    %v2582 = vunpack.c.l.b16 %v1100
    %v2583 = vunpack.c.h.b16 %v1100
    %v2584 = vunpack.c.l.b16 %v1101
    %v2585 = vunpack.c.h.b16 %v1101
    %v2586 = vunpack.c.l.b16 %v1102
    %v2587 = vunpack.c.h.b16 %v1102
    %v2588 = vunpack.c.l.b16 %v1103
    %v2589 = vunpack.c.h.b16 %v1103
    %v2590 = vunpack.c.l.b16 %v1104
    %v2591 = vunpack.c.h.b16 %v1104
    %v2592 = vunpack.c.l.b16 %v1105
    %v2593 = vunpack.c.h.b16 %v1105
    %v2594 = vunpack.c.l.b16 %v1106
    %v2595 = vunpack.c.h.b16 %v1106
    %v2596 = vunpack.c.l.b16 %v1107
    %v2597 = vunpack.c.h.b16 %v1107
    %v2598 = vunpack.c.l.b16 %v1108
    %v2599 = vunpack.c.h.b16 %v1108
    %v2600 = vunpack.c.l.b16 %v1109
    %v2601 = vunpack.c.h.b16 %v1109
    %v2602 = vunpack.c.l.b16 %v1110
    %v2603 = vunpack.c.h.b16 %v1110
    %v2604 = vunpack.c.l.b16 %v1111
    %v2605 = vunpack.c.h.b16 %v1111
    %v2606 = vunpack.c.l.b16 %v1112
    %v2607 = vunpack.c.h.b16 %v1112
    %v2608 = vunpack.c.l.b16 %v1113
    %v2609 = vunpack.c.h.b16 %v1113
    %v2610 = vunpack.c.l.b16 %v1114
    %v2611 = vunpack.c.h.b16 %v1114
    %v2612 = vunpack.c.l.b16 %v1115
    %v2613 = vunpack.c.h.b16 %v1115
    %v2614 = vunpack.c.l.b16 %v1116
    %v2615 = vunpack.c.h.b16 %v1116
    %v2616 = vunpack.c.l.b16 %v1117
    %v2617 = vunpack.c.h.b16 %v1117
    %v2618 = vunpack.c.l.b16 %v1118
    %v2619 = vunpack.c.h.b16 %v1118
    %v2620 = vunpack.c.l.b16 %v1119
    %v2621 = vunpack.c.h.b16 %v1119
    %v2622 = vunpack.c.l.b16 %v1120
    %v2623 = vunpack.c.h.b16 %v1120
    %v2624 = vunpack.c.l.b16 %v1121
    %v2625 = vunpack.c.h.b16 %v1121
    %v2626 = vunpack.c.l.b16 %v1122
    %v2627 = vunpack.c.h.b16 %v1122
    %v2628 = vunpack.c.l.b16 %v1123
    %v2629 = vunpack.c.h.b16 %v1123
    %v2630 = vunpack.c.l.b16 %v1124
    %v2631 = vunpack.c.h.b16 %v1124
    %v2632 = vunpack.c.l.b16 %v1125
    %v2633 = vunpack.c.h.b16 %v1125
    %v2634 = vunpack.c.l.b16 %v1126
    %v2635 = vunpack.c.h.b16 %v1126
    %v2636 = vunpack.c.l.b16 %v1127
    %v2637 = vunpack.c.h.b16 %v1127
    %v2638 = vunpack.c.l.b16 %v1128
    %v2639 = vunpack.c.h.b16 %v1128
    %v2640 = vunpack.c.l.b16 %v1129
    %v2641 = vunpack.c.h.b16 %v1129
    %v2642 = vunpack.c.l.b16 %v1130
    %v2643 = vunpack.c.h.b16 %v1130
    %v2644 = vunpack.c.l.b16 %v1131
    %v2645 = vunpack.c.h.b16 %v1131
    %v2646 = vunpack.c.l.b16 %v1132
    %v2647 = vunpack.c.h.b16 %v1132
    %v2648 = vunpack.c.l.b16 %v1133
    %v2649 = vunpack.c.h.b16 %v1133
    %v2650 = vunpack.c.l.b16 %v1134
    %v2651 = vunpack.c.h.b16 %v1134
    %v2652 = vunpack.c.l.b16 %v1135
    %v2653 = vunpack.c.h.b16 %v1135
    %v2654 = vunpack.c.l.b16 %v1136
    %v2655 = vunpack.c.h.b16 %v1136
    %v2656 = vunpack.c.l.b16 %v1137
    %v2657 = vunpack.c.h.b16 %v1137
    %v2658 = vunpack.c.l.b16 %v1138
    %v2659 = vunpack.c.h.b16 %v1138
    %v2660 = vunpack.c.l.b16 %v1139
    %v2661 = vunpack.c.h.b16 %v1139
    %v2662 = vunpack.c.l.b16 %v1140
    %v2663 = vunpack.c.h.b16 %v1140
    %v2664 = vunpack.c.l.b16 %v1141
    %v2665 = vunpack.c.h.b16 %v1141
    %v2666 = vunpack.c.l.b16 %v1142
    %v2667 = vunpack.c.h.b16 %v1142
    %v2668 = vunpack.c.l.b16 %v1143
    %v2669 = vunpack.c.h.b16 %v1143
    %v2670 = vunpack.c.l.b16 %v1144
    %v2671 = vunpack.c.h.b16 %v1144
    %v2672 = vunpack.c.l.b16 %v1145
    %v2673 = vunpack.c.h.b16 %v1145
    %v2674 = vunpack.c.l.b16 %v1146
    %v2675 = vunpack.c.h.b16 %v1146
    %v2676 = vunpack.c.l.b16 %v1147
    %v2677 = vunpack.c.h.b16 %v1147
    %v2678 = vunpack.c.l.b16 %v1148
    %v2679 = vunpack.c.h.b16 %v1148
    %v2680 = vunpack.c.l.b16 %v1149
    %v2681 = vunpack.c.h.b16 %v1149
    %v2682 = vunpack.c.l.b16 %v1150
    %v2683 = vunpack.c.h.b16 %v1150
    %v2684 = vunpack.c.l.b16 %v1151
    %v2685 = vunpack.c.h.b16 %v1151
    %v2686 = vunpack.c.l.b16 %v1152
    %v2687 = vunpack.c.h.b16 %v1152
    %v2688 = vunpack.c.l.b16 %v1153
    %v2689 = vunpack.c.h.b16 %v1153
    %v2690 = vunpack.c.l.b16 %v1154
    %v2691 = vunpack.c.h.b16 %v1154
    %v2692 = vunpack.c.l.b16 %v1155
    %v2693 = vunpack.c.h.b16 %v1155
    %v2694 = vunpack.c.l.b16 %v1156
    %v2695 = vunpack.c.h.b16 %v1156
    %v2696 = vunpack.c.l.b16 %v1157
    %v2697 = vunpack.c.h.b16 %v1157
    %v2698 = vunpack.c.l.b16 %v1158
    %v2699 = vunpack.c.h.b16 %v1158
    %v2700 = vunpack.c.l.b16 %v1159
    %v2701 = vunpack.c.h.b16 %v1159
    %v2702 = vunpack.c.l.b16 %v1160
    %v2703 = vunpack.c.h.b16 %v1160
    %v2704 = vunpack.c.l.b16 %v1161
    %v2705 = vunpack.c.h.b16 %v1161
    %v2706 = vunpack.c.l.b16 %v1162
    %v2707 = vunpack.c.h.b16 %v1162
    %v2708 = vunpack.c.l.b16 %v1163
    %v2709 = vunpack.c.h.b16 %v1163
    %v2710 = vunpack.c.l.b16 %v1164
    %v2711 = vunpack.c.h.b16 %v1164
    %v2712 = vunpack.c.l.b16 %v1165
    %v2713 = vunpack.c.h.b16 %v1165
    %v2714 = vunpack.c.l.b16 %v1166
    %v2715 = vunpack.c.h.b16 %v1166
    %v2716 = vunpack.c.l.b16 %v1167
    %v2717 = vunpack.c.h.b16 %v1167
    %v2718 = vunpack.c.l.b16 %v1168
    %v2719 = vunpack.c.h.b16 %v1168
    %v2720 = vunpack.c.l.b16 %v1169
    %v2721 = vunpack.c.h.b16 %v1169
    %v2722 = vunpack.c.l.b16 %v1170
    %v2723 = vunpack.c.h.b16 %v1170
    %v2724 = vunpack.c.l.b16 %v1171
    %v2725 = vunpack.c.h.b16 %v1171
    %v2726 = vpack.c.b16 %v1710, %v1702
    %v2727 = vpack.c.b16 %v1711, %v1703
    %v2728 = vpack.c.b16 %v1712, %v1704
    %v2729 = vpack.c.b16 %v1713, %v1705
    %v2730 = vpack.c.b16 %v1714, %v1706
    %v2731 = vpack.c.b16 %v1715, %v1707
    %v2732 = vpack.c.b16 %v1716, %v1708
    %v2733 = vpack.c.b16 %v1717, %v1709
    %v2734 = vpack.c.b16 %v1726, %v1718
    %v2735 = vpack.c.b16 %v1727, %v1719
    %v2736 = vpack.c.b16 %v1728, %v1720
    %v2737 = vpack.c.b16 %v1729, %v1721
    %v2738 = vpack.c.b16 %v1730, %v1722
    %v2739 = vpack.c.b16 %v1731, %v1723
    %v2740 = vpack.c.b16 %v1732, %v1724
    %v2741 = vpack.c.b16 %v1733, %v1725
    %v2742 = vpack.c.b16 %v1742, %v1734
    %v2743 = vpack.c.b16 %v1743, %v1735
    %v2744 = vpack.c.b16 %v1744, %v1736
    %v2745 = vpack.c.b16 %v1745, %v1737
    %v2746 = vpack.c.b16 %v1746, %v1738
    %v2747 = vpack.c.b16 %v1747, %v1739
    %v2748 = vpack.c.b16 %v1748, %v1740
    %v2749 = vpack.c.b16 %v1749, %v1741
    %v2750 = vpack.c.b16 %v1758, %v1750
    %v2751 = vpack.c.b16 %v1759, %v1751
    %v2752 = vpack.c.b16 %v1760, %v1752
    %v2753 = vpack.c.b16 %v1761, %v1753
    %v2754 = vpack.c.b16 %v1762, %v1754
    %v2755 = vpack.c.b16 %v1763, %v1755
    %v2756 = vpack.c.b16 %v1764, %v1756
    %v2757 = vpack.c.b16 %v1765, %v1757
    %v2758 = vpack.c.b16 %v1774, %v1766
    %v2759 = vpack.c.b16 %v1775, %v1767
    %v2760 = vpack.c.b16 %v1776, %v1768
    %v2761 = vpack.c.b16 %v1777, %v1769
    %v2762 = vpack.c.b16 %v1778, %v1770
    %v2763 = vpack.c.b16 %v1779, %v1771
    %v2764 = vpack.c.b16 %v1780, %v1772
    %v2765 = vpack.c.b16 %v1781, %v1773
    %v2766 = vpack.c.b16 %v1790, %v1782
    %v2767 = vpack.c.b16 %v1791, %v1783
    %v2768 = vpack.c.b16 %v1792, %v1784
    %v2769 = vpack.c.b16 %v1793, %v1785
    %v2770 = vpack.c.b16 %v1794, %v1786
    %v2771 = vpack.c.b16 %v1795, %v1787
    %v2772 = vpack.c.b16 %v1796, %v1788
    %v2773 = vpack.c.b16 %v1797, %v1789
    %v2774 = vpack.c.b16 %v1806, %v1798
    %v2775 = vpack.c.b16 %v1807, %v1799
    %v2776 = vpack.c.b16 %v1808, %v1800
    %v2777 = vpack.c.b16 %v1809, %v1801
    %v2778 = vpack.c.b16 %v1810, %v1802
    %v2779 = vpack.c.b16 %v1811, %v1803
    %v2780 = vpack.c.b16 %v1812, %v1804
    %v2781 = vpack.c.b16 %v1813, %v1805
    %v2782 = vpack.c.b16 %v1822, %v1814
    %v2783 = vpack.c.b16 %v1823, %v1815
    %v2784 = vpack.c.b16 %v1824, %v1816
    %v2785 = vpack.c.b16 %v1825, %v1817
    %v2786 = vpack.c.b16 %v1826, %v1818
    %v2787 = vpack.c.b16 %v1827, %v1819
    %v2788 = vpack.c.b16 %v1828, %v1820
    %v2789 = vpack.c.b16 %v1829, %v1821
    %v2790 = vpack.c.b16 %v1838, %v1830
    %v2791 = vpack.c.b16 %v1839, %v1831
    %v2792 = vpack.c.b16 %v1840, %v1832
    %v2793 = vpack.c.b16 %v1841, %v1833
    %v2794 = vpack.c.b16 %v1842, %v1834
    %v2795 = vpack.c.b16 %v1843, %v1835
    %v2796 = vpack.c.b16 %v1844, %v1836
    %v2797 = vpack.c.b16 %v1845, %v1837
    %v2798 = vpack.c.b16 %v1854, %v1846
    %v2799 = vpack.c.b16 %v1855, %v1847
    %v2800 = vpack.c.b16 %v1856, %v1848
    %v2801 = vpack.c.b16 %v1857, %v1849
    %v2802 = vpack.c.b16 %v1858, %v1850
    %v2803 = vpack.c.b16 %v1859, %v1851
    %v2804 = vpack.c.b16 %v1860, %v1852
    %v2805 = vpack.c.b16 %v1861, %v1853
    %v2806 = vpack.c.b16 %v1870, %v1862
    %v2807 = vpack.c.b16 %v1871, %v1863
    %v2808 = vpack.c.b16 %v1872, %v1864
    %v2809 = vpack.c.b16 %v1873, %v1865
    %v2810 = vpack.c.b16 %v1874, %v1866
    %v2811 = vpack.c.b16 %v1875, %v1867
    %v2812 = vpack.c.b16 %v1876, %v1868
    %v2813 = vpack.c.b16 %v1877, %v1869
    %v2814 = vpack.c.b16 %v1886, %v1878
    %v2815 = vpack.c.b16 %v1887, %v1879
    %v2816 = vpack.c.b16 %v1888, %v1880
    %v2817 = vpack.c.b16 %v1889, %v1881
    %v2818 = vpack.c.b16 %v1890, %v1882
    %v2819 = vpack.c.b16 %v1891, %v1883
    %v2820 = vpack.c.b16 %v1892, %v1884
    %v2821 = vpack.c.b16 %v1893, %v1885
    %v2822 = vpack.c.b16 %v1902, %v1894
    %v2823 = vpack.c.b16 %v1903, %v1895
    %v2824 = vpack.c.b16 %v1904, %v1896
    %v2825 = vpack.c.b16 %v1905, %v1897
    %v2826 = vpack.c.b16 %v1906, %v1898
    %v2827 = vpack.c.b16 %v1907, %v1899
    %v2828 = vpack.c.b16 %v1908, %v1900
    %v2829 = vpack.c.b16 %v1909, %v1901
    %v2830 = vpack.c.b16 %v1918, %v1910
    %v2831 = vpack.c.b16 %v1919, %v1911
    %v2832 = vpack.c.b16 %v1920, %v1912
    %v2833 = vpack.c.b16 %v1921, %v1913
    %v2834 = vpack.c.b16 %v1922, %v1914
    %v2835 = vpack.c.b16 %v1923, %v1915
    %v2836 = vpack.c.b16 %v1924, %v1916
    %v2837 = vpack.c.b16 %v1925, %v1917
    %v2838 = vpack.c.b16 %v1934, %v1926
    %v2839 = vpack.c.b16 %v1935, %v1927
    %v2840 = vpack.c.b16 %v1936, %v1928
    %v2841 = vpack.c.b16 %v1937, %v1929
    %v2842 = vpack.c.b16 %v1938, %v1930
    %v2843 = vpack.c.b16 %v1939, %v1931
    %v2844 = vpack.c.b16 %v1940, %v1932
    %v2845 = vpack.c.b16 %v1941, %v1933
    %v2846 = vpack.c.b16 %v1950, %v1942
    %v2847 = vpack.c.b16 %v1951, %v1943
    %v2848 = vpack.c.b16 %v1952, %v1944
    %v2849 = vpack.c.b16 %v1953, %v1945
    %v2850 = vpack.c.b16 %v1954, %v1946
    %v2851 = vpack.c.b16 %v1955, %v1947
    %v2852 = vpack.c.b16 %v1956, %v1948
    %v2853 = vpack.c.b16 %v1957, %v1949
    %v2854 = vpack.c.b16 %v1966, %v1958
    %v2855 = vpack.c.b16 %v1967, %v1959
    %v2856 = vpack.c.b16 %v1968, %v1960
    %v2857 = vpack.c.b16 %v1969, %v1961
    %v2858 = vpack.c.b16 %v1970, %v1962
    %v2859 = vpack.c.b16 %v1971, %v1963
    %v2860 = vpack.c.b16 %v1972, %v1964
    %v2861 = vpack.c.b16 %v1973, %v1965
    %v2862 = vpack.c.b16 %v1982, %v1974
    %v2863 = vpack.c.b16 %v1983, %v1975
    %v2864 = vpack.c.b16 %v1984, %v1976
    %v2865 = vpack.c.b16 %v1985, %v1977
    %v2866 = vpack.c.b16 %v1986, %v1978
    %v2867 = vpack.c.b16 %v1987, %v1979
    %v2868 = vpack.c.b16 %v1988, %v1980
    %v2869 = vpack.c.b16 %v1989, %v1981
    %v2870 = vpack.c.b16 %v1998, %v1990
    %v2871 = vpack.c.b16 %v1999, %v1991
    %v2872 = vpack.c.b16 %v2000, %v1992
    %v2873 = vpack.c.b16 %v2001, %v1993
    %v2874 = vpack.c.b16 %v2002, %v1994
    %v2875 = vpack.c.b16 %v2003, %v1995
    %v2876 = vpack.c.b16 %v2004, %v1996
    %v2877 = vpack.c.b16 %v2005, %v1997
    %v2878 = vpack.c.b16 %v2014, %v2006
    %v2879 = vpack.c.b16 %v2015, %v2007
    %v2880 = vpack.c.b16 %v2016, %v2008
    %v2881 = vpack.c.b16 %v2017, %v2009
    %v2882 = vpack.c.b16 %v2018, %v2010
    %v2883 = vpack.c.b16 %v2019, %v2011
    %v2884 = vpack.c.b16 %v2020, %v2012
    %v2885 = vpack.c.b16 %v2021, %v2013
    %v2886 = vpack.c.b16 %v2030, %v2022
    %v2887 = vpack.c.b16 %v2031, %v2023
    %v2888 = vpack.c.b16 %v2032, %v2024
    %v2889 = vpack.c.b16 %v2033, %v2025
    %v2890 = vpack.c.b16 %v2034, %v2026
    %v2891 = vpack.c.b16 %v2035, %v2027
    %v2892 = vpack.c.b16 %v2036, %v2028
    %v2893 = vpack.c.b16 %v2037, %v2029
    %v2894 = vpack.c.b16 %v2046, %v2038
    %v2895 = vpack.c.b16 %v2047, %v2039
    %v2896 = vpack.c.b16 %v2048, %v2040
    %v2897 = vpack.c.b16 %v2049, %v2041
    %v2898 = vpack.c.b16 %v2050, %v2042
    %v2899 = vpack.c.b16 %v2051, %v2043
    %v2900 = vpack.c.b16 %v2052, %v2044
    %v2901 = vpack.c.b16 %v2053, %v2045
    %v2902 = vpack.c.b16 %v2062, %v2054
    %v2903 = vpack.c.b16 %v2063, %v2055
    %v2904 = vpack.c.b16 %v2064, %v2056
    %v2905 = vpack.c.b16 %v2065, %v2057
    %v2906 = vpack.c.b16 %v2066, %v2058
    %v2907 = vpack.c.b16 %v2067, %v2059
    %v2908 = vpack.c.b16 %v2068, %v2060
    %v2909 = vpack.c.b16 %v2069, %v2061
    %v2910 = vpack.c.b16 %v2078, %v2070
    %v2911 = vpack.c.b16 %v2079, %v2071
    %v2912 = vpack.c.b16 %v2080, %v2072
    %v2913 = vpack.c.b16 %v2081, %v2073
    %v2914 = vpack.c.b16 %v2082, %v2074
    %v2915 = vpack.c.b16 %v2083, %v2075
    %v2916 = vpack.c.b16 %v2084, %v2076
    %v2917 = vpack.c.b16 %v2085, %v2077
    %v2918 = vpack.c.b16 %v2094, %v2086
    %v2919 = vpack.c.b16 %v2095, %v2087
    %v2920 = vpack.c.b16 %v2096, %v2088
    %v2921 = vpack.c.b16 %v2097, %v2089
    %v2922 = vpack.c.b16 %v2098, %v2090
    %v2923 = vpack.c.b16 %v2099, %v2091
    %v2924 = vpack.c.b16 %v2100, %v2092
    %v2925 = vpack.c.b16 %v2101, %v2093
    %v2926 = vpack.c.b16 %v2110, %v2102
    %v2927 = vpack.c.b16 %v2111, %v2103
    %v2928 = vpack.c.b16 %v2112, %v2104
    %v2929 = vpack.c.b16 %v2113, %v2105
    %v2930 = vpack.c.b16 %v2114, %v2106
    %v2931 = vpack.c.b16 %v2115, %v2107
    %v2932 = vpack.c.b16 %v2116, %v2108
    %v2933 = vpack.c.b16 %v2117, %v2109
    %v2934 = vpack.c.b16 %v2126, %v2118
    %v2935 = vpack.c.b16 %v2127, %v2119
    %v2936 = vpack.c.b16 %v2128, %v2120
    %v2937 = vpack.c.b16 %v2129, %v2121
    %v2938 = vpack.c.b16 %v2130, %v2122
    %v2939 = vpack.c.b16 %v2131, %v2123
    %v2940 = vpack.c.b16 %v2132, %v2124
    %v2941 = vpack.c.b16 %v2133, %v2125
    %v2942 = vpack.c.b16 %v2142, %v2134
    %v2943 = vpack.c.b16 %v2143, %v2135
    %v2944 = vpack.c.b16 %v2144, %v2136
    %v2945 = vpack.c.b16 %v2145, %v2137
    %v2946 = vpack.c.b16 %v2146, %v2138
    %v2947 = vpack.c.b16 %v2147, %v2139
    %v2948 = vpack.c.b16 %v2148, %v2140
    %v2949 = vpack.c.b16 %v2149, %v2141
    %v2950 = vpack.c.b16 %v2158, %v2150
    %v2951 = vpack.c.b16 %v2159, %v2151
    %v2952 = vpack.c.b16 %v2160, %v2152
    %v2953 = vpack.c.b16 %v2161, %v2153
    %v2954 = vpack.c.b16 %v2162, %v2154
    %v2955 = vpack.c.b16 %v2163, %v2155
    %v2956 = vpack.c.b16 %v2164, %v2156
    %v2957 = vpack.c.b16 %v2165, %v2157
    %v2958 = vpack.c.b16 %v2174, %v2166
    %v2959 = vpack.c.b16 %v2175, %v2167
    %v2960 = vpack.c.b16 %v2176, %v2168
    %v2961 = vpack.c.b16 %v2177, %v2169
    %v2962 = vpack.c.b16 %v2178, %v2170
    %v2963 = vpack.c.b16 %v2179, %v2171
    %v2964 = vpack.c.b16 %v2180, %v2172
    %v2965 = vpack.c.b16 %v2181, %v2173
    %v2966 = vpack.c.b16 %v2190, %v2182
    %v2967 = vpack.c.b16 %v2191, %v2183
    %v2968 = vpack.c.b16 %v2192, %v2184
    %v2969 = vpack.c.b16 %v2193, %v2185
    %v2970 = vpack.c.b16 %v2194, %v2186
    %v2971 = vpack.c.b16 %v2195, %v2187
    %v2972 = vpack.c.b16 %v2196, %v2188
    %v2973 = vpack.c.b16 %v2197, %v2189
    %v2974 = vpack.c.b16 %v2206, %v2198
    %v2975 = vpack.c.b16 %v2207, %v2199
    %v2976 = vpack.c.b16 %v2208, %v2200
    %v2977 = vpack.c.b16 %v2209, %v2201
    %v2978 = vpack.c.b16 %v2210, %v2202
    %v2979 = vpack.c.b16 %v2211, %v2203
    %v2980 = vpack.c.b16 %v2212, %v2204
    %v2981 = vpack.c.b16 %v2213, %v2205
    %v2982 = vpack.c.b16 %v2222, %v2214
    %v2983 = vpack.c.b16 %v2223, %v2215
    %v2984 = vpack.c.b16 %v2224, %v2216
    %v2985 = vpack.c.b16 %v2225, %v2217
    %v2986 = vpack.c.b16 %v2226, %v2218
    %v2987 = vpack.c.b16 %v2227, %v2219
    %v2988 = vpack.c.b16 %v2228, %v2220
    %v2989 = vpack.c.b16 %v2229, %v2221
    %v2990 = vpack.c.b16 %v2238, %v2230
    %v2991 = vpack.c.b16 %v2239, %v2231
    %v2992 = vpack.c.b16 %v2240, %v2232
    %v2993 = vpack.c.b16 %v2241, %v2233
    %v2994 = vpack.c.b16 %v2242, %v2234
    %v2995 = vpack.c.b16 %v2243, %v2235
    %v2996 = vpack.c.b16 %v2244, %v2236
    %v2997 = vpack.c.b16 %v2245, %v2237
    %v2998 = vpack.c.b16 %v2254, %v2246
    %v2999 = vpack.c.b16 %v2255, %v2247
    %v3000 = vpack.c.b16 %v2256, %v2248
    %v3001 = vpack.c.b16 %v2257, %v2249
    %v3002 = vpack.c.b16 %v2258, %v2250
    %v3003 = vpack.c.b16 %v2259, %v2251
    %v3004 = vpack.c.b16 %v2260, %v2252
    %v3005 = vpack.c.b16 %v2261, %v2253
    %v3006 = vpack.c.b16 %v2270, %v2262
    %v3007 = vpack.c.b16 %v2271, %v2263
    %v3008 = vpack.c.b16 %v2272, %v2264
    %v3009 = vpack.c.b16 %v2273, %v2265
    %v3010 = vpack.c.b16 %v2274, %v2266
    %v3011 = vpack.c.b16 %v2275, %v2267
    %v3012 = vpack.c.b16 %v2276, %v2268
    %v3013 = vpack.c.b16 %v2277, %v2269
    %v3014 = vpack.c.b16 %v2286, %v2278
    %v3015 = vpack.c.b16 %v2287, %v2279
    %v3016 = vpack.c.b16 %v2288, %v2280
    %v3017 = vpack.c.b16 %v2289, %v2281
    %v3018 = vpack.c.b16 %v2290, %v2282
    %v3019 = vpack.c.b16 %v2291, %v2283
    %v3020 = vpack.c.b16 %v2292, %v2284
    %v3021 = vpack.c.b16 %v2293, %v2285
    %v3022 = vpack.c.b16 %v2302, %v2294
    %v3023 = vpack.c.b16 %v2303, %v2295
    %v3024 = vpack.c.b16 %v2304, %v2296
    %v3025 = vpack.c.b16 %v2305, %v2297
    %v3026 = vpack.c.b16 %v2306, %v2298
    %v3027 = vpack.c.b16 %v2307, %v2299
    %v3028 = vpack.c.b16 %v2308, %v2300
    %v3029 = vpack.c.b16 %v2309, %v2301
    %v3030 = vpack.c.b16 %v2318, %v2310
    %v3031 = vpack.c.b16 %v2319, %v2311
    %v3032 = vpack.c.b16 %v2320, %v2312
    %v3033 = vpack.c.b16 %v2321, %v2313
    %v3034 = vpack.c.b16 %v2322, %v2314
    %v3035 = vpack.c.b16 %v2323, %v2315
    %v3036 = vpack.c.b16 %v2324, %v2316
    %v3037 = vpack.c.b16 %v2325, %v2317
    %v3038 = vpack.c.b16 %v2334, %v2326
    %v3039 = vpack.c.b16 %v2335, %v2327
    %v3040 = vpack.c.b16 %v2336, %v2328
    %v3041 = vpack.c.b16 %v2337, %v2329
    %v3042 = vpack.c.b16 %v2338, %v2330
    %v3043 = vpack.c.b16 %v2339, %v2331
    %v3044 = vpack.c.b16 %v2340, %v2332
    %v3045 = vpack.c.b16 %v2341, %v2333
    %v3046 = vpack.c.b16 %v2350, %v2342
    %v3047 = vpack.c.b16 %v2351, %v2343
    %v3048 = vpack.c.b16 %v2352, %v2344
    %v3049 = vpack.c.b16 %v2353, %v2345
    %v3050 = vpack.c.b16 %v2354, %v2346
    %v3051 = vpack.c.b16 %v2355, %v2347
    %v3052 = vpack.c.b16 %v2356, %v2348
    %v3053 = vpack.c.b16 %v2357, %v2349
    %v3054 = vpack.c.b16 %v2366, %v2358
    %v3055 = vpack.c.b16 %v2367, %v2359
    %v3056 = vpack.c.b16 %v2368, %v2360
    %v3057 = vpack.c.b16 %v2369, %v2361
    %v3058 = vpack.c.b16 %v2370, %v2362
    %v3059 = vpack.c.b16 %v2371, %v2363
    %v3060 = vpack.c.b16 %v2372, %v2364
    %v3061 = vpack.c.b16 %v2373, %v2365
    %v3062 = vpack.c.b16 %v2382, %v2374
    %v3063 = vpack.c.b16 %v2383, %v2375
    %v3064 = vpack.c.b16 %v2384, %v2376
    %v3065 = vpack.c.b16 %v2385, %v2377
    %v3066 = vpack.c.b16 %v2386, %v2378
    %v3067 = vpack.c.b16 %v2387, %v2379
    %v3068 = vpack.c.b16 %v2388, %v2380
    %v3069 = vpack.c.b16 %v2389, %v2381
    %v3070 = vpack.c.b16 %v2398, %v2390
    %v3071 = vpack.c.b16 %v2399, %v2391
    %v3072 = vpack.c.b16 %v2400, %v2392
    %v3073 = vpack.c.b16 %v2401, %v2393
    %v3074 = vpack.c.b16 %v2402, %v2394
    %v3075 = vpack.c.b16 %v2403, %v2395
    %v3076 = vpack.c.b16 %v2404, %v2396
    %v3077 = vpack.c.b16 %v2405, %v2397
    %v3078 = vpack.c.b16 %v2414, %v2406
    %v3079 = vpack.c.b16 %v2415, %v2407
    %v3080 = vpack.c.b16 %v2416, %v2408
    %v3081 = vpack.c.b16 %v2417, %v2409
    %v3082 = vpack.c.b16 %v2418, %v2410
    %v3083 = vpack.c.b16 %v2419, %v2411
    %v3084 = vpack.c.b16 %v2420, %v2412
    %v3085 = vpack.c.b16 %v2421, %v2413
    %v3086 = vpack.c.b16 %v2430, %v2422
    %v3087 = vpack.c.b16 %v2431, %v2423
    %v3088 = vpack.c.b16 %v2432, %v2424
    %v3089 = vpack.c.b16 %v2433, %v2425
    %v3090 = vpack.c.b16 %v2434, %v2426
    %v3091 = vpack.c.b16 %v2435, %v2427
    %v3092 = vpack.c.b16 %v2436, %v2428
    %v3093 = vpack.c.b16 %v2437, %v2429
    %v3094 = vpack.c.b16 %v2446, %v2438
    %v3095 = vpack.c.b16 %v2447, %v2439
    %v3096 = vpack.c.b16 %v2448, %v2440
    %v3097 = vpack.c.b16 %v2449, %v2441
    %v3098 = vpack.c.b16 %v2450, %v2442
    %v3099 = vpack.c.b16 %v2451, %v2443
    %v3100 = vpack.c.b16 %v2452, %v2444
    %v3101 = vpack.c.b16 %v2453, %v2445
    %v3102 = vpack.c.b16 %v2462, %v2454
    %v3103 = vpack.c.b16 %v2463, %v2455
    %v3104 = vpack.c.b16 %v2464, %v2456
    %v3105 = vpack.c.b16 %v2465, %v2457
    %v3106 = vpack.c.b16 %v2466, %v2458
    %v3107 = vpack.c.b16 %v2467, %v2459
    %v3108 = vpack.c.b16 %v2468, %v2460
    %v3109 = vpack.c.b16 %v2469, %v2461
    %v3110 = vpack.c.b16 %v2478, %v2470
    %v3111 = vpack.c.b16 %v2479, %v2471
    %v3112 = vpack.c.b16 %v2480, %v2472
    %v3113 = vpack.c.b16 %v2481, %v2473
    %v3114 = vpack.c.b16 %v2482, %v2474
    %v3115 = vpack.c.b16 %v2483, %v2475
    %v3116 = vpack.c.b16 %v2484, %v2476
    %v3117 = vpack.c.b16 %v2485, %v2477
    %v3118 = vpack.c.b16 %v2494, %v2486
    %v3119 = vpack.c.b16 %v2495, %v2487
    %v3120 = vpack.c.b16 %v2496, %v2488
    %v3121 = vpack.c.b16 %v2497, %v2489
    %v3122 = vpack.c.b16 %v2498, %v2490
    %v3123 = vpack.c.b16 %v2499, %v2491
    %v3124 = vpack.c.b16 %v2500, %v2492
    %v3125 = vpack.c.b16 %v2501, %v2493
    %v3126 = vpack.c.b16 %v2510, %v2502
    %v3127 = vpack.c.b16 %v2511, %v2503
    %v3128 = vpack.c.b16 %v2512, %v2504
    %v3129 = vpack.c.b16 %v2513, %v2505
    %v3130 = vpack.c.b16 %v2514, %v2506
    %v3131 = vpack.c.b16 %v2515, %v2507
    %v3132 = vpack.c.b16 %v2516, %v2508
    %v3133 = vpack.c.b16 %v2517, %v2509
    %v3134 = vpack.c.b16 %v2526, %v2518
    %v3135 = vpack.c.b16 %v2527, %v2519
    %v3136 = vpack.c.b16 %v2528, %v2520
    %v3137 = vpack.c.b16 %v2529, %v2521
    %v3138 = vpack.c.b16 %v2530, %v2522
    %v3139 = vpack.c.b16 %v2531, %v2523
    %v3140 = vpack.c.b16 %v2532, %v2524
    %v3141 = vpack.c.b16 %v2533, %v2525
    %v3142 = vpack.c.b16 %v2542, %v2534
    %v3143 = vpack.c.b16 %v2543, %v2535
    %v3144 = vpack.c.b16 %v2544, %v2536
    %v3145 = vpack.c.b16 %v2545, %v2537
    %v3146 = vpack.c.b16 %v2546, %v2538
    %v3147 = vpack.c.b16 %v2547, %v2539
    %v3148 = vpack.c.b16 %v2548, %v2540
    %v3149 = vpack.c.b16 %v2549, %v2541
    %v3150 = vpack.c.b16 %v2558, %v2550
    %v3151 = vpack.c.b16 %v2559, %v2551
    %v3152 = vpack.c.b16 %v2560, %v2552
    %v3153 = vpack.c.b16 %v2561, %v2553
    %v3154 = vpack.c.b16 %v2562, %v2554
    %v3155 = vpack.c.b16 %v2563, %v2555
    %v3156 = vpack.c.b16 %v2564, %v2556
    %v3157 = vpack.c.b16 %v2565, %v2557
    %v3158 = vpack.c.b16 %v2574, %v2566
    %v3159 = vpack.c.b16 %v2575, %v2567
    %v3160 = vpack.c.b16 %v2576, %v2568
    %v3161 = vpack.c.b16 %v2577, %v2569
    %v3162 = vpack.c.b16 %v2578, %v2570
    %v3163 = vpack.c.b16 %v2579, %v2571
    %v3164 = vpack.c.b16 %v2580, %v2572
    %v3165 = vpack.c.b16 %v2581, %v2573
    %v3166 = vpack.c.b16 %v2590, %v2582
    %v3167 = vpack.c.b16 %v2591, %v2583
    %v3168 = vpack.c.b16 %v2592, %v2584
    %v3169 = vpack.c.b16 %v2593, %v2585
    %v3170 = vpack.c.b16 %v2594, %v2586
    %v3171 = vpack.c.b16 %v2595, %v2587
    %v3172 = vpack.c.b16 %v2596, %v2588
    %v3173 = vpack.c.b16 %v2597, %v2589
    %v3174 = vpack.c.b16 %v2606, %v2598
    %v3175 = vpack.c.b16 %v2607, %v2599
    %v3176 = vpack.c.b16 %v2608, %v2600
    %v3177 = vpack.c.b16 %v2609, %v2601
    %v3178 = vpack.c.b16 %v2610, %v2602
    %v3179 = vpack.c.b16 %v2611, %v2603
    %v3180 = vpack.c.b16 %v2612, %v2604
    %v3181 = vpack.c.b16 %v2613, %v2605
    %v3182 = vpack.c.b16 %v2622, %v2614
    %v3183 = vpack.c.b16 %v2623, %v2615
    %v3184 = vpack.c.b16 %v2624, %v2616
    %v3185 = vpack.c.b16 %v2625, %v2617
    %v3186 = vpack.c.b16 %v2626, %v2618
    %v3187 = vpack.c.b16 %v2627, %v2619
    %v3188 = vpack.c.b16 %v2628, %v2620
    %v3189 = vpack.c.b16 %v2629, %v2621
    %v3190 = vpack.c.b16 %v2638, %v2630
    %v3191 = vpack.c.b16 %v2639, %v2631
    %v3192 = vpack.c.b16 %v2640, %v2632
    %v3193 = vpack.c.b16 %v2641, %v2633
    %v3194 = vpack.c.b16 %v2642, %v2634
    %v3195 = vpack.c.b16 %v2643, %v2635
    %v3196 = vpack.c.b16 %v2644, %v2636
    %v3197 = vpack.c.b16 %v2645, %v2637
    %v3198 = vpack.c.b16 %v2654, %v2646
    %v3199 = vpack.c.b16 %v2655, %v2647
    %v3200 = vpack.c.b16 %v2656, %v2648
    %v3201 = vpack.c.b16 %v2657, %v2649
    %v3202 = vpack.c.b16 %v2658, %v2650
    %v3203 = vpack.c.b16 %v2659, %v2651
    %v3204 = vpack.c.b16 %v2660, %v2652
    %v3205 = vpack.c.b16 %v2661, %v2653
    %v3206 = vpack.c.b16 %v2670, %v2662
    %v3207 = vpack.c.b16 %v2671, %v2663
    %v3208 = vpack.c.b16 %v2672, %v2664
    %v3209 = vpack.c.b16 %v2673, %v2665
    %v3210 = vpack.c.b16 %v2674, %v2666
    %v3211 = vpack.c.b16 %v2675, %v2667
    %v3212 = vpack.c.b16 %v2676, %v2668
    %v3213 = vpack.c.b16 %v2677, %v2669
    %v3214 = vpack.c.b16 %v2686, %v2678
    %v3215 = vpack.c.b16 %v2687, %v2679
    %v3216 = vpack.c.b16 %v2688, %v2680
    %v3217 = vpack.c.b16 %v2689, %v2681
    %v3218 = vpack.c.b16 %v2690, %v2682
    %v3219 = vpack.c.b16 %v2691, %v2683
    %v3220 = vpack.c.b16 %v2692, %v2684
    %v3221 = vpack.c.b16 %v2693, %v2685
    %v3222 = vpack.c.b16 %v2702, %v2694
    %v3223 = vpack.c.b16 %v2703, %v2695
    %v3224 = vpack.c.b16 %v2704, %v2696
    %v3225 = vpack.c.b16 %v2705, %v2697
    %v3226 = vpack.c.b16 %v2706, %v2698
    %v3227 = vpack.c.b16 %v2707, %v2699
    %v3228 = vpack.c.b16 %v2708, %v2700
    %v3229 = vpack.c.b16 %v2709, %v2701
    %v3230 = vpack.c.b16 %v2718, %v2710
    %v3231 = vpack.c.b16 %v2719, %v2711
    %v3232 = vpack.c.b16 %v2720, %v2712
    %v3233 = vpack.c.b16 %v2721, %v2713
    %v3234 = vpack.c.b16 %v2722, %v2714
    %v3235 = vpack.c.b16 %v2723, %v2715
    %v3236 = vpack.c.b16 %v2724, %v2716
    %v3237 = vpack.c.b16 %v2725, %v2717
    %3750 = vmatpush.bf16.msra.mxu0 %v2782
    %3751 = vmatpush.bf16.msra.mxu0 %v2774
    %3752 = vmatpush.bf16.msra.mxu0 %v2766
    %3753 = vmatpush.bf16.msra.mxu0 %v2758
    %3754 = vmatpush.bf16.msra.mxu0 %v2750
    %3755 = vmatpush.bf16.msra.mxu0 %v2742
    %3756 = vmatpush.bf16.msra.mxu0 %v2734
    %3757 = vmatpush.bf16.msra.mxu0 %v2726
    %3758 = vmatmul.bf16.gmra.mxu0 %v652
    %v3759 = vpop.f32.mrf.mxu0
    %v3760 = vadd.f32 %v1174, %v3759
    %v3761 = vpop.f32.mrf.mxu0
    %v3762 = vadd.f32 %v1174, %v3761
    %3763 = vdwg.mxu0
    %3764 = vmatpush.bf16.msra.mxu0 %v2846
    %3765 = vmatpush.bf16.msra.mxu0 %v2838
    %3766 = vmatpush.bf16.msra.mxu0 %v2830
    %3767 = vmatpush.bf16.msra.mxu0 %v2822
    %3768 = vmatpush.bf16.msra.mxu0 %v2814
    %3769 = vmatpush.bf16.msra.mxu0 %v2806
    %3770 = vmatpush.bf16.msra.mxu0 %v2798
    %3771 = vmatpush.bf16.msra.mxu0 %v2790
    %3772 = vmatmul.bf16.gmra.mxu0 %v653
    %v3773 = vpop.f32.mrf.mxu0
    %v3774 = vadd.f32 %v3760, %v3773
    %v3775 = vpop.f32.mrf.mxu0
    %v3776 = vadd.f32 %v3762, %v3775
    %3777 = vdwg.mxu0
    %3778 = vmatpush.bf16.msra.mxu0 %v2910
    %3779 = vmatpush.bf16.msra.mxu0 %v2902
    %3780 = vmatpush.bf16.msra.mxu0 %v2894
    %3781 = vmatpush.bf16.msra.mxu0 %v2886
    %3782 = vmatpush.bf16.msra.mxu0 %v2878
    %3783 = vmatpush.bf16.msra.mxu0 %v2870
    %3784 = vmatpush.bf16.msra.mxu0 %v2862
    %3785 = vmatpush.bf16.msra.mxu0 %v2854
    %3786 = vmatmul.bf16.gmra.mxu0 %v654
    %v3787 = vpop.f32.mrf.mxu0
    %v3788 = vadd.f32 %v3774, %v3787
    %v3789 = vpop.f32.mrf.mxu0
    %v3790 = vadd.f32 %v3776, %v3789
    %3791 = vdwg.mxu0
    %3792 = vmatpush.bf16.msra.mxu0 %v2974
    %3793 = vmatpush.bf16.msra.mxu0 %v2966
    %3794 = vmatpush.bf16.msra.mxu0 %v2958
    %3795 = vmatpush.bf16.msra.mxu0 %v2950
    %3796 = vmatpush.bf16.msra.mxu0 %v2942
    %3797 = vmatpush.bf16.msra.mxu0 %v2934
    %3798 = vmatpush.bf16.msra.mxu0 %v2926
    %3799 = vmatpush.bf16.msra.mxu0 %v2918
    %3800 = vmatmul.bf16.gmra.mxu0 %v655
    %v3801 = vpop.f32.mrf.mxu0
    %v3802 = vadd.f32 %v3788, %v3801
    %v3803 = vpop.f32.mrf.mxu0
    %v3804 = vadd.f32 %v3790, %v3803
    %3805 = vdwg.mxu0
    %3806 = vmatpush.bf16.msra.mxu0 %v3038
    %3807 = vmatpush.bf16.msra.mxu0 %v3030
    %3808 = vmatpush.bf16.msra.mxu0 %v3022
    %3809 = vmatpush.bf16.msra.mxu0 %v3014
    %3810 = vmatpush.bf16.msra.mxu0 %v3006
    %3811 = vmatpush.bf16.msra.mxu0 %v2998
    %3812 = vmatpush.bf16.msra.mxu0 %v2990
    %3813 = vmatpush.bf16.msra.mxu0 %v2982
    %3814 = vmatmul.bf16.gmra.mxu0 %v656
    %v3815 = vpop.f32.mrf.mxu0
    %v3816 = vadd.f32 %v3802, %v3815
    %v3817 = vpop.f32.mrf.mxu0
    %v3818 = vadd.f32 %v3804, %v3817
    %3819 = vdwg.mxu0
    %3820 = vmatpush.bf16.msra.mxu0 %v3102
    %3821 = vmatpush.bf16.msra.mxu0 %v3094
    %3822 = vmatpush.bf16.msra.mxu0 %v3086
    %3823 = vmatpush.bf16.msra.mxu0 %v3078
    %3824 = vmatpush.bf16.msra.mxu0 %v3070
    %3825 = vmatpush.bf16.msra.mxu0 %v3062
    %3826 = vmatpush.bf16.msra.mxu0 %v3054
    %3827 = vmatpush.bf16.msra.mxu0 %v3046
    %3828 = vmatmul.bf16.gmra.mxu0 %v657
    %v3829 = vpop.f32.mrf.mxu0
    %v3830 = vadd.f32 %v3816, %v3829
    %v3831 = vpop.f32.mrf.mxu0
    %v3832 = vadd.f32 %v3818, %v3831
    %3833 = vdwg.mxu0
    %3834 = vmatpush.bf16.msra.mxu0 %v3166
    %3835 = vmatpush.bf16.msra.mxu0 %v3158
    %3836 = vmatpush.bf16.msra.mxu0 %v3150
    %3837 = vmatpush.bf16.msra.mxu0 %v3142
    %3838 = vmatpush.bf16.msra.mxu0 %v3134
    %3839 = vmatpush.bf16.msra.mxu0 %v3126
    %3840 = vmatpush.bf16.msra.mxu0 %v3118
    %3841 = vmatpush.bf16.msra.mxu0 %v3110
    %3842 = vmatmul.bf16.gmra.mxu0 %v658
    %v3843 = vpop.f32.mrf.mxu0
    %v3844 = vadd.f32 %v3830, %v3843
    %v3845 = vpop.f32.mrf.mxu0
    %v3846 = vadd.f32 %v3832, %v3845
    %3847 = vdwg.mxu0
    %3848 = vmatpush.bf16.msra.mxu0 %v3230
    %3849 = vmatpush.bf16.msra.mxu0 %v3222
    %3850 = vmatpush.bf16.msra.mxu0 %v3214
    %3851 = vmatpush.bf16.msra.mxu0 %v3206
    %3852 = vmatpush.bf16.msra.mxu0 %v3198
    %3853 = vmatpush.bf16.msra.mxu0 %v3190
    %3854 = vmatpush.bf16.msra.mxu0 %v3182
    %3855 = vmatpush.bf16.msra.mxu0 %v3174
    %3856 = vmatmul.bf16.gmra.mxu0 %v659
    %v3857 = vpop.f32.mrf.mxu0
    %v3858 = vadd.f32 %v3844, %v3857
    %v3859 = vpop.f32.mrf.mxu0
    %v3860 = vadd.f32 %v3846, %v3859
    %3861 = vdwg.mxu0
    %3862 = vmatpush.bf16.msra.mxu0 %v2783
    %3863 = vmatpush.bf16.msra.mxu0 %v2775
    %3864 = vmatpush.bf16.msra.mxu0 %v2767
    %3865 = vmatpush.bf16.msra.mxu0 %v2759
    %3866 = vmatpush.bf16.msra.mxu0 %v2751
    %3867 = vmatpush.bf16.msra.mxu0 %v2743
    %3868 = vmatpush.bf16.msra.mxu0 %v2735
    %3869 = vmatpush.bf16.msra.mxu0 %v2727
    %3870 = vmatmul.bf16.gmra.mxu0 %v652
    %v3871 = vpop.f32.mrf.mxu0
    %v3872 = vadd.f32 %v1175, %v3871
    %v3873 = vpop.f32.mrf.mxu0
    %v3874 = vadd.f32 %v1175, %v3873
    %3875 = vdwg.mxu0
    %3876 = vmatpush.bf16.msra.mxu0 %v2847
    %3877 = vmatpush.bf16.msra.mxu0 %v2839
    %3878 = vmatpush.bf16.msra.mxu0 %v2831
    %3879 = vmatpush.bf16.msra.mxu0 %v2823
    %3880 = vmatpush.bf16.msra.mxu0 %v2815
    %3881 = vmatpush.bf16.msra.mxu0 %v2807
    %3882 = vmatpush.bf16.msra.mxu0 %v2799
    %3883 = vmatpush.bf16.msra.mxu0 %v2791
    %3884 = vmatmul.bf16.gmra.mxu0 %v653
    %v3885 = vpop.f32.mrf.mxu0
    %v3886 = vadd.f32 %v3872, %v3885
    %v3887 = vpop.f32.mrf.mxu0
    %v3888 = vadd.f32 %v3874, %v3887
    %3889 = vdwg.mxu0
    %3890 = vmatpush.bf16.msra.mxu0 %v2911
    %3891 = vmatpush.bf16.msra.mxu0 %v2903
    %3892 = vmatpush.bf16.msra.mxu0 %v2895
    %3893 = vmatpush.bf16.msra.mxu0 %v2887
    %3894 = vmatpush.bf16.msra.mxu0 %v2879
    %3895 = vmatpush.bf16.msra.mxu0 %v2871
    %3896 = vmatpush.bf16.msra.mxu0 %v2863
    %3897 = vmatpush.bf16.msra.mxu0 %v2855
    %3898 = vmatmul.bf16.gmra.mxu0 %v654
    %v3899 = vpop.f32.mrf.mxu0
    %v3900 = vadd.f32 %v3886, %v3899
    %v3901 = vpop.f32.mrf.mxu0
    %v3902 = vadd.f32 %v3888, %v3901
    %3903 = vdwg.mxu0
    %3904 = vmatpush.bf16.msra.mxu0 %v2975
    %3905 = vmatpush.bf16.msra.mxu0 %v2967
    %3906 = vmatpush.bf16.msra.mxu0 %v2959
    %3907 = vmatpush.bf16.msra.mxu0 %v2951
    %3908 = vmatpush.bf16.msra.mxu0 %v2943
    %3909 = vmatpush.bf16.msra.mxu0 %v2935
    %3910 = vmatpush.bf16.msra.mxu0 %v2927
    %3911 = vmatpush.bf16.msra.mxu0 %v2919
    %3912 = vmatmul.bf16.gmra.mxu0 %v655
    %v3913 = vpop.f32.mrf.mxu0
    %v3914 = vadd.f32 %v3900, %v3913
    %v3915 = vpop.f32.mrf.mxu0
    %v3916 = vadd.f32 %v3902, %v3915
    %3917 = vdwg.mxu0
    %3918 = vmatpush.bf16.msra.mxu0 %v3039
    %3919 = vmatpush.bf16.msra.mxu0 %v3031
    %3920 = vmatpush.bf16.msra.mxu0 %v3023
    %3921 = vmatpush.bf16.msra.mxu0 %v3015
    %3922 = vmatpush.bf16.msra.mxu0 %v3007
    %3923 = vmatpush.bf16.msra.mxu0 %v2999
    %3924 = vmatpush.bf16.msra.mxu0 %v2991
    %3925 = vmatpush.bf16.msra.mxu0 %v2983
    %3926 = vmatmul.bf16.gmra.mxu0 %v656
    %v3927 = vpop.f32.mrf.mxu0
    %v3928 = vadd.f32 %v3914, %v3927
    %v3929 = vpop.f32.mrf.mxu0
    %v3930 = vadd.f32 %v3916, %v3929
    %3931 = vdwg.mxu0
    %3932 = vmatpush.bf16.msra.mxu0 %v3103
    %3933 = vmatpush.bf16.msra.mxu0 %v3095
    %3934 = vmatpush.bf16.msra.mxu0 %v3087
    %3935 = vmatpush.bf16.msra.mxu0 %v3079
    %3936 = vmatpush.bf16.msra.mxu0 %v3071
    %3937 = vmatpush.bf16.msra.mxu0 %v3063
    %3938 = vmatpush.bf16.msra.mxu0 %v3055
    %3939 = vmatpush.bf16.msra.mxu0 %v3047
    %3940 = vmatmul.bf16.gmra.mxu0 %v657
    %v3941 = vpop.f32.mrf.mxu0
    %v3942 = vadd.f32 %v3928, %v3941
    %v3943 = vpop.f32.mrf.mxu0
    %v3944 = vadd.f32 %v3930, %v3943
    %3945 = vdwg.mxu0
    %3946 = vmatpush.bf16.msra.mxu0 %v3167
    %3947 = vmatpush.bf16.msra.mxu0 %v3159
    %3948 = vmatpush.bf16.msra.mxu0 %v3151
    %3949 = vmatpush.bf16.msra.mxu0 %v3143
    %3950 = vmatpush.bf16.msra.mxu0 %v3135
    %3951 = vmatpush.bf16.msra.mxu0 %v3127
    %3952 = vmatpush.bf16.msra.mxu0 %v3119
    %3953 = vmatpush.bf16.msra.mxu0 %v3111
    %3954 = vmatmul.bf16.gmra.mxu0 %v658
    %v3955 = vpop.f32.mrf.mxu0
    %v3956 = vadd.f32 %v3942, %v3955
    %v3957 = vpop.f32.mrf.mxu0
    %v3958 = vadd.f32 %v3944, %v3957
    %3959 = vdwg.mxu0
    %3960 = vmatpush.bf16.msra.mxu0 %v3231
    %3961 = vmatpush.bf16.msra.mxu0 %v3223
    %3962 = vmatpush.bf16.msra.mxu0 %v3215
    %3963 = vmatpush.bf16.msra.mxu0 %v3207
    %3964 = vmatpush.bf16.msra.mxu0 %v3199
    %3965 = vmatpush.bf16.msra.mxu0 %v3191
    %3966 = vmatpush.bf16.msra.mxu0 %v3183
    %3967 = vmatpush.bf16.msra.mxu0 %v3175
    %3968 = vmatmul.bf16.gmra.mxu0 %v659
    %v3969 = vpop.f32.mrf.mxu0
    %v3970 = vadd.f32 %v3956, %v3969
    %v3971 = vpop.f32.mrf.mxu0
    %v3972 = vadd.f32 %v3958, %v3971
    %3973 = vdwg.mxu0
    %3974 = vmatpush.bf16.msra.mxu0 %v2784
    %3975 = vmatpush.bf16.msra.mxu0 %v2776
    %3976 = vmatpush.bf16.msra.mxu0 %v2768
    %3977 = vmatpush.bf16.msra.mxu0 %v2760
    %3978 = vmatpush.bf16.msra.mxu0 %v2752
    %3979 = vmatpush.bf16.msra.mxu0 %v2744
    %3980 = vmatpush.bf16.msra.mxu0 %v2736
    %3981 = vmatpush.bf16.msra.mxu0 %v2728
    %3982 = vmatmul.bf16.gmra.mxu0 %v652
    %v3983 = vpop.f32.mrf.mxu0
    %v3984 = vadd.f32 %v1176, %v3983
    %v3985 = vpop.f32.mrf.mxu0
    %v3986 = vadd.f32 %v1176, %v3985
    %3987 = vdwg.mxu0
    %3988 = vmatpush.bf16.msra.mxu0 %v2848
    %3989 = vmatpush.bf16.msra.mxu0 %v2840
    %3990 = vmatpush.bf16.msra.mxu0 %v2832
    %3991 = vmatpush.bf16.msra.mxu0 %v2824
    %3992 = vmatpush.bf16.msra.mxu0 %v2816
    %3993 = vmatpush.bf16.msra.mxu0 %v2808
    %3994 = vmatpush.bf16.msra.mxu0 %v2800
    %3995 = vmatpush.bf16.msra.mxu0 %v2792
    %3996 = vmatmul.bf16.gmra.mxu0 %v653
    %v3997 = vpop.f32.mrf.mxu0
    %v3998 = vadd.f32 %v3984, %v3997
    %v3999 = vpop.f32.mrf.mxu0
    %v4000 = vadd.f32 %v3986, %v3999
    %4001 = vdwg.mxu0
    %4002 = vmatpush.bf16.msra.mxu0 %v2912
    %4003 = vmatpush.bf16.msra.mxu0 %v2904
    %4004 = vmatpush.bf16.msra.mxu0 %v2896
    %4005 = vmatpush.bf16.msra.mxu0 %v2888
    %4006 = vmatpush.bf16.msra.mxu0 %v2880
    %4007 = vmatpush.bf16.msra.mxu0 %v2872
    %4008 = vmatpush.bf16.msra.mxu0 %v2864
    %4009 = vmatpush.bf16.msra.mxu0 %v2856
    %4010 = vmatmul.bf16.gmra.mxu0 %v654
    %v4011 = vpop.f32.mrf.mxu0
    %v4012 = vadd.f32 %v3998, %v4011
    %v4013 = vpop.f32.mrf.mxu0
    %v4014 = vadd.f32 %v4000, %v4013
    %4015 = vdwg.mxu0
    %4016 = vmatpush.bf16.msra.mxu0 %v2976
    %4017 = vmatpush.bf16.msra.mxu0 %v2968
    %4018 = vmatpush.bf16.msra.mxu0 %v2960
    %4019 = vmatpush.bf16.msra.mxu0 %v2952
    %4020 = vmatpush.bf16.msra.mxu0 %v2944
    %4021 = vmatpush.bf16.msra.mxu0 %v2936
    %4022 = vmatpush.bf16.msra.mxu0 %v2928
    %4023 = vmatpush.bf16.msra.mxu0 %v2920
    %4024 = vmatmul.bf16.gmra.mxu0 %v655
    %v4025 = vpop.f32.mrf.mxu0
    %v4026 = vadd.f32 %v4012, %v4025
    %v4027 = vpop.f32.mrf.mxu0
    %v4028 = vadd.f32 %v4014, %v4027
    %4029 = vdwg.mxu0
    %4030 = vmatpush.bf16.msra.mxu0 %v3040
    %4031 = vmatpush.bf16.msra.mxu0 %v3032
    %4032 = vmatpush.bf16.msra.mxu0 %v3024
    %4033 = vmatpush.bf16.msra.mxu0 %v3016
    %4034 = vmatpush.bf16.msra.mxu0 %v3008
    %4035 = vmatpush.bf16.msra.mxu0 %v3000
    %4036 = vmatpush.bf16.msra.mxu0 %v2992
    %4037 = vmatpush.bf16.msra.mxu0 %v2984
    %4038 = vmatmul.bf16.gmra.mxu0 %v656
    %v4039 = vpop.f32.mrf.mxu0
    %v4040 = vadd.f32 %v4026, %v4039
    %v4041 = vpop.f32.mrf.mxu0
    %v4042 = vadd.f32 %v4028, %v4041
    %4043 = vdwg.mxu0
    %4044 = vmatpush.bf16.msra.mxu0 %v3104
    %4045 = vmatpush.bf16.msra.mxu0 %v3096
    %4046 = vmatpush.bf16.msra.mxu0 %v3088
    %4047 = vmatpush.bf16.msra.mxu0 %v3080
    %4048 = vmatpush.bf16.msra.mxu0 %v3072
    %4049 = vmatpush.bf16.msra.mxu0 %v3064
    %4050 = vmatpush.bf16.msra.mxu0 %v3056
    %4051 = vmatpush.bf16.msra.mxu0 %v3048
    %4052 = vmatmul.bf16.gmra.mxu0 %v657
    %v4053 = vpop.f32.mrf.mxu0
    %v4054 = vadd.f32 %v4040, %v4053
    %v4055 = vpop.f32.mrf.mxu0
    %v4056 = vadd.f32 %v4042, %v4055
    %4057 = vdwg.mxu0
    %4058 = vmatpush.bf16.msra.mxu0 %v3168
    %4059 = vmatpush.bf16.msra.mxu0 %v3160
    %4060 = vmatpush.bf16.msra.mxu0 %v3152
    %4061 = vmatpush.bf16.msra.mxu0 %v3144
    %4062 = vmatpush.bf16.msra.mxu0 %v3136
    %4063 = vmatpush.bf16.msra.mxu0 %v3128
    %4064 = vmatpush.bf16.msra.mxu0 %v3120
    %4065 = vmatpush.bf16.msra.mxu0 %v3112
    %4066 = vmatmul.bf16.gmra.mxu0 %v658
    %v4067 = vpop.f32.mrf.mxu0
    %v4068 = vadd.f32 %v4054, %v4067
    %v4069 = vpop.f32.mrf.mxu0
    %v4070 = vadd.f32 %v4056, %v4069
    %4071 = vdwg.mxu0
    %4072 = vmatpush.bf16.msra.mxu0 %v3232
    %4073 = vmatpush.bf16.msra.mxu0 %v3224
    %4074 = vmatpush.bf16.msra.mxu0 %v3216
    %4075 = vmatpush.bf16.msra.mxu0 %v3208
    %4076 = vmatpush.bf16.msra.mxu0 %v3200
    %4077 = vmatpush.bf16.msra.mxu0 %v3192
    %4078 = vmatpush.bf16.msra.mxu0 %v3184
    %4079 = vmatpush.bf16.msra.mxu0 %v3176
    %4080 = vmatmul.bf16.gmra.mxu0 %v659
    %v4081 = vpop.f32.mrf.mxu0
    %v4082 = vadd.f32 %v4068, %v4081
    %v4083 = vpop.f32.mrf.mxu0
    %v4084 = vadd.f32 %v4070, %v4083
    %4085 = vdwg.mxu0
    %4086 = vmatpush.bf16.msra.mxu0 %v2785
    %4087 = vmatpush.bf16.msra.mxu0 %v2777
    %4088 = vmatpush.bf16.msra.mxu0 %v2769
    %4089 = vmatpush.bf16.msra.mxu0 %v2761
    %4090 = vmatpush.bf16.msra.mxu0 %v2753
    %4091 = vmatpush.bf16.msra.mxu0 %v2745
    %4092 = vmatpush.bf16.msra.mxu0 %v2737
    %4093 = vmatpush.bf16.msra.mxu0 %v2729
    %4094 = vmatmul.bf16.gmra.mxu0 %v652
    %v4095 = vpop.f32.mrf.mxu0
    %v4096 = vadd.f32 %v1177, %v4095
    %v4097 = vpop.f32.mrf.mxu0
    %v4098 = vadd.f32 %v1177, %v4097
    %4099 = vdwg.mxu0
    %4100 = vmatpush.bf16.msra.mxu0 %v2849
    %4101 = vmatpush.bf16.msra.mxu0 %v2841
    %4102 = vmatpush.bf16.msra.mxu0 %v2833
    %4103 = vmatpush.bf16.msra.mxu0 %v2825
    %4104 = vmatpush.bf16.msra.mxu0 %v2817
    %4105 = vmatpush.bf16.msra.mxu0 %v2809
    %4106 = vmatpush.bf16.msra.mxu0 %v2801
    %4107 = vmatpush.bf16.msra.mxu0 %v2793
    %4108 = vmatmul.bf16.gmra.mxu0 %v653
    %v4109 = vpop.f32.mrf.mxu0
    %v4110 = vadd.f32 %v4096, %v4109
    %v4111 = vpop.f32.mrf.mxu0
    %v4112 = vadd.f32 %v4098, %v4111
    %4113 = vdwg.mxu0
    %4114 = vmatpush.bf16.msra.mxu0 %v2913
    %4115 = vmatpush.bf16.msra.mxu0 %v2905
    %4116 = vmatpush.bf16.msra.mxu0 %v2897
    %4117 = vmatpush.bf16.msra.mxu0 %v2889
    %4118 = vmatpush.bf16.msra.mxu0 %v2881
    %4119 = vmatpush.bf16.msra.mxu0 %v2873
    %4120 = vmatpush.bf16.msra.mxu0 %v2865
    %4121 = vmatpush.bf16.msra.mxu0 %v2857
    %4122 = vmatmul.bf16.gmra.mxu0 %v654
    %v4123 = vpop.f32.mrf.mxu0
    %v4124 = vadd.f32 %v4110, %v4123
    %v4125 = vpop.f32.mrf.mxu0
    %v4126 = vadd.f32 %v4112, %v4125
    %4127 = vdwg.mxu0
    %4128 = vmatpush.bf16.msra.mxu0 %v2977
    %4129 = vmatpush.bf16.msra.mxu0 %v2969
    %4130 = vmatpush.bf16.msra.mxu0 %v2961
    %4131 = vmatpush.bf16.msra.mxu0 %v2953
    %4132 = vmatpush.bf16.msra.mxu0 %v2945
    %4133 = vmatpush.bf16.msra.mxu0 %v2937
    %4134 = vmatpush.bf16.msra.mxu0 %v2929
    %4135 = vmatpush.bf16.msra.mxu0 %v2921
    %4136 = vmatmul.bf16.gmra.mxu0 %v655
    %v4137 = vpop.f32.mrf.mxu0
    %v4138 = vadd.f32 %v4124, %v4137
    %v4139 = vpop.f32.mrf.mxu0
    %v4140 = vadd.f32 %v4126, %v4139
    %4141 = vdwg.mxu0
    %4142 = vmatpush.bf16.msra.mxu0 %v3041
    %4143 = vmatpush.bf16.msra.mxu0 %v3033
    %4144 = vmatpush.bf16.msra.mxu0 %v3025
    %4145 = vmatpush.bf16.msra.mxu0 %v3017
    %4146 = vmatpush.bf16.msra.mxu0 %v3009
    %4147 = vmatpush.bf16.msra.mxu0 %v3001
    %4148 = vmatpush.bf16.msra.mxu0 %v2993
    %4149 = vmatpush.bf16.msra.mxu0 %v2985
    %4150 = vmatmul.bf16.gmra.mxu0 %v656
    %v4151 = vpop.f32.mrf.mxu0
    %v4152 = vadd.f32 %v4138, %v4151
    %v4153 = vpop.f32.mrf.mxu0
    %v4154 = vadd.f32 %v4140, %v4153
    %4155 = vdwg.mxu0
    %4156 = vmatpush.bf16.msra.mxu0 %v3105
    %4157 = vmatpush.bf16.msra.mxu0 %v3097
    %4158 = vmatpush.bf16.msra.mxu0 %v3089
    %4159 = vmatpush.bf16.msra.mxu0 %v3081
    %4160 = vmatpush.bf16.msra.mxu0 %v3073
    %4161 = vmatpush.bf16.msra.mxu0 %v3065
    %4162 = vmatpush.bf16.msra.mxu0 %v3057
    %4163 = vmatpush.bf16.msra.mxu0 %v3049
    %4164 = vmatmul.bf16.gmra.mxu0 %v657
    %v4165 = vpop.f32.mrf.mxu0
    %v4166 = vadd.f32 %v4152, %v4165
    %v4167 = vpop.f32.mrf.mxu0
    %v4168 = vadd.f32 %v4154, %v4167
    %4169 = vdwg.mxu0
    %4170 = vmatpush.bf16.msra.mxu0 %v3169
    %4171 = vmatpush.bf16.msra.mxu0 %v3161
    %4172 = vmatpush.bf16.msra.mxu0 %v3153
    %4173 = vmatpush.bf16.msra.mxu0 %v3145
    %4174 = vmatpush.bf16.msra.mxu0 %v3137
    %4175 = vmatpush.bf16.msra.mxu0 %v3129
    %4176 = vmatpush.bf16.msra.mxu0 %v3121
    %4177 = vmatpush.bf16.msra.mxu0 %v3113
    %4178 = vmatmul.bf16.gmra.mxu0 %v658
    %v4179 = vpop.f32.mrf.mxu0
    %v4180 = vadd.f32 %v4166, %v4179
    %v4181 = vpop.f32.mrf.mxu0
    %v4182 = vadd.f32 %v4168, %v4181
    %4183 = vdwg.mxu0
    %4184 = vmatpush.bf16.msra.mxu0 %v3233
    %4185 = vmatpush.bf16.msra.mxu0 %v3225
    %4186 = vmatpush.bf16.msra.mxu0 %v3217
    %4187 = vmatpush.bf16.msra.mxu0 %v3209
    %4188 = vmatpush.bf16.msra.mxu0 %v3201
    %4189 = vmatpush.bf16.msra.mxu0 %v3193
    %4190 = vmatpush.bf16.msra.mxu0 %v3185
    %4191 = vmatpush.bf16.msra.mxu0 %v3177
    %4192 = vmatmul.bf16.gmra.mxu0 %v659
    %v4193 = vpop.f32.mrf.mxu0
    %v4194 = vadd.f32 %v4180, %v4193
    %v4195 = vpop.f32.mrf.mxu0
    %v4196 = vadd.f32 %v4182, %v4195
    %4197 = vdwg.mxu0
    %4198 = vmatpush.bf16.msra.mxu0 %v2786
    %4199 = vmatpush.bf16.msra.mxu0 %v2778
    %4200 = vmatpush.bf16.msra.mxu0 %v2770
    %4201 = vmatpush.bf16.msra.mxu0 %v2762
    %4202 = vmatpush.bf16.msra.mxu0 %v2754
    %4203 = vmatpush.bf16.msra.mxu0 %v2746
    %4204 = vmatpush.bf16.msra.mxu0 %v2738
    %4205 = vmatpush.bf16.msra.mxu0 %v2730
    %4206 = vmatmul.bf16.gmra.mxu0 %v652
    %v4207 = vpop.f32.mrf.mxu0
    %v4208 = vadd.f32 %v1178, %v4207
    %v4209 = vpop.f32.mrf.mxu0
    %v4210 = vadd.f32 %v1178, %v4209
    %4211 = vdwg.mxu0
    %4212 = vmatpush.bf16.msra.mxu0 %v2850
    %4213 = vmatpush.bf16.msra.mxu0 %v2842
    %4214 = vmatpush.bf16.msra.mxu0 %v2834
    %4215 = vmatpush.bf16.msra.mxu0 %v2826
    %4216 = vmatpush.bf16.msra.mxu0 %v2818
    %4217 = vmatpush.bf16.msra.mxu0 %v2810
    %4218 = vmatpush.bf16.msra.mxu0 %v2802
    %4219 = vmatpush.bf16.msra.mxu0 %v2794
    %4220 = vmatmul.bf16.gmra.mxu0 %v653
    %v4221 = vpop.f32.mrf.mxu0
    %v4222 = vadd.f32 %v4208, %v4221
    %v4223 = vpop.f32.mrf.mxu0
    %v4224 = vadd.f32 %v4210, %v4223
    %4225 = vdwg.mxu0
    %4226 = vmatpush.bf16.msra.mxu0 %v2914
    %4227 = vmatpush.bf16.msra.mxu0 %v2906
    %4228 = vmatpush.bf16.msra.mxu0 %v2898
    %4229 = vmatpush.bf16.msra.mxu0 %v2890
    %4230 = vmatpush.bf16.msra.mxu0 %v2882
    %4231 = vmatpush.bf16.msra.mxu0 %v2874
    %4232 = vmatpush.bf16.msra.mxu0 %v2866
    %4233 = vmatpush.bf16.msra.mxu0 %v2858
    %4234 = vmatmul.bf16.gmra.mxu0 %v654
    %v4235 = vpop.f32.mrf.mxu0
    %v4236 = vadd.f32 %v4222, %v4235
    %v4237 = vpop.f32.mrf.mxu0
    %v4238 = vadd.f32 %v4224, %v4237
    %4239 = vdwg.mxu0
    %4240 = vmatpush.bf16.msra.mxu0 %v2978
    %4241 = vmatpush.bf16.msra.mxu0 %v2970
    %4242 = vmatpush.bf16.msra.mxu0 %v2962
    %4243 = vmatpush.bf16.msra.mxu0 %v2954
    %4244 = vmatpush.bf16.msra.mxu0 %v2946
    %4245 = vmatpush.bf16.msra.mxu0 %v2938
    %4246 = vmatpush.bf16.msra.mxu0 %v2930
    %4247 = vmatpush.bf16.msra.mxu0 %v2922
    %4248 = vmatmul.bf16.gmra.mxu0 %v655
    %v4249 = vpop.f32.mrf.mxu0
    %v4250 = vadd.f32 %v4236, %v4249
    %v4251 = vpop.f32.mrf.mxu0
    %v4252 = vadd.f32 %v4238, %v4251
    %4253 = vdwg.mxu0
    %4254 = vmatpush.bf16.msra.mxu0 %v3042
    %4255 = vmatpush.bf16.msra.mxu0 %v3034
    %4256 = vmatpush.bf16.msra.mxu0 %v3026
    %4257 = vmatpush.bf16.msra.mxu0 %v3018
    %4258 = vmatpush.bf16.msra.mxu0 %v3010
    %4259 = vmatpush.bf16.msra.mxu0 %v3002
    %4260 = vmatpush.bf16.msra.mxu0 %v2994
    %4261 = vmatpush.bf16.msra.mxu0 %v2986
    %4262 = vmatmul.bf16.gmra.mxu0 %v656
    %v4263 = vpop.f32.mrf.mxu0
    %v4264 = vadd.f32 %v4250, %v4263
    %v4265 = vpop.f32.mrf.mxu0
    %v4266 = vadd.f32 %v4252, %v4265
    %4267 = vdwg.mxu0
    %4268 = vmatpush.bf16.msra.mxu0 %v3106
    %4269 = vmatpush.bf16.msra.mxu0 %v3098
    %4270 = vmatpush.bf16.msra.mxu0 %v3090
    %4271 = vmatpush.bf16.msra.mxu0 %v3082
    %4272 = vmatpush.bf16.msra.mxu0 %v3074
    %4273 = vmatpush.bf16.msra.mxu0 %v3066
    %4274 = vmatpush.bf16.msra.mxu0 %v3058
    %4275 = vmatpush.bf16.msra.mxu0 %v3050
    %4276 = vmatmul.bf16.gmra.mxu0 %v657
    %v4277 = vpop.f32.mrf.mxu0
    %v4278 = vadd.f32 %v4264, %v4277
    %v4279 = vpop.f32.mrf.mxu0
    %v4280 = vadd.f32 %v4266, %v4279
    %4281 = vdwg.mxu0
    %4282 = vmatpush.bf16.msra.mxu0 %v3170
    %4283 = vmatpush.bf16.msra.mxu0 %v3162
    %4284 = vmatpush.bf16.msra.mxu0 %v3154
    %4285 = vmatpush.bf16.msra.mxu0 %v3146
    %4286 = vmatpush.bf16.msra.mxu0 %v3138
    %4287 = vmatpush.bf16.msra.mxu0 %v3130
    %4288 = vmatpush.bf16.msra.mxu0 %v3122
    %4289 = vmatpush.bf16.msra.mxu0 %v3114
    %4290 = vmatmul.bf16.gmra.mxu0 %v658
    %v4291 = vpop.f32.mrf.mxu0
    %v4292 = vadd.f32 %v4278, %v4291
    %v4293 = vpop.f32.mrf.mxu0
    %v4294 = vadd.f32 %v4280, %v4293
    %4295 = vdwg.mxu0
    %4296 = vmatpush.bf16.msra.mxu0 %v3234
    %4297 = vmatpush.bf16.msra.mxu0 %v3226
    %4298 = vmatpush.bf16.msra.mxu0 %v3218
    %4299 = vmatpush.bf16.msra.mxu0 %v3210
    %4300 = vmatpush.bf16.msra.mxu0 %v3202
    %4301 = vmatpush.bf16.msra.mxu0 %v3194
    %4302 = vmatpush.bf16.msra.mxu0 %v3186
    %4303 = vmatpush.bf16.msra.mxu0 %v3178
    %4304 = vmatmul.bf16.gmra.mxu0 %v659
    %v4305 = vpop.f32.mrf.mxu0
    %v4306 = vadd.f32 %v4292, %v4305
    %v4307 = vpop.f32.mrf.mxu0
    %v4308 = vadd.f32 %v4294, %v4307
    %4309 = vdwg.mxu0
    %4310 = vmatpush.bf16.msra.mxu0 %v2787
    %4311 = vmatpush.bf16.msra.mxu0 %v2779
    %4312 = vmatpush.bf16.msra.mxu0 %v2771
    %4313 = vmatpush.bf16.msra.mxu0 %v2763
    %4314 = vmatpush.bf16.msra.mxu0 %v2755
    %4315 = vmatpush.bf16.msra.mxu0 %v2747
    %4316 = vmatpush.bf16.msra.mxu0 %v2739
    %4317 = vmatpush.bf16.msra.mxu0 %v2731
    %4318 = vmatmul.bf16.gmra.mxu0 %v652
    %v4319 = vpop.f32.mrf.mxu0
    %v4320 = vadd.f32 %v1179, %v4319
    %v4321 = vpop.f32.mrf.mxu0
    %v4322 = vadd.f32 %v1179, %v4321
    %4323 = vdwg.mxu0
    %4324 = vmatpush.bf16.msra.mxu0 %v2851
    %4325 = vmatpush.bf16.msra.mxu0 %v2843
    %4326 = vmatpush.bf16.msra.mxu0 %v2835
    %4327 = vmatpush.bf16.msra.mxu0 %v2827
    %4328 = vmatpush.bf16.msra.mxu0 %v2819
    %4329 = vmatpush.bf16.msra.mxu0 %v2811
    %4330 = vmatpush.bf16.msra.mxu0 %v2803
    %4331 = vmatpush.bf16.msra.mxu0 %v2795
    %4332 = vmatmul.bf16.gmra.mxu0 %v653
    %v4333 = vpop.f32.mrf.mxu0
    %v4334 = vadd.f32 %v4320, %v4333
    %v4335 = vpop.f32.mrf.mxu0
    %v4336 = vadd.f32 %v4322, %v4335
    %4337 = vdwg.mxu0
    %4338 = vmatpush.bf16.msra.mxu0 %v2915
    %4339 = vmatpush.bf16.msra.mxu0 %v2907
    %4340 = vmatpush.bf16.msra.mxu0 %v2899
    %4341 = vmatpush.bf16.msra.mxu0 %v2891
    %4342 = vmatpush.bf16.msra.mxu0 %v2883
    %4343 = vmatpush.bf16.msra.mxu0 %v2875
    %4344 = vmatpush.bf16.msra.mxu0 %v2867
    %4345 = vmatpush.bf16.msra.mxu0 %v2859
    %4346 = vmatmul.bf16.gmra.mxu0 %v654
    %v4347 = vpop.f32.mrf.mxu0
    %v4348 = vadd.f32 %v4334, %v4347
    %v4349 = vpop.f32.mrf.mxu0
    %v4350 = vadd.f32 %v4336, %v4349
    %4351 = vdwg.mxu0
    %4352 = vmatpush.bf16.msra.mxu0 %v2979
    %4353 = vmatpush.bf16.msra.mxu0 %v2971
    %4354 = vmatpush.bf16.msra.mxu0 %v2963
    %4355 = vmatpush.bf16.msra.mxu0 %v2955
    %4356 = vmatpush.bf16.msra.mxu0 %v2947
    %4357 = vmatpush.bf16.msra.mxu0 %v2939
    %4358 = vmatpush.bf16.msra.mxu0 %v2931
    %4359 = vmatpush.bf16.msra.mxu0 %v2923
    %4360 = vmatmul.bf16.gmra.mxu0 %v655
    %v4361 = vpop.f32.mrf.mxu0
    %v4362 = vadd.f32 %v4348, %v4361
    %v4363 = vpop.f32.mrf.mxu0
    %v4364 = vadd.f32 %v4350, %v4363
    %4365 = vdwg.mxu0
    %4366 = vmatpush.bf16.msra.mxu0 %v3043
    %4367 = vmatpush.bf16.msra.mxu0 %v3035
    %4368 = vmatpush.bf16.msra.mxu0 %v3027
    %4369 = vmatpush.bf16.msra.mxu0 %v3019
    %4370 = vmatpush.bf16.msra.mxu0 %v3011
    %4371 = vmatpush.bf16.msra.mxu0 %v3003
    %4372 = vmatpush.bf16.msra.mxu0 %v2995
    %4373 = vmatpush.bf16.msra.mxu0 %v2987
    %4374 = vmatmul.bf16.gmra.mxu0 %v656
    %v4375 = vpop.f32.mrf.mxu0
    %v4376 = vadd.f32 %v4362, %v4375
    %v4377 = vpop.f32.mrf.mxu0
    %v4378 = vadd.f32 %v4364, %v4377
    %4379 = vdwg.mxu0
    %4380 = vmatpush.bf16.msra.mxu0 %v3107
    %4381 = vmatpush.bf16.msra.mxu0 %v3099
    %4382 = vmatpush.bf16.msra.mxu0 %v3091
    %4383 = vmatpush.bf16.msra.mxu0 %v3083
    %4384 = vmatpush.bf16.msra.mxu0 %v3075
    %4385 = vmatpush.bf16.msra.mxu0 %v3067
    %4386 = vmatpush.bf16.msra.mxu0 %v3059
    %4387 = vmatpush.bf16.msra.mxu0 %v3051
    %4388 = vmatmul.bf16.gmra.mxu0 %v657
    %v4389 = vpop.f32.mrf.mxu0
    %v4390 = vadd.f32 %v4376, %v4389
    %v4391 = vpop.f32.mrf.mxu0
    %v4392 = vadd.f32 %v4378, %v4391
    %4393 = vdwg.mxu0
    %4394 = vmatpush.bf16.msra.mxu0 %v3171
    %4395 = vmatpush.bf16.msra.mxu0 %v3163
    %4396 = vmatpush.bf16.msra.mxu0 %v3155
    %4397 = vmatpush.bf16.msra.mxu0 %v3147
    %4398 = vmatpush.bf16.msra.mxu0 %v3139
    %4399 = vmatpush.bf16.msra.mxu0 %v3131
    %4400 = vmatpush.bf16.msra.mxu0 %v3123
    %4401 = vmatpush.bf16.msra.mxu0 %v3115
    %4402 = vmatmul.bf16.gmra.mxu0 %v658
    %v4403 = vpop.f32.mrf.mxu0
    %v4404 = vadd.f32 %v4390, %v4403
    %v4405 = vpop.f32.mrf.mxu0
    %v4406 = vadd.f32 %v4392, %v4405
    %4407 = vdwg.mxu0
    %4408 = vmatpush.bf16.msra.mxu0 %v3235
    %4409 = vmatpush.bf16.msra.mxu0 %v3227
    %4410 = vmatpush.bf16.msra.mxu0 %v3219
    %4411 = vmatpush.bf16.msra.mxu0 %v3211
    %4412 = vmatpush.bf16.msra.mxu0 %v3203
    %4413 = vmatpush.bf16.msra.mxu0 %v3195
    %4414 = vmatpush.bf16.msra.mxu0 %v3187
    %4415 = vmatpush.bf16.msra.mxu0 %v3179
    %4416 = vmatmul.bf16.gmra.mxu0 %v659
    %v4417 = vpop.f32.mrf.mxu0
    %v4418 = vadd.f32 %v4404, %v4417
    %v4419 = vpop.f32.mrf.mxu0
    %v4420 = vadd.f32 %v4406, %v4419
    %4421 = vdwg.mxu0
    %4422 = vmatpush.bf16.msra.mxu0 %v2788
    %4423 = vmatpush.bf16.msra.mxu0 %v2780
    %4424 = vmatpush.bf16.msra.mxu0 %v2772
    %4425 = vmatpush.bf16.msra.mxu0 %v2764
    %4426 = vmatpush.bf16.msra.mxu0 %v2756
    %4427 = vmatpush.bf16.msra.mxu0 %v2748
    %4428 = vmatpush.bf16.msra.mxu0 %v2740
    %4429 = vmatpush.bf16.msra.mxu0 %v2732
    %4430 = vmatmul.bf16.gmra.mxu0 %v652
    %v4431 = vpop.f32.mrf.mxu0
    %v4432 = vadd.f32 %v1180, %v4431
    %v4433 = vpop.f32.mrf.mxu0
    %v4434 = vadd.f32 %v1180, %v4433
    %4435 = vdwg.mxu0
    %4436 = vmatpush.bf16.msra.mxu0 %v2852
    %4437 = vmatpush.bf16.msra.mxu0 %v2844
    %4438 = vmatpush.bf16.msra.mxu0 %v2836
    %4439 = vmatpush.bf16.msra.mxu0 %v2828
    %4440 = vmatpush.bf16.msra.mxu0 %v2820
    %4441 = vmatpush.bf16.msra.mxu0 %v2812
    %4442 = vmatpush.bf16.msra.mxu0 %v2804
    %4443 = vmatpush.bf16.msra.mxu0 %v2796
    %4444 = vmatmul.bf16.gmra.mxu0 %v653
    %v4445 = vpop.f32.mrf.mxu0
    %v4446 = vadd.f32 %v4432, %v4445
    %v4447 = vpop.f32.mrf.mxu0
    %v4448 = vadd.f32 %v4434, %v4447
    %4449 = vdwg.mxu0
    %4450 = vmatpush.bf16.msra.mxu0 %v2916
    %4451 = vmatpush.bf16.msra.mxu0 %v2908
    %4452 = vmatpush.bf16.msra.mxu0 %v2900
    %4453 = vmatpush.bf16.msra.mxu0 %v2892
    %4454 = vmatpush.bf16.msra.mxu0 %v2884
    %4455 = vmatpush.bf16.msra.mxu0 %v2876
    %4456 = vmatpush.bf16.msra.mxu0 %v2868
    %4457 = vmatpush.bf16.msra.mxu0 %v2860
    %4458 = vmatmul.bf16.gmra.mxu0 %v654
    %v4459 = vpop.f32.mrf.mxu0
    %v4460 = vadd.f32 %v4446, %v4459
    %v4461 = vpop.f32.mrf.mxu0
    %v4462 = vadd.f32 %v4448, %v4461
    %4463 = vdwg.mxu0
    %4464 = vmatpush.bf16.msra.mxu0 %v2980
    %4465 = vmatpush.bf16.msra.mxu0 %v2972
    %4466 = vmatpush.bf16.msra.mxu0 %v2964
    %4467 = vmatpush.bf16.msra.mxu0 %v2956
    %4468 = vmatpush.bf16.msra.mxu0 %v2948
    %4469 = vmatpush.bf16.msra.mxu0 %v2940
    %4470 = vmatpush.bf16.msra.mxu0 %v2932
    %4471 = vmatpush.bf16.msra.mxu0 %v2924
    %4472 = vmatmul.bf16.gmra.mxu0 %v655
    %v4473 = vpop.f32.mrf.mxu0
    %v4474 = vadd.f32 %v4460, %v4473
    %v4475 = vpop.f32.mrf.mxu0
    %v4476 = vadd.f32 %v4462, %v4475
    %4477 = vdwg.mxu0
    %4478 = vmatpush.bf16.msra.mxu0 %v3044
    %4479 = vmatpush.bf16.msra.mxu0 %v3036
    %4480 = vmatpush.bf16.msra.mxu0 %v3028
    %4481 = vmatpush.bf16.msra.mxu0 %v3020
    %4482 = vmatpush.bf16.msra.mxu0 %v3012
    %4483 = vmatpush.bf16.msra.mxu0 %v3004
    %4484 = vmatpush.bf16.msra.mxu0 %v2996
    %4485 = vmatpush.bf16.msra.mxu0 %v2988
    %4486 = vmatmul.bf16.gmra.mxu0 %v656
    %v4487 = vpop.f32.mrf.mxu0
    %v4488 = vadd.f32 %v4474, %v4487
    %v4489 = vpop.f32.mrf.mxu0
    %v4490 = vadd.f32 %v4476, %v4489
    %4491 = vdwg.mxu0
    %4492 = vmatpush.bf16.msra.mxu0 %v3108
    %4493 = vmatpush.bf16.msra.mxu0 %v3100
    %4494 = vmatpush.bf16.msra.mxu0 %v3092
    %4495 = vmatpush.bf16.msra.mxu0 %v3084
    %4496 = vmatpush.bf16.msra.mxu0 %v3076
    %4497 = vmatpush.bf16.msra.mxu0 %v3068
    %4498 = vmatpush.bf16.msra.mxu0 %v3060
    %4499 = vmatpush.bf16.msra.mxu0 %v3052
    %4500 = vmatmul.bf16.gmra.mxu0 %v657
    %v4501 = vpop.f32.mrf.mxu0
    %v4502 = vadd.f32 %v4488, %v4501
    %v4503 = vpop.f32.mrf.mxu0
    %v4504 = vadd.f32 %v4490, %v4503
    %4505 = vdwg.mxu0
    %4506 = vmatpush.bf16.msra.mxu0 %v3172
    %4507 = vmatpush.bf16.msra.mxu0 %v3164
    %4508 = vmatpush.bf16.msra.mxu0 %v3156
    %4509 = vmatpush.bf16.msra.mxu0 %v3148
    %4510 = vmatpush.bf16.msra.mxu0 %v3140
    %4511 = vmatpush.bf16.msra.mxu0 %v3132
    %4512 = vmatpush.bf16.msra.mxu0 %v3124
    %4513 = vmatpush.bf16.msra.mxu0 %v3116
    %4514 = vmatmul.bf16.gmra.mxu0 %v658
    %v4515 = vpop.f32.mrf.mxu0
    %v4516 = vadd.f32 %v4502, %v4515
    %v4517 = vpop.f32.mrf.mxu0
    %v4518 = vadd.f32 %v4504, %v4517
    %4519 = vdwg.mxu0
    %4520 = vmatpush.bf16.msra.mxu0 %v3236
    %4521 = vmatpush.bf16.msra.mxu0 %v3228
    %4522 = vmatpush.bf16.msra.mxu0 %v3220
    %4523 = vmatpush.bf16.msra.mxu0 %v3212
    %4524 = vmatpush.bf16.msra.mxu0 %v3204
    %4525 = vmatpush.bf16.msra.mxu0 %v3196
    %4526 = vmatpush.bf16.msra.mxu0 %v3188
    %4527 = vmatpush.bf16.msra.mxu0 %v3180
    %4528 = vmatmul.bf16.gmra.mxu0 %v659
    %v4529 = vpop.f32.mrf.mxu0
    %v4530 = vadd.f32 %v4516, %v4529
    %v4531 = vpop.f32.mrf.mxu0
    %v4532 = vadd.f32 %v4518, %v4531
    %4533 = vdwg.mxu0
    %4534 = vmatpush.bf16.msra.mxu0 %v2789
    %4535 = vmatpush.bf16.msra.mxu0 %v2781
    %4536 = vmatpush.bf16.msra.mxu0 %v2773
    %4537 = vmatpush.bf16.msra.mxu0 %v2765
    %4538 = vmatpush.bf16.msra.mxu0 %v2757
    %4539 = vmatpush.bf16.msra.mxu0 %v2749
    %4540 = vmatpush.bf16.msra.mxu0 %v2741
    %4541 = vmatpush.bf16.msra.mxu0 %v2733
    %4542 = vmatmul.bf16.gmra.mxu0 %v652
    %v4543 = vpop.f32.mrf.mxu0
    %v4544 = vadd.f32 %v1181, %v4543
    %v4545 = vpop.f32.mrf.mxu0
    %v4546 = vadd.f32 %v1181, %v4545
    %4547 = vdwg.mxu0
    %4548 = vmatpush.bf16.msra.mxu0 %v2853
    %4549 = vmatpush.bf16.msra.mxu0 %v2845
    %4550 = vmatpush.bf16.msra.mxu0 %v2837
    %4551 = vmatpush.bf16.msra.mxu0 %v2829
    %4552 = vmatpush.bf16.msra.mxu0 %v2821
    %4553 = vmatpush.bf16.msra.mxu0 %v2813
    %4554 = vmatpush.bf16.msra.mxu0 %v2805
    %4555 = vmatpush.bf16.msra.mxu0 %v2797
    %4556 = vmatmul.bf16.gmra.mxu0 %v653
    %v4557 = vpop.f32.mrf.mxu0
    %v4558 = vadd.f32 %v4544, %v4557
    %v4559 = vpop.f32.mrf.mxu0
    %v4560 = vadd.f32 %v4546, %v4559
    %4561 = vdwg.mxu0
    %4562 = vmatpush.bf16.msra.mxu0 %v2917
    %4563 = vmatpush.bf16.msra.mxu0 %v2909
    %4564 = vmatpush.bf16.msra.mxu0 %v2901
    %4565 = vmatpush.bf16.msra.mxu0 %v2893
    %4566 = vmatpush.bf16.msra.mxu0 %v2885
    %4567 = vmatpush.bf16.msra.mxu0 %v2877
    %4568 = vmatpush.bf16.msra.mxu0 %v2869
    %4569 = vmatpush.bf16.msra.mxu0 %v2861
    %4570 = vmatmul.bf16.gmra.mxu0 %v654
    %v4571 = vpop.f32.mrf.mxu0
    %v4572 = vadd.f32 %v4558, %v4571
    %v4573 = vpop.f32.mrf.mxu0
    %v4574 = vadd.f32 %v4560, %v4573
    %4575 = vdwg.mxu0
    %4576 = vmatpush.bf16.msra.mxu0 %v2981
    %4577 = vmatpush.bf16.msra.mxu0 %v2973
    %4578 = vmatpush.bf16.msra.mxu0 %v2965
    %4579 = vmatpush.bf16.msra.mxu0 %v2957
    %4580 = vmatpush.bf16.msra.mxu0 %v2949
    %4581 = vmatpush.bf16.msra.mxu0 %v2941
    %4582 = vmatpush.bf16.msra.mxu0 %v2933
    %4583 = vmatpush.bf16.msra.mxu0 %v2925
    %4584 = vmatmul.bf16.gmra.mxu0 %v655
    %v4585 = vpop.f32.mrf.mxu0
    %v4586 = vadd.f32 %v4572, %v4585
    %v4587 = vpop.f32.mrf.mxu0
    %v4588 = vadd.f32 %v4574, %v4587
    %4589 = vdwg.mxu0
    %4590 = vmatpush.bf16.msra.mxu0 %v3045
    %4591 = vmatpush.bf16.msra.mxu0 %v3037
    %4592 = vmatpush.bf16.msra.mxu0 %v3029
    %4593 = vmatpush.bf16.msra.mxu0 %v3021
    %4594 = vmatpush.bf16.msra.mxu0 %v3013
    %4595 = vmatpush.bf16.msra.mxu0 %v3005
    %4596 = vmatpush.bf16.msra.mxu0 %v2997
    %4597 = vmatpush.bf16.msra.mxu0 %v2989
    %4598 = vmatmul.bf16.gmra.mxu0 %v656
    %v4599 = vpop.f32.mrf.mxu0
    %v4600 = vadd.f32 %v4586, %v4599
    %v4601 = vpop.f32.mrf.mxu0
    %v4602 = vadd.f32 %v4588, %v4601
    %4603 = vdwg.mxu0
    %4604 = vmatpush.bf16.msra.mxu0 %v3109
    %4605 = vmatpush.bf16.msra.mxu0 %v3101
    %4606 = vmatpush.bf16.msra.mxu0 %v3093
    %4607 = vmatpush.bf16.msra.mxu0 %v3085
    %4608 = vmatpush.bf16.msra.mxu0 %v3077
    %4609 = vmatpush.bf16.msra.mxu0 %v3069
    %4610 = vmatpush.bf16.msra.mxu0 %v3061
    %4611 = vmatpush.bf16.msra.mxu0 %v3053
    %4612 = vmatmul.bf16.gmra.mxu0 %v657
    %v4613 = vpop.f32.mrf.mxu0
    %v4614 = vadd.f32 %v4600, %v4613
    %v4615 = vpop.f32.mrf.mxu0
    %v4616 = vadd.f32 %v4602, %v4615
    %4617 = vdwg.mxu0
    %4618 = vmatpush.bf16.msra.mxu0 %v3173
    %4619 = vmatpush.bf16.msra.mxu0 %v3165
    %4620 = vmatpush.bf16.msra.mxu0 %v3157
    %4621 = vmatpush.bf16.msra.mxu0 %v3149
    %4622 = vmatpush.bf16.msra.mxu0 %v3141
    %4623 = vmatpush.bf16.msra.mxu0 %v3133
    %4624 = vmatpush.bf16.msra.mxu0 %v3125
    %4625 = vmatpush.bf16.msra.mxu0 %v3117
    %4626 = vmatmul.bf16.gmra.mxu0 %v658
    %v4627 = vpop.f32.mrf.mxu0
    %v4628 = vadd.f32 %v4614, %v4627
    %v4629 = vpop.f32.mrf.mxu0
    %v4630 = vadd.f32 %v4616, %v4629
    %4631 = vdwg.mxu0
    %4632 = vmatpush.bf16.msra.mxu0 %v3237
    %4633 = vmatpush.bf16.msra.mxu0 %v3229
    %4634 = vmatpush.bf16.msra.mxu0 %v3221
    %4635 = vmatpush.bf16.msra.mxu0 %v3213
    %4636 = vmatpush.bf16.msra.mxu0 %v3205
    %4637 = vmatpush.bf16.msra.mxu0 %v3197
    %4638 = vmatpush.bf16.msra.mxu0 %v3189
    %4639 = vmatpush.bf16.msra.mxu0 %v3181
    %4640 = vmatmul.bf16.gmra.mxu0 %v659
    %v4641 = vpop.f32.mrf.mxu0
    %v4642 = vadd.f32 %v4628, %v4641
    %v4643 = vpop.f32.mrf.mxu0
    %v4644 = vadd.f32 %v4630, %v4643
    %4645 = vdwg.mxu0
    %v4646 = vpack.c.bf16 %v3860, %v3858
    %v4647 = vpack.c.bf16 %v3972, %v3970
    %v4648 = vpack.c.bf16 %v4084, %v4082
    %v4649 = vpack.c.bf16 %v4196, %v4194
    %v4650 = vpack.c.bf16 %v4308, %v4306
    %v4651 = vpack.c.bf16 %v4420, %v4418
    %v4652 = vpack.c.bf16 %v4532, %v4530
    %v4653 = vpack.c.bf16 %v4644, %v4642
    %v4654 = vld [vmem:[#allocation9] sm:$0xf]
    %v4655 = vld [vmem:[#allocation9 + $0x4] sm:$0xf]
    %v4656 = vld [vmem:[#allocation9 + $0x8] sm:$0xf]
    %v4657 = vld [vmem:[#allocation9 + $0xc] sm:$0xf]
    %v4658 = vld [vmem:[#allocation9 + $0x10] sm:$0xf]
    %v4659 = vld [vmem:[#allocation9 + $0x14] sm:$0xf]
    %v4660 = vld [vmem:[#allocation9 + $0x18] sm:$0xf]
    %v4661 = vld [vmem:[#allocation9 + $0x1c] sm:$0xf]
    %v4662 = vld [vmem:[#allocation9 + $0x20] sm:$0xf]
    %v4663 = vld [vmem:[#allocation9 + $0x24] sm:$0xf]
    %v4664 = vld [vmem:[#allocation9 + $0x28] sm:$0xf]
    %v4665 = vld [vmem:[#allocation9 + $0x2c] sm:$0xf]
    %v4666 = vld [vmem:[#allocation9 + $0x30] sm:$0xf]
    %v4667 = vld [vmem:[#allocation9 + $0x34] sm:$0xf]
    %v4668 = vld [vmem:[#allocation9 + $0x38] sm:$0xf]
    %v4669 = vld [vmem:[#allocation9 + $0x3c] sm:$0xf]
    %v4670 = vld [vmem:[#allocation9 + $0x40] sm:$0xf]
    %v4671 = vld [vmem:[#allocation9 + $0x44] sm:$0xf]
    %v4672 = vld [vmem:[#allocation9 + $0x48] sm:$0xf]
    %v4673 = vld [vmem:[#allocation9 + $0x4c] sm:$0xf]
    %v4674 = vld [vmem:[#allocation9 + $0x50] sm:$0xf]
    %v4675 = vld [vmem:[#allocation9 + $0x54] sm:$0xf]
    %v4676 = vld [vmem:[#allocation9 + $0x58] sm:$0xf]
    %v4677 = vld [vmem:[#allocation9 + $0x5c] sm:$0xf]
    %v4678 = vld [vmem:[#allocation9 + $0x60] sm:$0xf]
    %v4679 = vld [vmem:[#allocation9 + $0x64] sm:$0xf]
    %v4680 = vld [vmem:[#allocation9 + $0x68] sm:$0xf]
    %v4681 = vld [vmem:[#allocation9 + $0x6c] sm:$0xf]
    %v4682 = vld [vmem:[#allocation9 + $0x70] sm:$0xf]
    %v4683 = vld [vmem:[#allocation9 + $0x74] sm:$0xf]
    %v4684 = vld [vmem:[#allocation9 + $0x78] sm:$0xf]
    %v4685 = vld [vmem:[#allocation9 + $0x7c] sm:$0xf]
    %v4686 = vld [vmem:[#allocation9 + $0x80] sm:$0xf]
    %v4687 = vld [vmem:[#allocation9 + $0x84] sm:$0xf]
    %v4688 = vld [vmem:[#allocation9 + $0x88] sm:$0xf]
    %v4689 = vld [vmem:[#allocation9 + $0x8c] sm:$0xf]
    %v4690 = vld [vmem:[#allocation9 + $0x90] sm:$0xf]
    %v4691 = vld [vmem:[#allocation9 + $0x94] sm:$0xf]
    %v4692 = vld [vmem:[#allocation9 + $0x98] sm:$0xf]
    %v4693 = vld [vmem:[#allocation9 + $0x9c] sm:$0xf]
    %v4694 = vld [vmem:[#allocation9 + $0xa0] sm:$0xf]
    %v4695 = vld [vmem:[#allocation9 + $0xa4] sm:$0xf]
    %v4696 = vld [vmem:[#allocation9 + $0xa8] sm:$0xf]
    %v4697 = vld [vmem:[#allocation9 + $0xac] sm:$0xf]
    %v4698 = vld [vmem:[#allocation9 + $0xb0] sm:$0xf]
    %v4699 = vld [vmem:[#allocation9 + $0xb4] sm:$0xf]
    %v4700 = vld [vmem:[#allocation9 + $0xb8] sm:$0xf]
    %v4701 = vld [vmem:[#allocation9 + $0xbc] sm:$0xf]
    %v4702 = vld [vmem:[#allocation9 + $0xc0] sm:$0xf]
    %v4703 = vld [vmem:[#allocation9 + $0xc4] sm:$0xf]
    %v4704 = vld [vmem:[#allocation9 + $0xc8] sm:$0xf]
    %v4705 = vld [vmem:[#allocation9 + $0xcc] sm:$0xf]
    %v4706 = vld [vmem:[#allocation9 + $0xd0] sm:$0xf]
    %v4707 = vld [vmem:[#allocation9 + $0xd4] sm:$0xf]
    %v4708 = vld [vmem:[#allocation9 + $0xd8] sm:$0xf]
    %v4709 = vld [vmem:[#allocation9 + $0xdc] sm:$0xf]
    %v4710 = vld [vmem:[#allocation9 + $0xe0] sm:$0xf]
    %v4711 = vld [vmem:[#allocation9 + $0xe4] sm:$0xf]
    %v4712 = vld [vmem:[#allocation9 + $0xe8] sm:$0xf]
    %v4713 = vld [vmem:[#allocation9 + $0xec] sm:$0xf]
    %v4714 = vld [vmem:[#allocation9 + $0xf0] sm:$0xf]
    %v4715 = vld [vmem:[#allocation9 + $0xf4] sm:$0xf]
    %v4716 = vld [vmem:[#allocation9 + $0xf8] sm:$0xf]
    %v4717 = vld [vmem:[#allocation9 + $0xfc] sm:$0xf]
    %v4718 = vld [vmem:[#allocation9 + $0x100] sm:$0xf]
    %v4719 = vld [vmem:[#allocation9 + $0x104] sm:$0xf]
    %v4720 = vld [vmem:[#allocation9 + $0x108] sm:$0xf]
    %v4721 = vld [vmem:[#allocation9 + $0x10c] sm:$0xf]
    %v4722 = vld [vmem:[#allocation9 + $0x110] sm:$0xf]
    %v4723 = vld [vmem:[#allocation9 + $0x114] sm:$0xf]
    %v4724 = vld [vmem:[#allocation9 + $0x118] sm:$0xf]
    %v4725 = vld [vmem:[#allocation9 + $0x11c] sm:$0xf]
    %v4726 = vld [vmem:[#allocation9 + $0x120] sm:$0xf]
    %v4727 = vld [vmem:[#allocation9 + $0x124] sm:$0xf]
    %v4728 = vld [vmem:[#allocation9 + $0x128] sm:$0xf]
    %v4729 = vld [vmem:[#allocation9 + $0x12c] sm:$0xf]
    %v4730 = vld [vmem:[#allocation9 + $0x130] sm:$0xf]
    %v4731 = vld [vmem:[#allocation9 + $0x134] sm:$0xf]
    %v4732 = vld [vmem:[#allocation9 + $0x138] sm:$0xf]
    %v4733 = vld [vmem:[#allocation9 + $0x13c] sm:$0xf]
    %v4734 = vld [vmem:[#allocation9 + $0x140] sm:$0xf]
    %v4735 = vld [vmem:[#allocation9 + $0x144] sm:$0xf]
    %v4736 = vld [vmem:[#allocation9 + $0x148] sm:$0xf]
    %v4737 = vld [vmem:[#allocation9 + $0x14c] sm:$0xf]
    %v4738 = vld [vmem:[#allocation9 + $0x150] sm:$0xf]
    %v4739 = vld [vmem:[#allocation9 + $0x154] sm:$0xf]
    %v4740 = vld [vmem:[#allocation9 + $0x158] sm:$0xf]
    %v4741 = vld [vmem:[#allocation9 + $0x15c] sm:$0xf]
    %v4742 = vld [vmem:[#allocation9 + $0x160] sm:$0xf]
    %v4743 = vld [vmem:[#allocation9 + $0x164] sm:$0xf]
    %v4744 = vld [vmem:[#allocation9 + $0x168] sm:$0xf]
    %v4745 = vld [vmem:[#allocation9 + $0x16c] sm:$0xf]
    %v4746 = vld [vmem:[#allocation9 + $0x170] sm:$0xf]
    %v4747 = vld [vmem:[#allocation9 + $0x174] sm:$0xf]
    %v4748 = vld [vmem:[#allocation9 + $0x178] sm:$0xf]
    %v4749 = vld [vmem:[#allocation9 + $0x17c] sm:$0xf]
    %v4750 = vld [vmem:[#allocation9 + $0x180] sm:$0xf]
    %v4751 = vld [vmem:[#allocation9 + $0x184] sm:$0xf]
    %v4752 = vld [vmem:[#allocation9 + $0x188] sm:$0xf]
    %v4753 = vld [vmem:[#allocation9 + $0x18c] sm:$0xf]
    %v4754 = vld [vmem:[#allocation9 + $0x190] sm:$0xf]
    %v4755 = vld [vmem:[#allocation9 + $0x194] sm:$0xf]
    %v4756 = vld [vmem:[#allocation9 + $0x198] sm:$0xf]
    %v4757 = vld [vmem:[#allocation9 + $0x19c] sm:$0xf]
    %v4758 = vld [vmem:[#allocation9 + $0x1a0] sm:$0xf]
    %v4759 = vld [vmem:[#allocation9 + $0x1a4] sm:$0xf]
    %v4760 = vld [vmem:[#allocation9 + $0x1a8] sm:$0xf]
    %v4761 = vld [vmem:[#allocation9 + $0x1ac] sm:$0xf]
    %v4762 = vld [vmem:[#allocation9 + $0x1b0] sm:$0xf]
    %v4763 = vld [vmem:[#allocation9 + $0x1b4] sm:$0xf]
    %v4764 = vld [vmem:[#allocation9 + $0x1b8] sm:$0xf]
    %v4765 = vld [vmem:[#allocation9 + $0x1bc] sm:$0xf]
    %v4766 = vld [vmem:[#allocation9 + $0x1c0] sm:$0xf]
    %v4767 = vld [vmem:[#allocation9 + $0x1c4] sm:$0xf]
    %v4768 = vld [vmem:[#allocation9 + $0x1c8] sm:$0xf]
    %v4769 = vld [vmem:[#allocation9 + $0x1cc] sm:$0xf]
    %v4770 = vld [vmem:[#allocation9 + $0x1d0] sm:$0xf]
    %v4771 = vld [vmem:[#allocation9 + $0x1d4] sm:$0xf]
    %v4772 = vld [vmem:[#allocation9 + $0x1d8] sm:$0xf]
    %v4773 = vld [vmem:[#allocation9 + $0x1dc] sm:$0xf]
    %v4774 = vld [vmem:[#allocation9 + $0x1e0] sm:$0xf]
    %v4775 = vld [vmem:[#allocation9 + $0x1e4] sm:$0xf]
    %v4776 = vld [vmem:[#allocation9 + $0x1e8] sm:$0xf]
    %v4777 = vld [vmem:[#allocation9 + $0x1ec] sm:$0xf]
    %v4778 = vld [vmem:[#allocation9 + $0x1f0] sm:$0xf]
    %v4779 = vld [vmem:[#allocation9 + $0x1f4] sm:$0xf]
    %v4780 = vld [vmem:[#allocation9 + $0x1f8] sm:$0xf]
    %v4781 = vld [vmem:[#allocation9 + $0x1fc] sm:$0xf]
    %v4782 = vld [vmem:[#allocation10] sm:$0x1]
    %v4784 = vperm.slane %v4782, 0
    %v4914 = vunpack.c.l.b16 %v4654
    %v4915 = vunpack.c.l.b16 %v4655
    %v4916 = vunpack.c.l.b16 %v4656
    %v4917 = vunpack.c.l.b16 %v4657
    %v4918 = vunpack.c.l.b16 %v4658
    %v4919 = vunpack.c.l.b16 %v4659
    %v4920 = vunpack.c.l.b16 %v4660
    %v4921 = vunpack.c.l.b16 %v4661
    %v4922 = vunpack.c.l.b16 %v4662
    %v4923 = vunpack.c.l.b16 %v4663
    %v4924 = vunpack.c.l.b16 %v4664
    %v4925 = vunpack.c.l.b16 %v4665
    %v4926 = vunpack.c.l.b16 %v4666
    %v4927 = vunpack.c.l.b16 %v4667
    %v4928 = vunpack.c.l.b16 %v4668
    %v4929 = vunpack.c.l.b16 %v4669
    %v4930 = vunpack.c.l.b16 %v4670
    %v4931 = vunpack.c.l.b16 %v4671
    %v4932 = vunpack.c.l.b16 %v4672
    %v4933 = vunpack.c.l.b16 %v4673
    %v4934 = vunpack.c.l.b16 %v4674
    %v4935 = vunpack.c.l.b16 %v4675
    %v4936 = vunpack.c.l.b16 %v4676
    %v4937 = vunpack.c.l.b16 %v4677
    %v4938 = vunpack.c.l.b16 %v4678
    %v4939 = vunpack.c.l.b16 %v4679
    %v4940 = vunpack.c.l.b16 %v4680
    %v4941 = vunpack.c.l.b16 %v4681
    %v4942 = vunpack.c.l.b16 %v4682
    %v4943 = vunpack.c.l.b16 %v4683
    %v4944 = vunpack.c.l.b16 %v4684
    %v4945 = vunpack.c.l.b16 %v4685
    %v4946 = vunpack.c.l.b16 %v4686
    %v4947 = vunpack.c.l.b16 %v4687
    %v4948 = vunpack.c.l.b16 %v4688
    %v4949 = vunpack.c.l.b16 %v4689
    %v4950 = vunpack.c.l.b16 %v4690
    %v4951 = vunpack.c.l.b16 %v4691
    %v4952 = vunpack.c.l.b16 %v4692
    %v4953 = vunpack.c.l.b16 %v4693
    %v4954 = vunpack.c.l.b16 %v4694
    %v4955 = vunpack.c.l.b16 %v4695
    %v4956 = vunpack.c.l.b16 %v4696
    %v4957 = vunpack.c.l.b16 %v4697
    %v4958 = vunpack.c.l.b16 %v4698
    %v4959 = vunpack.c.l.b16 %v4699
    %v4960 = vunpack.c.l.b16 %v4700
    %v4961 = vunpack.c.l.b16 %v4701
    %v4962 = vunpack.c.l.b16 %v4702
    %v4963 = vunpack.c.l.b16 %v4703
    %v4964 = vunpack.c.l.b16 %v4704
    %v4965 = vunpack.c.l.b16 %v4705
    %v4966 = vunpack.c.l.b16 %v4706
    %v4967 = vunpack.c.l.b16 %v4707
    %v4968 = vunpack.c.l.b16 %v4708
    %v4969 = vunpack.c.l.b16 %v4709
    %v4970 = vunpack.c.l.b16 %v4710
    %v4971 = vunpack.c.l.b16 %v4711
    %v4972 = vunpack.c.l.b16 %v4712
    %v4973 = vunpack.c.l.b16 %v4713
    %v4974 = vunpack.c.l.b16 %v4714
    %v4975 = vunpack.c.l.b16 %v4715
    %v4976 = vunpack.c.l.b16 %v4716
    %v4977 = vunpack.c.l.b16 %v4717
    %v4978 = vunpack.c.l.b16 %v4718
    %v4979 = vunpack.c.l.b16 %v4719
    %v4980 = vunpack.c.l.b16 %v4720
    %v4981 = vunpack.c.l.b16 %v4721
    %v4982 = vunpack.c.l.b16 %v4722
    %v4983 = vunpack.c.l.b16 %v4723
    %v4984 = vunpack.c.l.b16 %v4724
    %v4985 = vunpack.c.l.b16 %v4725
    %v4986 = vunpack.c.l.b16 %v4726
    %v4987 = vunpack.c.l.b16 %v4727
    %v4988 = vunpack.c.l.b16 %v4728
    %v4989 = vunpack.c.l.b16 %v4729
    %v4990 = vunpack.c.l.b16 %v4730
    %v4991 = vunpack.c.l.b16 %v4731
    %v4992 = vunpack.c.l.b16 %v4732
    %v4993 = vunpack.c.l.b16 %v4733
    %v4994 = vunpack.c.l.b16 %v4734
    %v4995 = vunpack.c.l.b16 %v4735
    %v4996 = vunpack.c.l.b16 %v4736
    %v4997 = vunpack.c.l.b16 %v4737
    %v4998 = vunpack.c.l.b16 %v4738
    %v4999 = vunpack.c.l.b16 %v4739
    %v5000 = vunpack.c.l.b16 %v4740
    %v5001 = vunpack.c.l.b16 %v4741
    %v5002 = vunpack.c.l.b16 %v4742
    %v5003 = vunpack.c.l.b16 %v4743
    %v5004 = vunpack.c.l.b16 %v4744
    %v5005 = vunpack.c.l.b16 %v4745
    %v5006 = vunpack.c.l.b16 %v4746
    %v5007 = vunpack.c.l.b16 %v4747
    %v5008 = vunpack.c.l.b16 %v4748
    %v5009 = vunpack.c.l.b16 %v4749
    %v5010 = vunpack.c.l.b16 %v4750
    %v5011 = vunpack.c.l.b16 %v4751
    %v5012 = vunpack.c.l.b16 %v4752
    %v5013 = vunpack.c.l.b16 %v4753
    %v5014 = vunpack.c.l.b16 %v4754
    %v5015 = vunpack.c.l.b16 %v4755
    %v5016 = vunpack.c.l.b16 %v4756
    %v5017 = vunpack.c.l.b16 %v4757
    %v5018 = vunpack.c.l.b16 %v4758
    %v5019 = vunpack.c.l.b16 %v4759
    %v5020 = vunpack.c.l.b16 %v4760
    %v5021 = vunpack.c.l.b16 %v4761
    %v5022 = vunpack.c.l.b16 %v4762
    %v5023 = vunpack.c.l.b16 %v4763
    %v5024 = vunpack.c.l.b16 %v4764
    %v5025 = vunpack.c.l.b16 %v4765
    %v5026 = vunpack.c.l.b16 %v4766
    %v5027 = vunpack.c.l.b16 %v4767
    %v5028 = vunpack.c.l.b16 %v4768
    %v5029 = vunpack.c.l.b16 %v4769
    %v5030 = vunpack.c.l.b16 %v4770
    %v5031 = vunpack.c.l.b16 %v4771
    %v5032 = vunpack.c.l.b16 %v4772
    %v5033 = vunpack.c.l.b16 %v4773
    %v5034 = vunpack.c.l.b16 %v4774
    %v5035 = vunpack.c.l.b16 %v4775
    %v5036 = vunpack.c.l.b16 %v4776
    %v5037 = vunpack.c.l.b16 %v4777
    %v5038 = vunpack.c.l.b16 %v4778
    %v5039 = vunpack.c.l.b16 %v4779
    %v5040 = vunpack.c.l.b16 %v4780
    %v5041 = vunpack.c.l.b16 %v4781
    %v5042 = vpack.c.b16 %v4915, %v4914
    %v5043 = vpack.c.b16 %v4917, %v4916
    %v5044 = vpack.c.b16 %v4919, %v4918
    %v5045 = vpack.c.b16 %v4921, %v4920
    %v5046 = vpack.c.b16 %v4923, %v4922
    %v5047 = vpack.c.b16 %v4925, %v4924
    %v5048 = vpack.c.b16 %v4927, %v4926
    %v5049 = vpack.c.b16 %v4929, %v4928
    %v5050 = vpack.c.b16 %v4931, %v4930
    %v5051 = vpack.c.b16 %v4933, %v4932
    %v5052 = vpack.c.b16 %v4935, %v4934
    %v5053 = vpack.c.b16 %v4937, %v4936
    %v5054 = vpack.c.b16 %v4939, %v4938
    %v5055 = vpack.c.b16 %v4941, %v4940
    %v5056 = vpack.c.b16 %v4943, %v4942
    %v5057 = vpack.c.b16 %v4945, %v4944
    %v5058 = vpack.c.b16 %v4947, %v4946
    %v5059 = vpack.c.b16 %v4949, %v4948
    %v5060 = vpack.c.b16 %v4951, %v4950
    %v5061 = vpack.c.b16 %v4953, %v4952
    %v5062 = vpack.c.b16 %v4955, %v4954
    %v5063 = vpack.c.b16 %v4957, %v4956
    %v5064 = vpack.c.b16 %v4959, %v4958
    %v5065 = vpack.c.b16 %v4961, %v4960
    %v5066 = vpack.c.b16 %v4963, %v4962
    %v5067 = vpack.c.b16 %v4965, %v4964
    %v5068 = vpack.c.b16 %v4967, %v4966
    %v5069 = vpack.c.b16 %v4969, %v4968
    %v5070 = vpack.c.b16 %v4971, %v4970
    %v5071 = vpack.c.b16 %v4973, %v4972
    %v5072 = vpack.c.b16 %v4975, %v4974
    %v5073 = vpack.c.b16 %v4977, %v4976
    %v5074 = vpack.c.b16 %v4979, %v4978
    %v5075 = vpack.c.b16 %v4981, %v4980
    %v5076 = vpack.c.b16 %v4983, %v4982
    %v5077 = vpack.c.b16 %v4985, %v4984
    %v5078 = vpack.c.b16 %v4987, %v4986
    %v5079 = vpack.c.b16 %v4989, %v4988
    %v5080 = vpack.c.b16 %v4991, %v4990
    %v5081 = vpack.c.b16 %v4993, %v4992
    %v5082 = vpack.c.b16 %v4995, %v4994
    %v5083 = vpack.c.b16 %v4997, %v4996
    %v5084 = vpack.c.b16 %v4999, %v4998
    %v5085 = vpack.c.b16 %v5001, %v5000
    %v5086 = vpack.c.b16 %v5003, %v5002
    %v5087 = vpack.c.b16 %v5005, %v5004
    %v5088 = vpack.c.b16 %v5007, %v5006
    %v5089 = vpack.c.b16 %v5009, %v5008
    %v5090 = vpack.c.b16 %v5011, %v5010
    %v5091 = vpack.c.b16 %v5013, %v5012
    %v5092 = vpack.c.b16 %v5015, %v5014
    %v5093 = vpack.c.b16 %v5017, %v5016
    %v5094 = vpack.c.b16 %v5019, %v5018
    %v5095 = vpack.c.b16 %v5021, %v5020
    %v5096 = vpack.c.b16 %v5023, %v5022
    %v5097 = vpack.c.b16 %v5025, %v5024
    %v5098 = vpack.c.b16 %v5027, %v5026
    %v5099 = vpack.c.b16 %v5029, %v5028
    %v5100 = vpack.c.b16 %v5031, %v5030
    %v5101 = vpack.c.b16 %v5033, %v5032
    %v5102 = vpack.c.b16 %v5035, %v5034
    %v5103 = vpack.c.b16 %v5037, %v5036
    %v5104 = vpack.c.b16 %v5039, %v5038
    %v5105 = vpack.c.b16 %v5041, %v5040
    %5170 = vmatpush.bf16.msra.mxu0 %v5049
    %5171 = vmatpush.bf16.msra.mxu0 %v5048
    %5172 = vmatpush.bf16.msra.mxu0 %v5047
    %5173 = vmatpush.bf16.msra.mxu0 %v5046
    %5174 = vmatpush.bf16.msra.mxu0 %v5045
    %5175 = vmatpush.bf16.msra.mxu0 %v5044
    %5176 = vmatpush.bf16.msra.mxu0 %v5043
    %5177 = vmatpush.bf16.msra.mxu0 %v5042
    %5178 = vmatmul.bf16.gmra.mxu0 %v4646
    %v5179 = vpop.f32.mrf.mxu0
    %v5180 = vadd.f32 %v4784, %v5179
    %v5181 = vpop.f32.mrf.mxu0
    %v5182 = vadd.f32 %v4784, %v5181
    %5183 = vdwg.mxu0
    %5184 = vmatpush.bf16.msra.mxu0 %v5057
    %5185 = vmatpush.bf16.msra.mxu0 %v5056
    %5186 = vmatpush.bf16.msra.mxu0 %v5055
    %5187 = vmatpush.bf16.msra.mxu0 %v5054
    %5188 = vmatpush.bf16.msra.mxu0 %v5053
    %5189 = vmatpush.bf16.msra.mxu0 %v5052
    %5190 = vmatpush.bf16.msra.mxu0 %v5051
    %5191 = vmatpush.bf16.msra.mxu0 %v5050
    %5192 = vmatmul.bf16.gmra.mxu0 %v4647
    %v5193 = vpop.f32.mrf.mxu0
    %v5194 = vadd.f32 %v5180, %v5193
    %v5195 = vpop.f32.mrf.mxu0
    %v5196 = vadd.f32 %v5182, %v5195
    %5197 = vdwg.mxu0
    %5198 = vmatpush.bf16.msra.mxu0 %v5065
    %5199 = vmatpush.bf16.msra.mxu0 %v5064
    %5200 = vmatpush.bf16.msra.mxu0 %v5063
    %5201 = vmatpush.bf16.msra.mxu0 %v5062
    %5202 = vmatpush.bf16.msra.mxu0 %v5061
    %5203 = vmatpush.bf16.msra.mxu0 %v5060
    %5204 = vmatpush.bf16.msra.mxu0 %v5059
    %5205 = vmatpush.bf16.msra.mxu0 %v5058
    %5206 = vmatmul.bf16.gmra.mxu0 %v4648
    %v5207 = vpop.f32.mrf.mxu0
    %v5208 = vadd.f32 %v5194, %v5207
    %v5209 = vpop.f32.mrf.mxu0
    %v5210 = vadd.f32 %v5196, %v5209
    %5211 = vdwg.mxu0
    %5212 = vmatpush.bf16.msra.mxu0 %v5073
    %5213 = vmatpush.bf16.msra.mxu0 %v5072
    %5214 = vmatpush.bf16.msra.mxu0 %v5071
    %5215 = vmatpush.bf16.msra.mxu0 %v5070
    %5216 = vmatpush.bf16.msra.mxu0 %v5069
    %5217 = vmatpush.bf16.msra.mxu0 %v5068
    %5218 = vmatpush.bf16.msra.mxu0 %v5067
    %5219 = vmatpush.bf16.msra.mxu0 %v5066
    %5220 = vmatmul.bf16.gmra.mxu0 %v4649
    %v5221 = vpop.f32.mrf.mxu0
    %v5222 = vadd.f32 %v5208, %v5221
    %v5223 = vpop.f32.mrf.mxu0
    %v5224 = vadd.f32 %v5210, %v5223
    %5225 = vdwg.mxu0
    %5226 = vmatpush.bf16.msra.mxu0 %v5081
    %5227 = vmatpush.bf16.msra.mxu0 %v5080
    %5228 = vmatpush.bf16.msra.mxu0 %v5079
    %5229 = vmatpush.bf16.msra.mxu0 %v5078
    %5230 = vmatpush.bf16.msra.mxu0 %v5077
    %5231 = vmatpush.bf16.msra.mxu0 %v5076
    %5232 = vmatpush.bf16.msra.mxu0 %v5075
    %5233 = vmatpush.bf16.msra.mxu0 %v5074
    %5234 = vmatmul.bf16.gmra.mxu0 %v4650
    %v5235 = vpop.f32.mrf.mxu0
    %v5236 = vadd.f32 %v5222, %v5235
    %v5237 = vpop.f32.mrf.mxu0
    %v5238 = vadd.f32 %v5224, %v5237
    %5239 = vdwg.mxu0
    %5240 = vmatpush.bf16.msra.mxu0 %v5089
    %5241 = vmatpush.bf16.msra.mxu0 %v5088
    %5242 = vmatpush.bf16.msra.mxu0 %v5087
    %5243 = vmatpush.bf16.msra.mxu0 %v5086
    %5244 = vmatpush.bf16.msra.mxu0 %v5085
    %5245 = vmatpush.bf16.msra.mxu0 %v5084
    %5246 = vmatpush.bf16.msra.mxu0 %v5083
    %5247 = vmatpush.bf16.msra.mxu0 %v5082
    %5248 = vmatmul.bf16.gmra.mxu0 %v4651
    %v5249 = vpop.f32.mrf.mxu0
    %v5250 = vadd.f32 %v5236, %v5249
    %v5251 = vpop.f32.mrf.mxu0
    %v5252 = vadd.f32 %v5238, %v5251
    %5253 = vdwg.mxu0
    %5254 = vmatpush.bf16.msra.mxu0 %v5097
    %5255 = vmatpush.bf16.msra.mxu0 %v5096
    %5256 = vmatpush.bf16.msra.mxu0 %v5095
    %5257 = vmatpush.bf16.msra.mxu0 %v5094
    %5258 = vmatpush.bf16.msra.mxu0 %v5093
    %5259 = vmatpush.bf16.msra.mxu0 %v5092
    %5260 = vmatpush.bf16.msra.mxu0 %v5091
    %5261 = vmatpush.bf16.msra.mxu0 %v5090
    %5262 = vmatmul.bf16.gmra.mxu0 %v4652
    %v5263 = vpop.f32.mrf.mxu0
    %v5264 = vadd.f32 %v5250, %v5263
    %v5265 = vpop.f32.mrf.mxu0
    %v5266 = vadd.f32 %v5252, %v5265
    %5267 = vdwg.mxu0
    %5268 = vmatpush.bf16.msra.mxu0 %v5105
    %5269 = vmatpush.bf16.msra.mxu0 %v5104
    %5270 = vmatpush.bf16.msra.mxu0 %v5103
    %5271 = vmatpush.bf16.msra.mxu0 %v5102
    %5272 = vmatpush.bf16.msra.mxu0 %v5101
    %5273 = vmatpush.bf16.msra.mxu0 %v5100
    %5274 = vmatpush.bf16.msra.mxu0 %v5099
    %5275 = vmatpush.bf16.msra.mxu0 %v5098
    %5276 = vmatmul.bf16.gmra.mxu0 %v4653
    %v5277 = vpop.f32.mrf.mxu0
    %v5278 = vadd.f32 %v5264, %v5277
    %v5279 = vpop.f32.mrf.mxu0
    %v5280 = vadd.f32 %v5266, %v5279
    %5281 = vdwg.mxu0
    %v5282 = vlaneseq
    %v5283 = vand.u32 %v5282, 127
    %vm5284 = vcmp.ge.s32.totalorder %v5283, 3
    %vm5285 = vcmp.lt.s32.totalorder %v5283, 7
    %vm5286 = vmand %vm5284, %vm5285
    %vm5287 = vcmp.eq.s32.totalorder %v5283, 3
    %v5288 = vsel %vm5287, 1.0, 0.0
    %v5289 = vadd.f32 %v5278, %v5288
    %v5290 = vadd.f32 %v5280, %v5288
    %v5291 = vsel %vm5286, %v5289, 0.0
    %v5292 = vsel %vm5286, %v5290, 0.0
    %v5293 = vmul.f32 %v5291, %v5291
    %v5294 = vmul.f32 %v5292, %v5292
    %5295 = vadd.xlane.f32.xlu0 %v5293
    %v5296 = vpop.xlane.xlu0 %5295
    %5297 = vadd.xlane.f32.xlu0 %v5294
    %v5298 = vpop.xlane.xlu0 %5297
    %v5299 = vadd.f32 %v5296, 1e-12
    %v5300 = vadd.f32 %v5298, 1e-12
    %v5301 = vrsqrt.pop %v5299
    %v5302 = vmul.f32 %v5301, %v5299
    %v5303 = vmul.f32 %v5302, %v5301
    %v5304 = vmul.f32 0.5, %v5303
    %v5305 = vsub.f32 1.5, %v5304
    %v5306 = vmul.f32 %v5301, %v5305
    %vm5307 = vweird.f32 %v5299
    %vm5308 = vweird.f32 %v5301
    %vm5309 = vmor %vm5307, %vm5308
    %v5310 = vsel %vm5309, %v5301, %v5306
    %v5311 = vrsqrt.pop %v5300
    %v5312 = vmul.f32 %v5311, %v5300
    %v5313 = vmul.f32 %v5312, %v5311
    %v5314 = vmul.f32 0.5, %v5313
    %v5315 = vsub.f32 1.5, %v5314
    %v5316 = vmul.f32 %v5311, %v5315
    %vm5317 = vweird.f32 %v5300
    %vm5318 = vweird.f32 %v5311
    %vm5319 = vmor %vm5317, %vm5318
    %v5320 = vsel %vm5319, %v5311, %v5316
    %vm5321 = vcmp.lt.s32.totalorder %v5283, 3
    %v5322 = vtanh.pop %v5278
    %v5323 = vtanh.pop %v5280
    %v5324 = vmul.f32 %v5291, %v5310
    %v5325 = vmul.f32 %v5292, %v5320
    %v5326 = vsel %vm5321, %v5322, %v5324
    %v5327 = vsel %vm5321, %v5323, %v5325
    %5328 = vst [vmem:[%s7] sm:$0xff] %v5326
    %5329 = vst [vmem:[%s7 + $0x8] sm:$0xff] %v5327
    // Predicated region
    $region54: #{predictor_forward.1} parent=1 // pred_check
      _
    $region55: #{predictor_forward.1} parent=1 // pred_check_branch
      %5331 = sbr.rel (0) target = $region57
    $region56: #{predictor_forward.1} parent=1 // pred_region
      _
    $region57: #{predictor_forward.1} parent=1 // pred_fallthru
      _
    // Predicated region
    $region58: #{predictor_forward.1} parent=1 // pred_check
      _
    $region59: #{predictor_forward.1} parent=1 // pred_check_branch
      %5333 = sbr.rel (0) target = $region61
    $region60: #{predictor_forward.1} parent=1 // pred_region
      _
    $region61: #{predictor_forward.1} parent=1 // pred_fallthru
      _
    %5334 = vsyncpa [#allocation3], 1
    %5335 = vsyncpa [#allocation5], 1
    %5336 = vsyncpa [#allocation8], 1
    %5337 = vsyncpa [#allocation11], 1

</llo_original>
